<compile_context>
chip_gen: v7x
topology: tpu7x:2x2x1
jax: 0.10.0
libtpu: 0.0.40
codegen_flags: <defaults>
</compile_context>

<pallas_src>
import functools

import jax
import jax.numpy as jnp
from jax.experimental import pallas as pl
from jax.experimental.pallas import tpu as pltpu


def _csae_kernel(x_ref, wenc_ref, benc_ref, cb_ref, wdc_ref, wds_ref, bd_ref,
                 slab_ref, idx_ref, aux_ref, *, dc, ds, mm_dtype):
    bt, h, f = x_ref.shape
    rows = bt * h
    x = x_ref[...].reshape(rows, f)                                  # (R, F)

    # ---------------- Encoder (fused content+style matmul) ----------------
    enc = jnp.dot(x.astype(mm_dtype), wenc_ref[...].astype(mm_dtype),
                  preferred_element_type=jnp.float32) + benc_ref[...]  # (R, Dc+Ds)
    emb_c = enc[:, :dc]                                              # (R, Dc)
    # style embedding: per-batch mean over frames (sublane reduce, no pooling matmul)
    emb_s = jnp.mean(enc[:, dc:].reshape(bt, h, ds), axis=1)         # (BT, Ds)

    # ---------------- Vector quantize (nearest neighbour, f32 path) -------
    cb = cb_ref[...]                                                 # (K, Dc)
    k = cb.shape[0]
    c_sq = jnp.sum(cb * cb, axis=-1)[None, :]                        # (1, K)
    dots = jax.lax.dot_general(emb_c, cb, (((1,), (1,)), ((), ())),
                               preferred_element_type=jnp.float32)   # (R, K)
    # z_sq term dropped: constant per row, argmin unchanged.
    score = c_sq - 2.0 * dots                                        # (R, K)
    lane_iota = jax.lax.broadcasted_iota(jnp.int32, score.shape, 1)
    smin = jnp.min(score, axis=-1, keepdims=True)                    # (R, 1)
    # first index achieving the minimum (matches torch argmin tie-break)
    idx = jnp.min(jnp.where(score <= smin, lane_iota, k),
                  axis=-1, keepdims=True)                            # (R, 1) int32
    onehot = (lane_iota == idx).astype(jnp.float32)                  # (R, K)
    # exact codebook gather (kept f32 so quantized rows match cb[idx])
    quant = jnp.dot(onehot, cb, preferred_element_type=jnp.float32)  # (R, Dc)

    # commitment-loss partials: per-batch sum of squared error (normalised in wrapper)
    d = quant - emb_c
    loss_b = jnp.sum((d * d).reshape(bt, h, dc), axis=(1, 2))[:, None]  # (BT, 1)

    # ---------------- Decoder (content matmul + per-batch style add) ------
    out = jnp.dot(quant.astype(mm_dtype), wdc_ref[...].astype(mm_dtype),
                  preferred_element_type=jnp.float32)                # (R, F)
    style_out = jnp.dot(emb_s.astype(mm_dtype), wds_ref[...].astype(mm_dtype),
                        preferred_element_type=jnp.float32) + bd_ref[...]  # (BT, F)
    out3 = out.reshape(bt, h, f) + style_out[:, None, :]             # (BT, H, F)

    # ---------------- Lane-dense packed output slab ----------------
    slab_ref[...] = jnp.concatenate(
        [out3, emb_c.reshape(bt, h, dc), quant.reshape(bt, h, dc)], axis=-1)
    idx_ref[...] = idx.reshape(bt, h, 1)
    aux_ref[...] = jnp.concatenate([emb_s, loss_b], axis=-1)[:, None, :]


def _pick_b_tile(batch, frames, rows_target=512):
    """Largest divisor of `batch` giving <= rows_target matmul rows per grid step,
    while keeping >= 2 grid steps when batch >= 2 (both v7x TensorCores get work)."""
    max_tile = batch if batch < 2 else max(1, batch // 2)
    best = 1
    for d in range(1, max_tile + 1):
        if batch % d == 0 and d * frames <= max(rows_target, frames):
            best = d
    return best


@functools.partial(jax.jit, static_argnames=("matmul_dtype",))
def csae_forward(x, params, matmul_dtype=jnp.bfloat16):
    """x: (B, C, H, W) float32, NCHW like PyTorch. Returns CSAE.forward's 6-tuple."""
    B, C, H, W = x.shape
    F = C * W
    Dc = params["wd_c"].shape[0]
    Ds = params["wd_s"].shape[0]
    K = params["codebook"].shape[0]
    D2 = Dc + Ds
    SLAB = F + 2 * Dc                                                # 128 at demo sizes
    b_tile = _pick_b_tile(B, H)
    n_steps = B // b_tile

    # frame-major layout per batch: (B, C, H, W) -> (B, H, C*W).  allow_input_fusion
    # on operand 0 lets XLA fuse this relayout into the pallas-call input instead of
    # a separate HBM round trip.
    x_frames = jnp.transpose(x, (0, 2, 1, 3)).reshape(B, H, F)

    # fuse encoder weights (tiny XLA concats, folded under jit)
    w_enc = jnp.concatenate([params["wc"], params["ws"]], axis=1)    # (F, Dc+Ds)
    b_enc = jnp.concatenate([params["bc"], params["bs"]], axis=1)    # (1, Dc+Ds)

    kernel = functools.partial(_csae_kernel, dc=Dc, ds=Ds, mm_dtype=matmul_dtype)

    N = B * H
    flops = (2 * N * F * D2 + 2 * N * Dc * K + 2 * N * K * Dc
             + 2 * N * Dc * F + 2 * B * Ds * F)
    bytes_accessed = 4 * (N * F + F * D2 + D2 + K * Dc + Dc * F + Ds * F + F
                          + N * SLAB + N + B * (Ds + 1))

    # VMEM budget: 2x-buffered streamed blocks + resident weights, with headroom;
    # clamp to [16, 32] MiB so it is safe on v7x (64 MiB physical) and raises v5e's
    # 16 MiB default only when actually needed.
    blk_bytes = 4 * (b_tile * H * (F + SLAB + 1) + b_tile * (Ds + 1))
    w_bytes = 4 * (F * D2 + D2 + K * Dc + Dc * F + Ds * F + F)
    vmem_limit = int(min(32 * 2**20, max(16 * 2**20, 8 * (blk_bytes + w_bytes))))

    out_shapes = (
        jax.ShapeDtypeStruct((B, H, SLAB), jnp.float32),   # [recon | emb_c | emb_c_vq]
        jax.ShapeDtypeStruct((B, H, 1), jnp.int32),        # vq indices
        jax.ShapeDtypeStruct((B, 1, Ds + 1), jnp.float32), # [emb_s | commit partial]
    )

    slab, idx, aux = pl.pallas_call(
        kernel,
        grid=(n_steps,),
        in_specs=[
            pl.BlockSpec((b_tile, H, F), lambda b: (b, 0, 0)),  # x: streamed per step
            pl.BlockSpec((F, D2), lambda b: (0, 0)),            # fused encoder W (resident)
            pl.BlockSpec((1, D2), lambda b: (0, 0)),
            pl.BlockSpec((K, Dc), lambda b: (0, 0)),            # codebook (resident)
            pl.BlockSpec((Dc, F), lambda b: (0, 0)),            # decoder content W (resident)
            pl.BlockSpec((Ds, F), lambda b: (0, 0)),            # decoder style W (resident)
            pl.BlockSpec((1, F), lambda b: (0, 0)),
        ],
        out_specs=(
            pl.BlockSpec((b_tile, H, SLAB), lambda b: (b, 0, 0)),
            pl.BlockSpec((b_tile, H, 1), lambda b: (b, 0, 0)),
            pl.BlockSpec((b_tile, 1, Ds + 1), lambda b: (b, 0, 0)),
        ),
        out_shape=out_shapes,
        compiler_params=pltpu.CompilerParams(
            dimension_semantics=("parallel",),
            vmem_limit_bytes=vmem_limit,
            allow_input_fusion=[True, False, False, False, False, False, False]),
        cost_estimate=pl.CostEstimate(flops=flops, transcendentals=0,
                                      bytes_accessed=bytes_accessed),
    )(x_frames, w_enc, b_enc, params["codebook"], params["wd_c"],
      params["wd_s"], params["bd"])

    # glue: unpack the lane-dense slab and return PyTorch-style shapes
    out_frames = slab[..., :F]                                       # (B, H, F)
    emb_c = slab[..., F:F + Dc]                                      # (B, H, Dc)
    emb_c_vq = slab[..., F + Dc:]                                    # (B, H, Dc)
    output = jnp.transpose(out_frames.reshape(B, H, C, W), (0, 2, 1, 3))
    vq_indices = idx.reshape(B, H)
    emb_s = aux[:, 0, :Ds]                                           # (B, Ds)
    commit_loss = jnp.sum(aux[:, 0, Ds]) / (B * H * Dc)              # commitment_weight = 1
    return output, emb_c, emb_c_vq, vq_indices, commit_loss, emb_s


def _reference_forward(x, params):
    """Pure-JAX reference for correctness checking."""
    B, C, H, W = x.shape
    N, F = B * H, C * W
    xf = jnp.transpose(x, (0, 2, 1, 3)).reshape(N, F)
    emb_c = xf @ params["wc"] + params["bc"]
    s_all = xf @ params["ws"] + params["bs"]
    emb_s = s_all.reshape(B, H, -1).mean(axis=1)
    cb = params["codebook"]
    dist = (jnp.sum(emb_c**2, -1, keepdims=True) - 2 * emb_c @ cb.T
            + jnp.sum(cb**2, -1)[None, :])
    idx = jnp.argmin(dist, axis=-1)
    quant = cb[idx]
    commit = jnp.mean((quant - emb_c) ** 2)
    s_full = jnp.repeat(emb_s, H, axis=0)
    out = quant @ params["wd_c"] + s_full @ params["wd_s"] + params["bd"]
    output = jnp.transpose(out.reshape(B, H, C, W), (0, 2, 1, 3))
    return (output, emb_c.reshape(B, H, -1), quant.reshape(B, H, -1),
            idx.reshape(B, H), commit, emb_s)


def make_params(key, C, W, H, d_emb_c, d_emb_s, n_atoms):
    F = C * W
    ks = jax.random.split(key, 6)
    scale_in = 1.0 / jnp.sqrt(F)
    scale_c = 1.0 / jnp.sqrt(d_emb_c)
    scale_s = 1.0 / jnp.sqrt(d_emb_s)
    return {
        "wc": jax.random.normal(ks[0], (F, d_emb_c), jnp.float32) * scale_in,
        "bc": jnp.zeros((1, d_emb_c), jnp.float32),
        "ws": jax.random.normal(ks[1], (F, d_emb_s), jnp.float32) * scale_in,
        "bs": jnp.zeros((1, d_emb_s), jnp.float32),
        "codebook": jax.random.normal(ks[2], (n_atoms, d_emb_c), jnp.float32),
        "wd_c": jax.random.normal(ks[3], (d_emb_c, F), jnp.float32) * scale_c,
        "wd_s": jax.random.normal(ks[4], (d_emb_s, F), jnp.float32) * scale_s,
        "bd": jnp.zeros((1, F), jnp.float32),
    }


def _check(outs, refs, B, C, H, W):
    output, emb_c, emb_c_vq, vq_indices, commit_loss, emb_s = outs
    r_out, r_c, r_cvq, r_idx, r_loss, r_s = refs
    assert output.shape == (B, C, H, W)
    assert jnp.allclose(output, r_out, atol=1e-4), "reconstruction mismatch"
    assert jnp.allclose(emb_c, r_c, atol=1e-5), "emb_c mismatch"
    assert jnp.allclose(emb_c_vq, r_cvq, atol=1e-5), "emb_c_vq mismatch"
    assert jnp.array_equal(vq_indices, r_idx.astype(vq_indices.dtype)), "vq idx mismatch"
    assert jnp.allclose(commit_loss, r_loss, atol=1e-5), "commit loss mismatch"
    assert jnp.allclose(emb_s, r_s, atol=1e-5), "emb_s mismatch"


if __name__ == "__main__":
    # config: n_channels=4, n_feature=16, fragment_len=16, d_emb_c=32, d_emb_s=32, n_atoms=64
    C, H, W = 4, 16, 16
    d_emb_c, d_emb_s, n_atoms = 32, 32, 64

    key = jax.random.PRNGKey(0)
    kx, kx2, kp = jax.random.split(key, 3)
    params = make_params(kp, C, W, H, d_emb_c, d_emb_s, n_atoms)

    # Case 1: B=2 (b_tile=1, two parallel grid steps) — exact f32 parity.
    B = 2
    x = jax.random.normal(kx, (B, C, H, W), jnp.float32)
    outs = jax.block_until_ready(csae_forward(x, params, matmul_dtype=jnp.float32))
    refs = jax.block_until_ready(_reference_forward(x, params))
    _check(outs, refs, B, C, H, W)

    # Case 2: B=8 (b_tile=4 -> 64 matmul rows per grid step) — exercises the
    # multi-batch-per-step tiling path with f32 parity.
    B2 = 8
    x2 = jax.random.normal(kx2, (B2, C, H, W), jnp.float32)
    outs2 = jax.block_until_ready(csae_forward(x2, params, matmul_dtype=jnp.float32))
    refs2 = jax.block_until_ready(_reference_forward(x2, params))
    _check(outs2, refs2, B2, C, H, W)

    # Case 3: default bf16 MXU operands (production path) — smoke test only,
    # since bf16 encoder outputs can legitimately shift VQ indices vs f32.
    outs_bf16 = jax.block_until_ready(csae_forward(x, params))
    o_bf, c_bf, q_bf, i_bf, l_bf, s_bf = outs_bf16
    assert o_bf.shape == (B, C, H, W)
    for arr in (o_bf, c_bf, q_bf, l_bf, s_bf):
        assert bool(jnp.all(jnp.isfinite(arr))), "non-finite bf16 output"

    print("KERNEL_OK")
</pallas_src>

<mosaic_0001>
module attributes {stable_mosaic.version = 11 : i64} {
  func.func @_csae_kernel(%arg0: i32, %arg1: memref<1x16x64xf32, #tpu.memory_space<vmem>>, %arg2: memref<64x64xf32, #tpu.memory_space<vmem>>, %arg3: memref<1x64xf32, #tpu.memory_space<vmem>>, %arg4: memref<64x32xf32, #tpu.memory_space<vmem>>, %arg5: memref<32x64xf32, #tpu.memory_space<vmem>>, %arg6: memref<32x64xf32, #tpu.memory_space<vmem>>, %arg7: memref<1x64xf32, #tpu.memory_space<vmem>>, %arg8: memref<1x16x128xf32, #tpu.memory_space<vmem>>, %arg9: memref<1x16x1xi32, #tpu.memory_space<vmem>>, %arg10: memref<1x1x33xf32, #tpu.memory_space<vmem>>) attributes {dimension_semantics = [#tpu.dimension_semantics<parallel>], iteration_bounds = array<i64: 2>, scalar_prefetch = 0 : i64, scratch_operands = 0 : i64, tpu.core_type = #tpu.core_type<tc>, window_params = [{transform_indices = @transform_0, window_bounds = array<i64: 1, 16, 64>}, {pipeline_mode = #tpu.pipeline_mode<synchronous>, transform_indices = @transform_1, window_bounds = array<i64: 64, 64>}, {pipeline_mode = #tpu.pipeline_mode<synchronous>, transform_indices = @transform_2, window_bounds = array<i64: 1, 64>}, {pipeline_mode = #tpu.pipeline_mode<synchronous>, transform_indices = @transform_3, window_bounds = array<i64: 64, 32>}, {pipeline_mode = #tpu.pipeline_mode<synchronous>, transform_indices = @transform_4, window_bounds = array<i64: 32, 64>}, {pipeline_mode = #tpu.pipeline_mode<synchronous>, transform_indices = @transform_5, window_bounds = array<i64: 32, 64>}, {pipeline_mode = #tpu.pipeline_mode<synchronous>, transform_indices = @transform_6, window_bounds = array<i64: 1, 64>}, {transform_indices = @transform_7, window_bounds = array<i64: 1, 16, 128>}, {transform_indices = @transform_8, window_bounds = array<i64: 1, 16, 1>}, {transform_indices = @transform_9, window_bounds = array<i64: 1, 1, 33>}]} {
    %c0 = arith.constant 0 : index
    %c0_0 = arith.constant 0 : index
    %c0_1 = arith.constant 0 : index
    %0 = vector.load %arg1[%c0, %c0_0, %c0_1] : memref<1x16x64xf32, #tpu.memory_space<vmem>>, vector<1x16x64xf32>
    %1 = vector.shape_cast %0 : vector<1x16x64xf32> to vector<16x64xf32>
    %c0_2 = arith.constant 0 : index
    %c0_3 = arith.constant 0 : index
    %2 = vector.load %arg2[%c0_2, %c0_3] : memref<64x64xf32, #tpu.memory_space<vmem>>, vector<64x64xf32>
    %cst = arith.constant dense<0.000000e+00> : vector<16x64xf32>
    %3 = tpu.matmul %1, %2, %cst {dimension_numbers = #tpu.dot_dimension_numbers<[1], [0], [0], [1], [0, 0, 1, 1], [], []>} : vector<16x64xf32>, vector<64x64xf32>, vector<16x64xf32> -> vector<16x64xf32>
    %c0_4 = arith.constant 0 : index
    %c0_5 = arith.constant 0 : index
    %4 = vector.load %arg3[%c0_4, %c0_5] : memref<1x64xf32, #tpu.memory_space<vmem>>, vector<1x64xf32>
    %5 = vector.broadcast %4 : vector<1x64xf32> to vector<16x64xf32>
    %6 = arith.addf %3, %5 : vector<16x64xf32>
    %7 = vector.extract_strided_slice %6 {offsets = [0, 0], sizes = [16, 32], strides = [1, 1]} : vector<16x64xf32> to vector<16x32xf32>
    %8 = vector.extract_strided_slice %6 {offsets = [0, 32], sizes = [16, 32], strides = [1, 1]} : vector<16x64xf32> to vector<16x32xf32>
    %9 = vector.shape_cast %8 : vector<16x32xf32> to vector<1x16x32xf32>
    %cst_6 = arith.constant dense<0.000000e+00> : vector<1x32xf32>
    %10 = vector.multi_reduction <add>, %9, %cst_6 [1] : vector<1x16x32xf32> to vector<1x32xf32>
    %cst_7 = arith.constant 1.600000e+01 : f32
    %11 = vector.broadcast %cst_7 : f32 to vector<1x32xf32>
    %12 = arith.divf %10, %11 : vector<1x32xf32>
    %c0_8 = arith.constant 0 : index
    %c0_9 = arith.constant 0 : index
    %13 = vector.load %arg4[%c0_8, %c0_9] : memref<64x32xf32, #tpu.memory_space<vmem>>, vector<64x32xf32>
    %14 = arith.mulf %13, %13 : vector<64x32xf32>
    %cst_10 = arith.constant dense<0.000000e+00> : vector<64xf32>
    %15 = vector.multi_reduction <add>, %14, %cst_10 [1] : vector<64x32xf32> to vector<64xf32>
    %16 = vector.shape_cast %15 : vector<64xf32> to vector<1x64xf32>
    %cst_11 = arith.constant dense<0.000000e+00> : vector<16x64xf32>
    %17 = tpu.matmul %7, %13, %cst_11 {dimension_numbers = #tpu.dot_dimension_numbers<[1], [1], [0], [0], [0, 0, 1, 0], [], []>} : vector<16x32xf32>, vector<64x32xf32>, vector<16x64xf32> -> vector<16x64xf32>
    %cst_12 = arith.constant 2.000000e+00 : f32
    %18 = vector.broadcast %cst_12 : f32 to vector<16x64xf32>
    %19 = arith.mulf %18, %17 : vector<16x64xf32>
    %20 = vector.broadcast %16 : vector<1x64xf32> to vector<16x64xf32>
    %21 = arith.subf %20, %19 : vector<16x64xf32>
    %22 = tpu.iota {dimensions = array<i32: 1>} : vector<16x64xi32>
    %cst_13 = arith.constant dense<0x7F800000> : vector<16xf32>
    %23 = vector.multi_reduction <minimumf>, %21, %cst_13 [1] : vector<16x64xf32> to vector<16xf32>
    %24 = vector.shape_cast %23 : vector<16xf32> to vector<16x1xf32>
    %25 = vector.broadcast %24 : vector<16x1xf32> to vector<16x64xf32>
    %26 = arith.cmpf ole, %21, %25 : vector<16x64xf32>
    %c64_i32 = arith.constant 64 : i32
    %27 = vector.broadcast %c64_i32 : i32 to vector<16x64xi32>
    %28 = arith.select %26, %22, %27 : vector<16x64xi1>, vector<16x64xi32>
    %cst_14 = arith.constant dense<2147483647> : vector<16xi32>
    %29 = vector.multi_reduction <minsi>, %28, %cst_14 [1] : vector<16x64xi32> to vector<16xi32>
    %30 = vector.shape_cast %29 : vector<16xi32> to vector<16x1xi32>
    %31 = vector.broadcast %30 : vector<16x1xi32> to vector<16x64xi32>
    %32 = arith.cmpi eq, %22, %31 : vector<16x64xi32>
    %33 = arith.extui %32 : vector<16x64xi1> to vector<16x64xi32>
    %34 = arith.sitofp %33 : vector<16x64xi32> to vector<16x64xf32>
    %cst_15 = arith.constant dense<0.000000e+00> : vector<16x32xf32>
    %35 = tpu.matmul %34, %13, %cst_15 {dimension_numbers = #tpu.dot_dimension_numbers<[1], [0], [0], [1], [0, 0, 1, 1], [], []>} : vector<16x64xf32>, vector<64x32xf32>, vector<16x32xf32> -> vector<16x32xf32>
    %36 = arith.subf %35, %7 : vector<16x32xf32>
    %37 = arith.mulf %36, %36 : vector<16x32xf32>
    %38 = vector.shape_cast %37 : vector<16x32xf32> to vector<1x16x32xf32>
    %cst_16 = arith.constant dense<0.000000e+00> : vector<1xf32>
    %39 = vector.multi_reduction <add>, %38, %cst_16 [1, 2] : vector<1x16x32xf32> to vector<1xf32>
    %40 = vector.shape_cast %39 : vector<1xf32> to vector<1x1xf32>
    %c0_17 = arith.constant 0 : index
    %c0_18 = arith.constant 0 : index
    %41 = vector.load %arg5[%c0_17, %c0_18] : memref<32x64xf32, #tpu.memory_space<vmem>>, vector<32x64xf32>
    %cst_19 = arith.constant dense<0.000000e+00> : vector<16x64xf32>
    %42 = tpu.matmul %35, %41, %cst_19 {dimension_numbers = #tpu.dot_dimension_numbers<[1], [0], [0], [1], [0, 0, 1, 1], [], []>} : vector<16x32xf32>, vector<32x64xf32>, vector<16x64xf32> -> vector<16x64xf32>
    %c0_20 = arith.constant 0 : index
    %c0_21 = arith.constant 0 : index
    %43 = vector.load %arg6[%c0_20, %c0_21] : memref<32x64xf32, #tpu.memory_space<vmem>>, vector<32x64xf32>
    %cst_22 = arith.constant dense<0.000000e+00> : vector<1x64xf32>
    %44 = tpu.matmul %12, %43, %cst_22 {dimension_numbers = #tpu.dot_dimension_numbers<[1], [0], [0], [1], [0, 0, 1, 1], [], []>} : vector<1x32xf32>, vector<32x64xf32>, vector<1x64xf32> -> vector<1x64xf32>
    %c0_23 = arith.constant 0 : index
    %c0_24 = arith.constant 0 : index
    %45 = vector.load %arg7[%c0_23, %c0_24] : memref<1x64xf32, #tpu.memory_space<vmem>>, vector<1x64xf32>
    %46 = arith.addf %44, %45 : vector<1x64xf32>
    %47 = vector.shape_cast %42 : vector<16x64xf32> to vector<1x16x64xf32>
    %48 = vector.shape_cast %46 : vector<1x64xf32> to vector<1x1x64xf32>
    %49 = vector.broadcast %48 : vector<1x1x64xf32> to vector<1x16x64xf32>
    %50 = arith.addf %47, %49 : vector<1x16x64xf32>
    %51 = vector.shape_cast %7 : vector<16x32xf32> to vector<1x16x32xf32>
    %52 = vector.shape_cast %35 : vector<16x32xf32> to vector<1x16x32xf32>
    %53 = tpu.concatenate %50, %51, %52 in 2 : vector<1x16x64xf32>, vector<1x16x32xf32>, vector<1x16x32xf32> -> vector<1x16x128xf32>
    %c0_25 = arith.constant 0 : index
    %c0_26 = arith.constant 0 : index
    %c0_27 = arith.constant 0 : index
    %54 = vector.load %arg8[%c0_25, %c0_26, %c0_27] : memref<1x16x128xf32, #tpu.memory_space<vmem>>, vector<1x16x128xf32>
    tpu.vector_store %arg8[%c0_25, %c0_26, %c0_27], %53 {strides = array<i32>} : memref<1x16x128xf32, #tpu.memory_space<vmem>>, vector<1x16x128xf32>,
    %55 = vector.shape_cast %30 : vector<16x1xi32> to vector<1x16x1xi32>
    %c0_28 = arith.constant 0 : index
    %c0_29 = arith.constant 0 : index
    %c0_30 = arith.constant 0 : index
    %56 = vector.load %arg9[%c0_28, %c0_29, %c0_30] : memref<1x16x1xi32, #tpu.memory_space<vmem>>, vector<1x16x1xi32>
    tpu.vector_store %arg9[%c0_28, %c0_29, %c0_30], %55 {strides = array<i32>} : memref<1x16x1xi32, #tpu.memory_space<vmem>>, vector<1x16x1xi32>,
    %57 = tpu.concatenate %12, %40 in 1 : vector<1x32xf32>, vector<1x1xf32> -> vector<1x33xf32>
    %58 = vector.shape_cast %57 : vector<1x33xf32> to vector<1x1x33xf32>
    %c0_31 = arith.constant 0 : index
    %c0_32 = arith.constant 0 : index
    %c0_33 = arith.constant 0 : index
    %59 = vector.load %arg10[%c0_31, %c0_32, %c0_33] : memref<1x1x33xf32, #tpu.memory_space<vmem>>, vector<1x1x33xf32>
    tpu.vector_store %arg10[%c0_31, %c0_32, %c0_33], %58 {strides = array<i32>} : memref<1x1x33xf32, #tpu.memory_space<vmem>>, vector<1x1x33xf32>,
    return
  }
  func.func @transform_0(%arg0: i32) -> (i32, i32, i32) {
    %c0_i32 = arith.constant 0 : i32
    %c0_i32_0 = arith.constant 0 : i32
    %c0_i32_1 = arith.constant 0 : i32
    return %arg0, %c0_i32, %c0_i32_0 : i32, i32, i32
  }
  func.func @transform_1(%arg0: i32) -> (i32, i32) {
    %c0_i32 = arith.constant 0 : i32
    %c0_i32_0 = arith.constant 0 : i32
    %c0_i32_1 = arith.constant 0 : i32
    return %c0_i32, %c0_i32_0 : i32, i32
  }
  func.func @transform_2(%arg0: i32) -> (i32, i32) {
    %c0_i32 = arith.constant 0 : i32
    %c0_i32_0 = arith.constant 0 : i32
    %c0_i32_1 = arith.constant 0 : i32
    return %c0_i32, %c0_i32_0 : i32, i32
  }
  func.func @transform_3(%arg0: i32) -> (i32, i32) {
    %c0_i32 = arith.constant 0 : i32
    %c0_i32_0 = arith.constant 0 : i32
    %c0_i32_1 = arith.constant 0 : i32
    return %c0_i32, %c0_i32_0 : i32, i32
  }
  func.func @transform_4(%arg0: i32) -> (i32, i32) {
    %c0_i32 = arith.constant 0 : i32
    %c0_i32_0 = arith.constant 0 : i32
    %c0_i32_1 = arith.constant 0 : i32
    return %c0_i32, %c0_i32_0 : i32, i32
  }
  func.func @transform_5(%arg0: i32) -> (i32, i32) {
    %c0_i32 = arith.constant 0 : i32
    %c0_i32_0 = arith.constant 0 : i32
    %c0_i32_1 = arith.constant 0 : i32
    return %c0_i32, %c0_i32_0 : i32, i32
  }
  func.func @transform_6(%arg0: i32) -> (i32, i32) {
    %c0_i32 = arith.constant 0 : i32
    %c0_i32_0 = arith.constant 0 : i32
    %c0_i32_1 = arith.constant 0 : i32
    return %c0_i32, %c0_i32_0 : i32, i32
  }
  func.func @transform_7(%arg0: i32) -> (i32, i32, i32) {
    %c0_i32 = arith.constant 0 : i32
    %c0_i32_0 = arith.constant 0 : i32
    %c0_i32_1 = arith.constant 0 : i32
    return %arg0, %c0_i32, %c0_i32_0 : i32, i32, i32
  }
  func.func @transform_8(%arg0: i32) -> (i32, i32, i32) {
    %c0_i32 = arith.constant 0 : i32
    %c0_i32_0 = arith.constant 0 : i32
    %c0_i32_1 = arith.constant 0 : i32
    return %arg0, %c0_i32, %c0_i32_0 : i32, i32, i32
  }
  func.func @transform_9(%arg0: i32) -> (i32, i32, i32) {
    %c0_i32 = arith.constant 0 : i32
    %c0_i32_0 = arith.constant 0 : i32
    %c0_i32_1 = arith.constant 0 : i32
    return %arg0, %c0_i32, %c0_i32_0 : i32, i32, i32
  }
}

</mosaic_0001>

<llo_original>
// kernel: csae_forward.1
$region0: #{csae_forward.1}
  #allocation0 [shape = 'u32[]', space=smem, size = 0x4, offset = 0x4, fixed_abs, tag = 'smem constant byte address 0x4 - core index']
  #allocation1 [shape = 'u32[144,128]{1,0:T(1,128)}', space=vmem, size = 0x12000, scoped, tag = 'internal scratch']
  %s0 = inlined_call_operand.vmem [shape: f32[2,16,64], index: 0, kind: input, shape index: {}]
  %s1 = inlined_call_operand.vmem [shape: f32[64,64], index: 1, kind: input, shape index: {}]
  %s2 = inlined_call_operand.vmem [shape: f32[1,64], index: 2, kind: input, shape index: {}]
  %s3 = inlined_call_operand.vmem [shape: f32[64,32], index: 3, kind: input, shape index: {}]
  %s4 = inlined_call_operand.vmem [shape: f32[32,64], index: 4, kind: input, shape index: {}]
  %s5 = inlined_call_operand.vmem [shape: f32[32,64], index: 5, kind: input, shape index: {}]
  %s6 = inlined_call_operand.vmem [shape: f32[1,64], index: 6, kind: input, shape index: {}]
  %s7 = inlined_call_operand.vmem [shape: f32[2,16,128], index: 7, kind: output, shape index: {0}]
  %s8 = inlined_call_operand.vmem [shape: s32[2,16,1], index: 8, kind: output, shape index: {1}]
  %s9 = inlined_call_operand.vmem [shape: f32[2,1,33], index: 9, kind: output, shape index: {2}]
  %10 = xla_tuple %s7, %s8, %s9
  %s11 = sld [smem:[#allocation0]]
  $region77: #{csae_forward.1} parent=0
    _
  %s13 = ssub.s32 1, %s11
  %s14 = scalar_select 0, %s13, %s11
  loop: start=0, step=1, limit=4
  $region2: #{csae_forward.1} parent=0 // loop_pre_header
    _
  $region3: #{csae_forward.1} parent=0 // loop_header
    %s16 = sphi 0, %s20
    %p17 = scmp.ge.s32.totalorder %s16, 4
    %s26 = sphi 0, %s28
    %s29 = sphi 0, %s26
    %s30 = sphi 0, %s29
    %s46 = sphi 0, %s30
    %s50 = sphi 0, %s50
    %s52 = sphi 0, %s50
    %s53 = sphi 0, %s52
    %s67 = sphi 0, %s53
    %s71 = sphi 0, %s71
    %s73 = sphi 0, %s71
    %s74 = sphi 0, %s73
    %s88 = sphi 0, %s74
    %s92 = sphi 0, %s92
    %s94 = sphi 0, %s92
    %s95 = sphi 0, %s94
    %s109 = sphi 0, %s95
    %s113 = sphi 0, %s113
    %s115 = sphi 0, %s113
    %s116 = sphi 0, %s115
    %s130 = sphi 0, %s116
    %s134 = sphi 0, %s134
    %s136 = sphi 0, %s134
    %s137 = sphi 0, %s136
    %s151 = sphi 0, %s137
    %s155 = sphi 0, %s155
    %s157 = sphi 0, %s155
    %s158 = sphi 0, %s157
    %s172 = sphi 0, %s158
    %s178 = sphi 0, %s180
    %s181 = sphi 0, %s178
    %s182 = sphi 0, %s181
    %s198 = sphi 0, %s182
    %s204 = sphi 0, %s206
    %s207 = sphi 0, %s204
    %s208 = sphi 0, %s207
    %s224 = sphi 0, %s208
    %s230 = sphi 0, %s232
    %s233 = sphi 0, %s230
    %s234 = sphi 0, %s233
    %s250 = sphi 0, %s234
  $region4: #{csae_forward.1} parent=0 // loop_header_branch
    %19 = sbr.rel (%p17) target = $region8
  $region5: #{csae_forward.1} parent=0 // loop_body
    %s21 = ssub.s32 %s16, 1
    %s22 = ssub.s32 %s16, 2
    %s23 = sadd.s32 %s16, 1
    %s24 = ssub.s32 %s16, %s23
    %p25 = scmp.eq.s32.totalorder %s24, 0
    %s27 = sadd.s32 %s26, 1
    %s28 = scalar_select %p25, %s26, %s27
    %p31 = pneg %p25
    %p32 = scmp.eq.s32.totalorder %s16, 1
    %p33 = por %p31, %p32
    %p34 = scmp.ne.s32.totalorder %s26, %s29
    %p35 = scmp.eq.s32.totalorder %s16, 0
    %p36 = por %p34, %p35
    %p37 = scmp.ne.s32.totalorder %s26, %s29
    %p38 = scmp.eq.s32.totalorder %s21, 1
    %p39 = por %p37, %p38
    %p40 = scmp.ne.s32.totalorder %s29, %s30
    %p41 = scmp.eq.s32.totalorder %s21, 0
    %p42 = por %p40, %p41
    %p43 = scmp.ne.s32.totalorder %s29, %s30
    %p44 = scmp.eq.s32.totalorder %s22, 1
    %p45 = por %p43, %p44
    %p47 = scmp.ne.s32.totalorder %s30, %s46
    %p48 = scmp.eq.s32.totalorder %s22, 0
    %p49 = por %p47, %p48
    %s51 = sadd.s32 %s50, 1
    %p54 = scmp.eq.s32.totalorder %s16, 1
    %p55 = scmp.ne.s32.totalorder %s50, %s52
    %p56 = scmp.eq.s32.totalorder %s16, 0
    %p57 = por %p55, %p56
    %p58 = scmp.ne.s32.totalorder %s50, %s52
    %p59 = scmp.eq.s32.totalorder %s21, 1
    %p60 = por %p58, %p59
    %p61 = scmp.ne.s32.totalorder %s52, %s53
    %p62 = scmp.eq.s32.totalorder %s21, 0
    %p63 = por %p61, %p62
    %p64 = scmp.ne.s32.totalorder %s52, %s53
    %p65 = scmp.eq.s32.totalorder %s22, 1
    %p66 = por %p64, %p65
    %p68 = scmp.ne.s32.totalorder %s53, %s67
    %p69 = scmp.eq.s32.totalorder %s22, 0
    %p70 = por %p68, %p69
    %s72 = sadd.s32 %s71, 1
    %p75 = scmp.eq.s32.totalorder %s16, 1
    %p76 = scmp.ne.s32.totalorder %s71, %s73
    %p77 = scmp.eq.s32.totalorder %s16, 0
    %p78 = por %p76, %p77
    %p79 = scmp.ne.s32.totalorder %s71, %s73
    %p80 = scmp.eq.s32.totalorder %s21, 1
    %p81 = por %p79, %p80
    %p82 = scmp.ne.s32.totalorder %s73, %s74
    %p83 = scmp.eq.s32.totalorder %s21, 0
    %p84 = por %p82, %p83
    %p85 = scmp.ne.s32.totalorder %s73, %s74
    %p86 = scmp.eq.s32.totalorder %s22, 1
    %p87 = por %p85, %p86
    %p89 = scmp.ne.s32.totalorder %s74, %s88
    %p90 = scmp.eq.s32.totalorder %s22, 0
    %p91 = por %p89, %p90
    %s93 = sadd.s32 %s92, 1
    %p96 = scmp.eq.s32.totalorder %s16, 1
    %p97 = scmp.ne.s32.totalorder %s92, %s94
    %p98 = scmp.eq.s32.totalorder %s16, 0
    %p99 = por %p97, %p98
    %p100 = scmp.ne.s32.totalorder %s92, %s94
    %p101 = scmp.eq.s32.totalorder %s21, 1
    %p102 = por %p100, %p101
    %p103 = scmp.ne.s32.totalorder %s94, %s95
    %p104 = scmp.eq.s32.totalorder %s21, 0
    %p105 = por %p103, %p104
    %p106 = scmp.ne.s32.totalorder %s94, %s95
    %p107 = scmp.eq.s32.totalorder %s22, 1
    %p108 = por %p106, %p107
    %p110 = scmp.ne.s32.totalorder %s95, %s109
    %p111 = scmp.eq.s32.totalorder %s22, 0
    %p112 = por %p110, %p111
    %s114 = sadd.s32 %s113, 1
    %p117 = scmp.eq.s32.totalorder %s16, 1
    %p118 = scmp.ne.s32.totalorder %s113, %s115
    %p119 = scmp.eq.s32.totalorder %s16, 0
    %p120 = por %p118, %p119
    %p121 = scmp.ne.s32.totalorder %s113, %s115
    %p122 = scmp.eq.s32.totalorder %s21, 1
    %p123 = por %p121, %p122
    %p124 = scmp.ne.s32.totalorder %s115, %s116
    %p125 = scmp.eq.s32.totalorder %s21, 0
    %p126 = por %p124, %p125
    %p127 = scmp.ne.s32.totalorder %s115, %s116
    %p128 = scmp.eq.s32.totalorder %s22, 1
    %p129 = por %p127, %p128
    %p131 = scmp.ne.s32.totalorder %s116, %s130
    %p132 = scmp.eq.s32.totalorder %s22, 0
    %p133 = por %p131, %p132
    %s135 = sadd.s32 %s134, 1
    %p138 = scmp.eq.s32.totalorder %s16, 1
    %p139 = scmp.ne.s32.totalorder %s134, %s136
    %p140 = scmp.eq.s32.totalorder %s16, 0
    %p141 = por %p139, %p140
    %p142 = scmp.ne.s32.totalorder %s134, %s136
    %p143 = scmp.eq.s32.totalorder %s21, 1
    %p144 = por %p142, %p143
    %p145 = scmp.ne.s32.totalorder %s136, %s137
    %p146 = scmp.eq.s32.totalorder %s21, 0
    %p147 = por %p145, %p146
    %p148 = scmp.ne.s32.totalorder %s136, %s137
    %p149 = scmp.eq.s32.totalorder %s22, 1
    %p150 = por %p148, %p149
    %p152 = scmp.ne.s32.totalorder %s137, %s151
    %p153 = scmp.eq.s32.totalorder %s22, 0
    %p154 = por %p152, %p153
    %s156 = sadd.s32 %s155, 1
    %p159 = scmp.eq.s32.totalorder %s16, 1
    %p160 = scmp.ne.s32.totalorder %s155, %s157
    %p161 = scmp.eq.s32.totalorder %s16, 0
    %p162 = por %p160, %p161
    %p163 = scmp.ne.s32.totalorder %s155, %s157
    %p164 = scmp.eq.s32.totalorder %s21, 1
    %p165 = por %p163, %p164
    %p166 = scmp.ne.s32.totalorder %s157, %s158
    %p167 = scmp.eq.s32.totalorder %s21, 0
    %p168 = por %p166, %p167
    %p169 = scmp.ne.s32.totalorder %s157, %s158
    %p170 = scmp.eq.s32.totalorder %s22, 1
    %p171 = por %p169, %p170
    %p173 = scmp.ne.s32.totalorder %s158, %s172
    %p174 = scmp.eq.s32.totalorder %s22, 0
    %p175 = por %p173, %p174
    %s176 = ssub.s32 %s16, %s23
    %p177 = scmp.eq.s32.totalorder %s176, 0
    %s179 = sadd.s32 %s178, 1
    %s180 = scalar_select %p177, %s178, %s179
    %p183 = pneg %p177
    %p184 = scmp.eq.s32.totalorder %s16, 1
    %p185 = por %p183, %p184
    %p186 = scmp.ne.s32.totalorder %s178, %s181
    %p187 = scmp.eq.s32.totalorder %s16, 0
    %p188 = por %p186, %p187
    %p189 = scmp.ne.s32.totalorder %s178, %s181
    %p190 = scmp.eq.s32.totalorder %s21, 1
    %p191 = por %p189, %p190
    %p192 = scmp.ne.s32.totalorder %s181, %s182
    %p193 = scmp.eq.s32.totalorder %s21, 0
    %p194 = por %p192, %p193
    %p195 = scmp.ne.s32.totalorder %s181, %s182
    %p196 = scmp.eq.s32.totalorder %s22, 1
    %p197 = por %p195, %p196
    %p199 = scmp.ne.s32.totalorder %s182, %s198
    %p200 = scmp.eq.s32.totalorder %s22, 0
    %p201 = por %p199, %p200
    %s202 = ssub.s32 %s16, %s23
    %p203 = scmp.eq.s32.totalorder %s202, 0
    %s205 = sadd.s32 %s204, 1
    %s206 = scalar_select %p203, %s204, %s205
    %p209 = pneg %p203
    %p210 = scmp.eq.s32.totalorder %s16, 1
    %p211 = por %p209, %p210
    %p212 = scmp.ne.s32.totalorder %s204, %s207
    %p213 = scmp.eq.s32.totalorder %s16, 0
    %p214 = por %p212, %p213
    %p215 = scmp.ne.s32.totalorder %s204, %s207
    %p216 = scmp.eq.s32.totalorder %s21, 1
    %p217 = por %p215, %p216
    %p218 = scmp.ne.s32.totalorder %s207, %s208
    %p219 = scmp.eq.s32.totalorder %s21, 0
    %p220 = por %p218, %p219
    %p221 = scmp.ne.s32.totalorder %s207, %s208
    %p222 = scmp.eq.s32.totalorder %s22, 1
    %p223 = por %p221, %p222
    %p225 = scmp.ne.s32.totalorder %s208, %s224
    %p226 = scmp.eq.s32.totalorder %s22, 0
    %p227 = por %p225, %p226
    %s228 = ssub.s32 %s16, %s23
    %p229 = scmp.eq.s32.totalorder %s228, 0
    %s231 = sadd.s32 %s230, 1
    %s232 = scalar_select %p229, %s230, %s231
    %p235 = pneg %p229
    %p236 = scmp.eq.s32.totalorder %s16, 1
    %p237 = por %p235, %p236
    %p238 = scmp.ne.s32.totalorder %s230, %s233
    %p239 = scmp.eq.s32.totalorder %s16, 0
    %p240 = por %p238, %p239
    %p241 = scmp.ne.s32.totalorder %s230, %s233
    %p242 = scmp.eq.s32.totalorder %s21, 1
    %p243 = por %p241, %p242
    %p244 = scmp.ne.s32.totalorder %s233, %s234
    %p245 = scmp.eq.s32.totalorder %s21, 0
    %p246 = por %p244, %p245
    %p247 = scmp.ne.s32.totalorder %s233, %s234
    %p248 = scmp.eq.s32.totalorder %s22, 1
    %p249 = por %p247, %p248
    %p251 = scmp.ne.s32.totalorder %s234, %s250
    %p252 = scmp.eq.s32.totalorder %s22, 0
    %p253 = por %p251, %p252
    %p254 = scmp.le.s32.totalorder 1, %s16
    %p255 = scmp.lt.s32.totalorder %s16, 3
    %p256 = pnand %p254, %p255
    %p257 = pneg %p256
    // Predicated region
    $region9: #{csae_forward.1} parent=5 // pred_check
      _
    $region10: #{csae_forward.1} parent=5 // pred_check_branch
      %259 = sbr.rel (%p256) target = $region12
    $region11: #{csae_forward.1} parent=5 // pred_region
      %s260 = ssub.s32 %s16, 1
      // Predicated region
      $region13: #{csae_forward.1} parent=11 // pred_check
        %p261 = pneg %p63
      $region14: #{csae_forward.1} parent=11 // pred_check_branch
        %263 = sbr.rel (%p261) target = $region16
      $region15: #{csae_forward.1} parent=11 // pred_region
        _
      $region16: #{csae_forward.1} parent=11 // pred_fallthru
        _
      // Predicated region
      $region17: #{csae_forward.1} parent=11 // pred_check
        %p264 = pneg %p84
      $region18: #{csae_forward.1} parent=11 // pred_check_branch
        %266 = sbr.rel (%p264) target = $region20
      $region19: #{csae_forward.1} parent=11 // pred_region
        _
      $region20: #{csae_forward.1} parent=11 // pred_fallthru
        _
      // Predicated region
      $region21: #{csae_forward.1} parent=11 // pred_check
        %p267 = pneg %p105
      $region22: #{csae_forward.1} parent=11 // pred_check_branch
        %269 = sbr.rel (%p267) target = $region24
      $region23: #{csae_forward.1} parent=11 // pred_region
        _
      $region24: #{csae_forward.1} parent=11 // pred_fallthru
        _
      // Predicated region
      $region25: #{csae_forward.1} parent=11 // pred_check
        %p270 = pneg %p126
      $region26: #{csae_forward.1} parent=11 // pred_check_branch
        %272 = sbr.rel (%p270) target = $region28
      $region27: #{csae_forward.1} parent=11 // pred_region
        _
      $region28: #{csae_forward.1} parent=11 // pred_fallthru
        _
      // Predicated region
      $region29: #{csae_forward.1} parent=11 // pred_check
        %p273 = pneg %p147
      $region30: #{csae_forward.1} parent=11 // pred_check_branch
        %275 = sbr.rel (%p273) target = $region32
      $region31: #{csae_forward.1} parent=11 // pred_region
        _
      $region32: #{csae_forward.1} parent=11 // pred_fallthru
        _
      // Predicated region
      $region33: #{csae_forward.1} parent=11 // pred_check
        %p276 = pneg %p168
      $region34: #{csae_forward.1} parent=11 // pred_check_branch
        %278 = sbr.rel (%p276) target = $region36
      $region35: #{csae_forward.1} parent=11 // pred_region
        _
      $region36: #{csae_forward.1} parent=11 // pred_fallthru
        _
    $region12: #{csae_forward.1} parent=5 // pred_fallthru
      _
    %p279 = scmp.lt.s32.totalorder %s16, 2
    // Predicated region
    $region37: #{csae_forward.1} parent=5 // pred_check
      %p280 = pneg %p279
    $region38: #{csae_forward.1} parent=5 // pred_check_branch
      %282 = sbr.rel (%p280) target = $region40
    $region39: #{csae_forward.1} parent=5 // pred_region
      // Predicated region
      $region41: #{csae_forward.1} parent=39 // pred_check
        %p283 = pneg %p36
      $region42: #{csae_forward.1} parent=39 // pred_check_branch
        %285 = sbr.rel (%p283) target = $region44
      $region43: #{csae_forward.1} parent=39 // pred_region
        %p286 = scmp.lt.s32.totalorder %s16, 1
        %s287 = scalar_select %p286, %s16, 1
        %s288 = smul.addr %s287, 2
        %s289 = smul.addr %s288, 8
        %s290 = scalar_lea.vmem %s0, %s289
      $region44: #{csae_forward.1} parent=39 // pred_fallthru
        _
    $region40: #{csae_forward.1} parent=5 // pred_fallthru
      _
    %p291 = scmp.le.s32.totalorder 1, %s16
    %p292 = scmp.lt.s32.totalorder %s16, 3
    %p293 = pnand %p291, %p292
    %p294 = pneg %p293
    // Predicated region
    $region45: #{csae_forward.1} parent=5 // pred_check
      _
    $region46: #{csae_forward.1} parent=5 // pred_check_branch
      %296 = sbr.rel (%p293) target = $region48
    $region47: #{csae_forward.1} parent=5 // pred_region
      %s297 = ssub.s32 %s16, 1
      %p298 = scmp.lt.s32.totalorder %s21, 1
      %s299 = scalar_select %p298, %s21, 1
      %s300 = smul.addr %s299, 2
      %s301 = smul.addr %s300, 8
      %s302 = scalar_lea.vmem %s0, %s301
      %p303 = pneg %p42
      %p304 = pneg %p39
      %p305 = pneg %p63
      %p306 = pneg %p60
      %p307 = pneg %p84
      %p308 = pneg %p81
      %p309 = pneg %p105
      %p310 = pneg %p102
      %p311 = pneg %p126
      %p312 = pneg %p123
      %p313 = pneg %p147
      %p314 = pneg %p144
      %p315 = pneg %p168
      %p316 = pneg %p165
      %p317 = pneg %p194
      %p318 = pneg %p191
      %p319 = scmp.lt.s32.totalorder %s21, 1
      %s320 = scalar_select %p319, %s21, 1
      %s321 = smul.addr %s320, 2
      %s322 = smul.addr %s321, 8
      %s323 = scalar_lea.vmem %s7, %s322
      %p324 = pneg %p220
      %p325 = pneg %p217
      %p326 = scmp.lt.s32.totalorder %s21, 1
      %s327 = scalar_select %p326, %s21, 1
      %s328 = smul.addr %s327, 2
      %s329 = smul.addr %s328, 8
      %s330 = scalar_lea.vmem %s8, %s329
      %p331 = pneg %p246
      %p332 = pneg %p243
      %p333 = scmp.lt.s32.totalorder %s21, 1
      %s334 = scalar_select %p333, %s21, 1
      %s335 = scalar_lea.vmem %s9, %s334
      %p336 = scmp.lt.s32.totalorder %s21, 1
      %s337 = scalar_select %p336, %s21, 1
      %s338 = smul.addr %s337, 2
      %s339 = smul.addr %s338, 8
      %s340 = scalar_lea.vmem %s0, %s339
      %p341 = scmp.lt.s32.totalorder %s21, 1
      %s342 = scalar_select %p341, %s21, 1
      %s343 = smul.addr %s342, 2
      %s344 = smul.addr %s343, 8
      %s345 = scalar_lea.vmem %s7, %s344
      %p346 = scmp.lt.s32.totalorder %s21, 1
      %s347 = scalar_select %p346, %s21, 1
      %s348 = smul.addr %s347, 2
      %s349 = smul.addr %s348, 8
      %s350 = scalar_lea.vmem %s8, %s349
      %p351 = scmp.lt.s32.totalorder %s21, 1
      %s352 = scalar_select %p351, %s21, 1
      %s353 = scalar_lea.vmem %s9, %s352
      %v354 = vld [vmem:[%s340] sm:$0xff]
      %v355 = vld [vmem:[%s340 + $0x8] sm:$0xff]
      %v356 = vld [vmem:[%s1] sm:$0xff]
      %v357 = vld [vmem:[%s1 + $0x8] sm:$0xff]
      %v358 = vld [vmem:[%s1 + $0x10] sm:$0xff]
      %v359 = vld [vmem:[%s1 + $0x18] sm:$0xff]
      %v360 = vld [vmem:[%s1 + $0x20] sm:$0xff]
      %v361 = vld [vmem:[%s1 + $0x28] sm:$0xff]
      %v362 = vld [vmem:[%s1 + $0x30] sm:$0xff]
      %v363 = vld [vmem:[%s1 + $0x38] sm:$0xff]
      %v364 = vld [vmem:[%s2] sm:$0x1]
      %v366 = vlaneseq
      %v367 = vshrl.u32 %v366, 7
      %v368 = vsub.s32 0, %v367
      %v369 = vrot.slane %v364, %v368
      %vm371 = vcmask 523264
      %v373 = vsel %vm371, %v354, 0
      %v376 = vsel %vm371, %v355, 0
      %378 = vmatprep.subr.mxu0 0.0
      %379 = vmatpush1.msra.mxu0 %v356
      %380 = vmatprep.subr.mxu0 0.0
      %381 = vmatpush1.msra.mxu0 %v357
      %382 = vmatprep.subr.mxu0 0.0
      %383 = vmatpush1.msra.mxu0 %v358
      %384 = vmatprep.subr.mxu0 0.0
      %385 = vmatpush1.msra.mxu0 %v359
      %386 = vmatprep.subr.mxu0 0.0
      %387 = vmatpush1.msra.mxu0 %v360
      %388 = vmatprep.subr.mxu0 0.0
      %389 = vmatpush1.msra.mxu0 %v361
      %390 = vmatprep.subr.mxu0 0.0
      %391 = vmatpush1.msra.mxu0 %v362
      %392 = vmatprep.subr.mxu0 0.0
      %393 = vmatpush1.msra.mxu0 %v363
      %394 = vmatprep.subr.mxu0 0.0
      %395 = vmatpush1.msra.mxu0 0.0
      %396 = vmatprep.subr.mxu0 0.0
      %397 = vmatpush1.msra.mxu0 0.0
      %398 = vmatprep.subr.mxu0 0.0
      %399 = vmatpush1.msra.mxu0 0.0
      %400 = vmatprep.subr.mxu0 0.0
      %401 = vmatpush1.msra.mxu0 0.0
      %402 = vmatprep.subr.mxu0 0.0
      %403 = vmatpush1.msra.mxu0 0.0
      %404 = vmatprep.subr.mxu0 0.0
      %405 = vmatpush1.msra.mxu0 0.0
      %406 = vmatprep.subr.mxu0 0.0
      %407 = vmatpush1.msra.mxu0 0.0
      %408 = vmatprep.subr.mxu0 0.0
      %409 = vmatpush1.msra.mxu0 0.0
      %410 = vmatprep.subr.mxu0 0.0
      %411 = vmatpush1.msra.mxu0 0.0
      %412 = vmatprep.subr.mxu0 0.0
      %413 = vmatpush1.msra.mxu0 0.0
      %414 = vmatprep.subr.mxu0 0.0
      %415 = vmatpush1.msra.mxu0 0.0
      %416 = vmatprep.subr.mxu0 0.0
      %417 = vmatpush1.msra.mxu0 0.0
      %418 = vmatprep.subr.mxu0 0.0
      %419 = vmatpush1.msra.mxu0 0.0
      %420 = vmatprep.subr.mxu0 0.0
      %421 = vmatpush1.msra.mxu0 0.0
      %422 = vmatprep.subr.mxu0 0.0
      %423 = vmatpush1.msra.mxu0 0.0
      %424 = vmatprep.subr.mxu0 0.0
      %425 = vmatpush1.msra.mxu0 0.0
      %426 = vmatprep.subr.mxu0 0.0
      %427 = vmatpush1.msra.mxu0 0.0
      %428 = vmatprep.subr.mxu0 0.0
      %429 = vmatpush1.msra.mxu0 0.0
      %430 = vmatprep.subr.mxu0 0.0
      %431 = vmatpush1.msra.mxu0 0.0
      %432 = vmatprep.subr.mxu0 0.0
      %433 = vmatpush1.msra.mxu0 0.0
      %434 = vmatprep.subr.mxu0 0.0
      %435 = vmatpush1.msra.mxu0 0.0
      %436 = vmatprep.subr.mxu0 0.0
      %437 = vmatpush1.msra.mxu0 0.0
      %438 = vmatprep.subr.mxu0 0.0
      %439 = vmatpush1.msra.mxu0 0.0
      %440 = vmatprep.subr.mxu0 0.0
      %441 = vmatpush1.msra.mxu0 0.0
      %442 = vmatprep.mubr.f32.mxu0 0.0
      %443 = vmatmul.mubr.f32.gmra.mrb[0].mxu0 %v373
      %v444 = vpop.f32.mrb[0].mxu0
      %v445 = vadd.f32 %v369, %v444
      %v446 = vpop.f32.mrb[0].mxu0
      %447 = vmatprep.mubr.f32.mxu0 0.0
      %448 = vmatmul.mubr.f32.gmra.mrb[0].mxu0 %v376
      %v449 = vpop.f32.mrb[0].mxu0
      %v450 = vadd.f32 %v369, %v449
      %v451 = vpop.f32.mrb[0].mxu0
      %452 = vdwg.mxu0
      %vm453 = vcmask 523520
      %v454 = vsel %vm453, %v445, 0.0
      %v455 = vsel %vm453, %v450, 0.0
      %v456 = vadd.f32 %v454, %v455
      %v457 = vrot.slane %v456, 4
      %v458 = vadd.f32 %v456, %v457
      %v459 = vrot.slane %v458, 2
      %v460 = vadd.f32 %v458, %v459
      %v461 = vrot.slane %v460, 1
      %v462 = vadd.f32 %v460, %v461
      %v463 = vrcp.pop 16.0
      %v464 = vmul.f32 %v462, %v463
      %v465 = vld [vmem:[%s3] sm:$0xff]
      %v466 = vld [vmem:[%s3 + $0x8] sm:$0xff]
      %v467 = vld [vmem:[%s3 + $0x10] sm:$0xff]
      %v468 = vld [vmem:[%s3 + $0x18] sm:$0xff]
      %v469 = vld [vmem:[%s3 + $0x20] sm:$0xff]
      %v470 = vld [vmem:[%s3 + $0x28] sm:$0xff]
      %v471 = vld [vmem:[%s3 + $0x30] sm:$0xff]
      %v472 = vld [vmem:[%s3 + $0x38] sm:$0xff]
      %v473 = vmul.f32 %v465, %v465
      %v474 = vmul.f32 %v466, %v466
      %v475 = vmul.f32 %v467, %v467
      %v476 = vmul.f32 %v468, %v468
      %v477 = vmul.f32 %v469, %v469
      %v478 = vmul.f32 %v470, %v470
      %v479 = vmul.f32 %v471, %v471
      %v480 = vmul.f32 %v472, %v472
      %vm481 = vcmask 261120
      %v482 = vsel %vm481, %v473, 0.0
      %483 = vadd.xlane.f32.xlu0 %v482
      %v484 = vpop.xlane.xlu0 %483
      %v485 = vsel %vm481, %v474, 0.0
      %486 = vadd.xlane.f32.xlu0 %v485
      %v487 = vpop.xlane.xlu0 %486
      %v488 = vsel %vm481, %v475, 0.0
      %489 = vadd.xlane.f32.xlu0 %v488
      %v490 = vpop.xlane.xlu0 %489
      %v491 = vsel %vm481, %v476, 0.0
      %492 = vadd.xlane.f32.xlu0 %v491
      %v493 = vpop.xlane.xlu0 %492
      %v494 = vsel %vm481, %v477, 0.0
      %495 = vadd.xlane.f32.xlu0 %v494
      %v496 = vpop.xlane.xlu0 %495
      %v497 = vsel %vm481, %v478, 0.0
      %498 = vadd.xlane.f32.xlu0 %v497
      %v499 = vpop.xlane.xlu0 %498
      %v500 = vsel %vm481, %v479, 0.0
      %501 = vadd.xlane.f32.xlu0 %v500
      %v502 = vpop.xlane.xlu0 %501
      %v503 = vsel %vm481, %v480, 0.0
      %504 = vadd.xlane.f32.xlu0 %v503
      %v505 = vpop.xlane.xlu0 %504
      %v507 = vsel %vm481, %v445, 0
      %v510 = vsel %vm481, %v450, 0
      %v513 = vsel %vm481, %v465, 0
      %v516 = vsel %vm481, %v466, 0
      %v519 = vsel %vm481, %v467, 0
      %v522 = vsel %vm481, %v468, 0
      %v525 = vsel %vm481, %v469, 0
      %v528 = vsel %vm481, %v470, 0
      %v531 = vsel %vm481, %v471, 0
      %v534 = vsel %vm481, %v472, 0
      %536 = vmatprep.subr.mxu0 0.0
      %537 = vmatpush1.xpose.msra.mxu0 %v513
      %538 = vmatprep.subr.mxu0 0.0
      %539 = vmatpush1.xpose.msra.mxu0 %v516
      %540 = vmatprep.subr.mxu0 0.0
      %541 = vmatpush1.xpose.msra.mxu0 %v519
      %542 = vmatprep.subr.mxu0 0.0
      %543 = vmatpush1.xpose.msra.mxu0 %v522
      %544 = vmatprep.subr.mxu0 0.0
      %545 = vmatpush1.xpose.msra.mxu0 %v525
      %546 = vmatprep.subr.mxu0 0.0
      %547 = vmatpush1.xpose.msra.mxu0 %v528
      %548 = vmatprep.subr.mxu0 0.0
      %549 = vmatpush1.xpose.msra.mxu0 %v531
      %550 = vmatprep.subr.mxu0 0.0
      %551 = vmatpush1.xpose.msra.mxu0 %v534
      %552 = vmatprep.subr.mxu0 0.0
      %553 = vmatpush1.xpose.msra.mxu0 0.0
      %554 = vmatprep.subr.mxu0 0.0
      %555 = vmatpush1.xpose.msra.mxu0 0.0
      %556 = vmatprep.subr.mxu0 0.0
      %557 = vmatpush1.xpose.msra.mxu0 0.0
      %558 = vmatprep.subr.mxu0 0.0
      %559 = vmatpush1.xpose.msra.mxu0 0.0
      %560 = vmatprep.subr.mxu0 0.0
      %561 = vmatpush1.xpose.msra.mxu0 0.0
      %562 = vmatprep.subr.mxu0 0.0
      %563 = vmatpush1.xpose.msra.mxu0 0.0
      %564 = vmatprep.subr.mxu0 0.0
      %565 = vmatpush1.xpose.msra.mxu0 0.0
      %566 = vmatprep.subr.mxu0 0.0
      %567 = vmatpush1.xpose.msra.mxu0 0.0
      %568 = vmatprep.subr.mxu0 0.0
      %569 = vmatpush1.xpose.msra.mxu0 0.0
      %570 = vmatprep.subr.mxu0 0.0
      %571 = vmatpush1.xpose.msra.mxu0 0.0
      %572 = vmatprep.subr.mxu0 0.0
      %573 = vmatpush1.xpose.msra.mxu0 0.0
      %574 = vmatprep.subr.mxu0 0.0
      %575 = vmatpush1.xpose.msra.mxu0 0.0
      %576 = vmatprep.subr.mxu0 0.0
      %577 = vmatpush1.xpose.msra.mxu0 0.0
      %578 = vmatprep.subr.mxu0 0.0
      %579 = vmatpush1.xpose.msra.mxu0 0.0
      %580 = vmatprep.subr.mxu0 0.0
      %581 = vmatpush1.xpose.msra.mxu0 0.0
      %582 = vmatprep.subr.mxu0 0.0
      %583 = vmatpush1.xpose.msra.mxu0 0.0
      %584 = vmatprep.subr.mxu0 0.0
      %585 = vmatpush1.xpose.msra.mxu0 0.0
      %586 = vmatprep.subr.mxu0 0.0
      %587 = vmatpush1.xpose.msra.mxu0 0.0
      %588 = vmatprep.subr.mxu0 0.0
      %589 = vmatpush1.xpose.msra.mxu0 0.0
      %590 = vmatprep.subr.mxu0 0.0
      %591 = vmatpush1.xpose.msra.mxu0 0.0
      %592 = vmatprep.subr.mxu0 0.0
      %593 = vmatpush1.xpose.msra.mxu0 0.0
      %594 = vmatprep.subr.mxu0 0.0
      %595 = vmatpush1.xpose.msra.mxu0 0.0
      %596 = vmatprep.subr.mxu0 0.0
      %597 = vmatpush1.xpose.msra.mxu0 0.0
      %598 = vmatprep.subr.mxu0 0.0
      %599 = vmatpush1.xpose.msra.mxu0 0.0
      %600 = vmatprep.mubr.f32.mxu0 0.0
      %601 = vmatmul.mubr.f32.gmra.mrb[0].mxu0 %v507
      %v602 = vpop.f32.mrb[0].mxu0
      %v603 = vadd.f32 0.0, %v602
      %v604 = vpop.f32.mrb[0].mxu0
      %605 = vmatprep.mubr.f32.mxu0 0.0
      %606 = vmatmul.mubr.f32.gmra.mrb[0].mxu0 %v510
      %v607 = vpop.f32.mrb[0].mxu0
      %v608 = vadd.f32 0.0, %v607
      %v609 = vpop.f32.mrb[0].mxu0
      %610 = vdwg.mxu0
      %v611 = vmul.f32 %v603, 2.0
      %v612 = vmul.f32 %v608, 2.0
      %v615 = vlaneseq
      %v616 = vshrl.u32 %v615, 7
      %v617 = vsub.s32 0, %v616
      %v618 = vrot.slane %v611, %v617
      %620 = vbcast.lane.b32.xlu0 %v618, 256
      %v621 = vpop.permute.xlu0 %620
      %s623 = sor.u32 256, 8
      %624 = vbcast.lane.b32.xlu0 %v618, %s623
      %v625 = vpop.permute.xlu0 %624
      %s627 = sor.u32 256, 16
      %628 = vbcast.lane.b32.xlu0 %v618, %s627
      %v629 = vpop.permute.xlu0 %628
      %s631 = sor.u32 256, 24
      %632 = vbcast.lane.b32.xlu0 %v618, %s631
      %v633 = vpop.permute.xlu0 %632
      %s635 = sor.u32 256, 32
      %636 = vbcast.lane.b32.xlu0 %v618, %s635
      %v637 = vpop.permute.xlu0 %636
      %s639 = sor.u32 256, 40
      %640 = vbcast.lane.b32.xlu0 %v618, %s639
      %v641 = vpop.permute.xlu0 %640
      %s643 = sor.u32 256, 48
      %644 = vbcast.lane.b32.xlu0 %v618, %s643
      %v645 = vpop.permute.xlu0 %644
      %s647 = sor.u32 256, 56
      %648 = vbcast.lane.b32.xlu0 %v618, %s647
      %v649 = vpop.permute.xlu0 %648
      %v650 = vlaneseq
      %v651 = vshrl.u32 %v650, 7
      %v652 = vsub.s32 1, %v651
      %v653 = vrot.slane %v611, %v652
      %655 = vbcast.lane.b32.xlu0 %v653, 256
      %v656 = vpop.permute.xlu0 %655
      %s658 = sor.u32 256, 8
      %659 = vbcast.lane.b32.xlu0 %v653, %s658
      %v660 = vpop.permute.xlu0 %659
      %s662 = sor.u32 256, 16
      %663 = vbcast.lane.b32.xlu0 %v653, %s662
      %v664 = vpop.permute.xlu0 %663
      %s666 = sor.u32 256, 24
      %667 = vbcast.lane.b32.xlu0 %v653, %s666
      %v668 = vpop.permute.xlu0 %667
      %s670 = sor.u32 256, 32
      %671 = vbcast.lane.b32.xlu0 %v653, %s670
      %v672 = vpop.permute.xlu0 %671
      %s674 = sor.u32 256, 40
      %675 = vbcast.lane.b32.xlu0 %v653, %s674
      %v676 = vpop.permute.xlu0 %675
      %s678 = sor.u32 256, 48
      %679 = vbcast.lane.b32.xlu0 %v653, %s678
      %v680 = vpop.permute.xlu0 %679
      %s682 = sor.u32 256, 56
      %683 = vbcast.lane.b32.xlu0 %v653, %s682
      %v684 = vpop.permute.xlu0 %683
      %v685 = vlaneseq
      %v686 = vshrl.u32 %v685, 7
      %v687 = vsub.s32 2, %v686
      %v688 = vrot.slane %v611, %v687
      %690 = vbcast.lane.b32.xlu0 %v688, 256
      %v691 = vpop.permute.xlu0 %690
      %s693 = sor.u32 256, 8
      %694 = vbcast.lane.b32.xlu0 %v688, %s693
      %v695 = vpop.permute.xlu0 %694
      %s697 = sor.u32 256, 16
      %698 = vbcast.lane.b32.xlu0 %v688, %s697
      %v699 = vpop.permute.xlu0 %698
      %s701 = sor.u32 256, 24
      %702 = vbcast.lane.b32.xlu0 %v688, %s701
      %v703 = vpop.permute.xlu0 %702
      %s705 = sor.u32 256, 32
      %706 = vbcast.lane.b32.xlu0 %v688, %s705
      %v707 = vpop.permute.xlu0 %706
      %s709 = sor.u32 256, 40
      %710 = vbcast.lane.b32.xlu0 %v688, %s709
      %v711 = vpop.permute.xlu0 %710
      %s713 = sor.u32 256, 48
      %714 = vbcast.lane.b32.xlu0 %v688, %s713
      %v715 = vpop.permute.xlu0 %714
      %s717 = sor.u32 256, 56
      %718 = vbcast.lane.b32.xlu0 %v688, %s717
      %v719 = vpop.permute.xlu0 %718
      %v720 = vlaneseq
      %v721 = vshrl.u32 %v720, 7
      %v722 = vsub.s32 3, %v721
      %v723 = vrot.slane %v611, %v722
      %725 = vbcast.lane.b32.xlu0 %v723, 256
      %v726 = vpop.permute.xlu0 %725
      %s728 = sor.u32 256, 8
      %729 = vbcast.lane.b32.xlu0 %v723, %s728
      %v730 = vpop.permute.xlu0 %729
      %s732 = sor.u32 256, 16
      %733 = vbcast.lane.b32.xlu0 %v723, %s732
      %v734 = vpop.permute.xlu0 %733
      %s736 = sor.u32 256, 24
      %737 = vbcast.lane.b32.xlu0 %v723, %s736
      %v738 = vpop.permute.xlu0 %737
      %s740 = sor.u32 256, 32
      %741 = vbcast.lane.b32.xlu0 %v723, %s740
      %v742 = vpop.permute.xlu0 %741
      %s744 = sor.u32 256, 40
      %745 = vbcast.lane.b32.xlu0 %v723, %s744
      %v746 = vpop.permute.xlu0 %745
      %s748 = sor.u32 256, 48
      %749 = vbcast.lane.b32.xlu0 %v723, %s748
      %v750 = vpop.permute.xlu0 %749
      %s752 = sor.u32 256, 56
      %753 = vbcast.lane.b32.xlu0 %v723, %s752
      %v754 = vpop.permute.xlu0 %753
      %v755 = vlaneseq
      %v756 = vshrl.u32 %v755, 7
      %v757 = vsub.s32 4, %v756
      %v758 = vrot.slane %v611, %v757
      %760 = vbcast.lane.b32.xlu0 %v758, 256
      %v761 = vpop.permute.xlu0 %760
      %s763 = sor.u32 256, 8
      %764 = vbcast.lane.b32.xlu0 %v758, %s763
      %v765 = vpop.permute.xlu0 %764
      %s767 = sor.u32 256, 16
      %768 = vbcast.lane.b32.xlu0 %v758, %s767
      %v769 = vpop.permute.xlu0 %768
      %s771 = sor.u32 256, 24
      %772 = vbcast.lane.b32.xlu0 %v758, %s771
      %v773 = vpop.permute.xlu0 %772
      %s775 = sor.u32 256, 32
      %776 = vbcast.lane.b32.xlu0 %v758, %s775
      %v777 = vpop.permute.xlu0 %776
      %s779 = sor.u32 256, 40
      %780 = vbcast.lane.b32.xlu0 %v758, %s779
      %v781 = vpop.permute.xlu0 %780
      %s783 = sor.u32 256, 48
      %784 = vbcast.lane.b32.xlu0 %v758, %s783
      %v785 = vpop.permute.xlu0 %784
      %s787 = sor.u32 256, 56
      %788 = vbcast.lane.b32.xlu0 %v758, %s787
      %v789 = vpop.permute.xlu0 %788
      %v790 = vlaneseq
      %v791 = vshrl.u32 %v790, 7
      %v792 = vsub.s32 5, %v791
      %v793 = vrot.slane %v611, %v792
      %795 = vbcast.lane.b32.xlu0 %v793, 256
      %v796 = vpop.permute.xlu0 %795
      %s798 = sor.u32 256, 8
      %799 = vbcast.lane.b32.xlu0 %v793, %s798
      %v800 = vpop.permute.xlu0 %799
      %s802 = sor.u32 256, 16
      %803 = vbcast.lane.b32.xlu0 %v793, %s802
      %v804 = vpop.permute.xlu0 %803
      %s806 = sor.u32 256, 24
      %807 = vbcast.lane.b32.xlu0 %v793, %s806
      %v808 = vpop.permute.xlu0 %807
      %s810 = sor.u32 256, 32
      %811 = vbcast.lane.b32.xlu0 %v793, %s810
      %v812 = vpop.permute.xlu0 %811
      %s814 = sor.u32 256, 40
      %815 = vbcast.lane.b32.xlu0 %v793, %s814
      %v816 = vpop.permute.xlu0 %815
      %s818 = sor.u32 256, 48
      %819 = vbcast.lane.b32.xlu0 %v793, %s818
      %v820 = vpop.permute.xlu0 %819
      %s822 = sor.u32 256, 56
      %823 = vbcast.lane.b32.xlu0 %v793, %s822
      %v824 = vpop.permute.xlu0 %823
      %v825 = vlaneseq
      %v826 = vshrl.u32 %v825, 7
      %v827 = vsub.s32 6, %v826
      %v828 = vrot.slane %v611, %v827
      %830 = vbcast.lane.b32.xlu0 %v828, 256
      %v831 = vpop.permute.xlu0 %830
      %s833 = sor.u32 256, 8
      %834 = vbcast.lane.b32.xlu0 %v828, %s833
      %v835 = vpop.permute.xlu0 %834
      %s837 = sor.u32 256, 16
      %838 = vbcast.lane.b32.xlu0 %v828, %s837
      %v839 = vpop.permute.xlu0 %838
      %s841 = sor.u32 256, 24
      %842 = vbcast.lane.b32.xlu0 %v828, %s841
      %v843 = vpop.permute.xlu0 %842
      %s845 = sor.u32 256, 32
      %846 = vbcast.lane.b32.xlu0 %v828, %s845
      %v847 = vpop.permute.xlu0 %846
      %s849 = sor.u32 256, 40
      %850 = vbcast.lane.b32.xlu0 %v828, %s849
      %v851 = vpop.permute.xlu0 %850
      %s853 = sor.u32 256, 48
      %854 = vbcast.lane.b32.xlu0 %v828, %s853
      %v855 = vpop.permute.xlu0 %854
      %s857 = sor.u32 256, 56
      %858 = vbcast.lane.b32.xlu0 %v828, %s857
      %v859 = vpop.permute.xlu0 %858
      %v860 = vlaneseq
      %v861 = vshrl.u32 %v860, 7
      %v862 = vsub.s32 7, %v861
      %v863 = vrot.slane %v611, %v862
      %865 = vbcast.lane.b32.xlu0 %v863, 256
      %v866 = vpop.permute.xlu0 %865
      %s868 = sor.u32 256, 8
      %869 = vbcast.lane.b32.xlu0 %v863, %s868
      %v870 = vpop.permute.xlu0 %869
      %s872 = sor.u32 256, 16
      %873 = vbcast.lane.b32.xlu0 %v863, %s872
      %v874 = vpop.permute.xlu0 %873
      %s876 = sor.u32 256, 24
      %877 = vbcast.lane.b32.xlu0 %v863, %s876
      %v878 = vpop.permute.xlu0 %877
      %s880 = sor.u32 256, 32
      %881 = vbcast.lane.b32.xlu0 %v863, %s880
      %v882 = vpop.permute.xlu0 %881
      %s884 = sor.u32 256, 40
      %885 = vbcast.lane.b32.xlu0 %v863, %s884
      %v886 = vpop.permute.xlu0 %885
      %s888 = sor.u32 256, 48
      %889 = vbcast.lane.b32.xlu0 %v863, %s888
      %v890 = vpop.permute.xlu0 %889
      %s892 = sor.u32 256, 56
      %893 = vbcast.lane.b32.xlu0 %v863, %s892
      %v894 = vpop.permute.xlu0 %893
      %v895 = vlaneseq
      %v896 = vshrl.u32 %v895, 7
      %v897 = vsub.s32 0, %v896
      %v898 = vrot.slane %v612, %v897
      %900 = vbcast.lane.b32.xlu0 %v898, 256
      %v901 = vpop.permute.xlu0 %900
      %s903 = sor.u32 256, 8
      %904 = vbcast.lane.b32.xlu0 %v898, %s903
      %v905 = vpop.permute.xlu0 %904
      %s907 = sor.u32 256, 16
      %908 = vbcast.lane.b32.xlu0 %v898, %s907
      %v909 = vpop.permute.xlu0 %908
      %s911 = sor.u32 256, 24
      %912 = vbcast.lane.b32.xlu0 %v898, %s911
      %v913 = vpop.permute.xlu0 %912
      %s915 = sor.u32 256, 32
      %916 = vbcast.lane.b32.xlu0 %v898, %s915
      %v917 = vpop.permute.xlu0 %916
      %s919 = sor.u32 256, 40
      %920 = vbcast.lane.b32.xlu0 %v898, %s919
      %v921 = vpop.permute.xlu0 %920
      %s923 = sor.u32 256, 48
      %924 = vbcast.lane.b32.xlu0 %v898, %s923
      %v925 = vpop.permute.xlu0 %924
      %s927 = sor.u32 256, 56
      %928 = vbcast.lane.b32.xlu0 %v898, %s927
      %v929 = vpop.permute.xlu0 %928
      %v930 = vlaneseq
      %v931 = vshrl.u32 %v930, 7
      %v932 = vsub.s32 1, %v931
      %v933 = vrot.slane %v612, %v932
      %935 = vbcast.lane.b32.xlu0 %v933, 256
      %v936 = vpop.permute.xlu0 %935
      %s938 = sor.u32 256, 8
      %939 = vbcast.lane.b32.xlu0 %v933, %s938
      %v940 = vpop.permute.xlu0 %939
      %s942 = sor.u32 256, 16
      %943 = vbcast.lane.b32.xlu0 %v933, %s942
      %v944 = vpop.permute.xlu0 %943
      %s946 = sor.u32 256, 24
      %947 = vbcast.lane.b32.xlu0 %v933, %s946
      %v948 = vpop.permute.xlu0 %947
      %s950 = sor.u32 256, 32
      %951 = vbcast.lane.b32.xlu0 %v933, %s950
      %v952 = vpop.permute.xlu0 %951
      %s954 = sor.u32 256, 40
      %955 = vbcast.lane.b32.xlu0 %v933, %s954
      %v956 = vpop.permute.xlu0 %955
      %s958 = sor.u32 256, 48
      %959 = vbcast.lane.b32.xlu0 %v933, %s958
      %v960 = vpop.permute.xlu0 %959
      %s962 = sor.u32 256, 56
      %963 = vbcast.lane.b32.xlu0 %v933, %s962
      %v964 = vpop.permute.xlu0 %963
      %v965 = vlaneseq
      %v966 = vshrl.u32 %v965, 7
      %v967 = vsub.s32 2, %v966
      %v968 = vrot.slane %v612, %v967
      %970 = vbcast.lane.b32.xlu0 %v968, 256
      %v971 = vpop.permute.xlu0 %970
      %s973 = sor.u32 256, 8
      %974 = vbcast.lane.b32.xlu0 %v968, %s973
      %v975 = vpop.permute.xlu0 %974
      %s977 = sor.u32 256, 16
      %978 = vbcast.lane.b32.xlu0 %v968, %s977
      %v979 = vpop.permute.xlu0 %978
      %s981 = sor.u32 256, 24
      %982 = vbcast.lane.b32.xlu0 %v968, %s981
      %v983 = vpop.permute.xlu0 %982
      %s985 = sor.u32 256, 32
      %986 = vbcast.lane.b32.xlu0 %v968, %s985
      %v987 = vpop.permute.xlu0 %986
      %s989 = sor.u32 256, 40
      %990 = vbcast.lane.b32.xlu0 %v968, %s989
      %v991 = vpop.permute.xlu0 %990
      %s993 = sor.u32 256, 48
      %994 = vbcast.lane.b32.xlu0 %v968, %s993
      %v995 = vpop.permute.xlu0 %994
      %s997 = sor.u32 256, 56
      %998 = vbcast.lane.b32.xlu0 %v968, %s997
      %v999 = vpop.permute.xlu0 %998
      %v1000 = vlaneseq
      %v1001 = vshrl.u32 %v1000, 7
      %v1002 = vsub.s32 3, %v1001
      %v1003 = vrot.slane %v612, %v1002
      %1005 = vbcast.lane.b32.xlu0 %v1003, 256
      %v1006 = vpop.permute.xlu0 %1005
      %s1008 = sor.u32 256, 8
      %1009 = vbcast.lane.b32.xlu0 %v1003, %s1008
      %v1010 = vpop.permute.xlu0 %1009
      %s1012 = sor.u32 256, 16
      %1013 = vbcast.lane.b32.xlu0 %v1003, %s1012
      %v1014 = vpop.permute.xlu0 %1013
      %s1016 = sor.u32 256, 24
      %1017 = vbcast.lane.b32.xlu0 %v1003, %s1016
      %v1018 = vpop.permute.xlu0 %1017
      %s1020 = sor.u32 256, 32
      %1021 = vbcast.lane.b32.xlu0 %v1003, %s1020
      %v1022 = vpop.permute.xlu0 %1021
      %s1024 = sor.u32 256, 40
      %1025 = vbcast.lane.b32.xlu0 %v1003, %s1024
      %v1026 = vpop.permute.xlu0 %1025
      %s1028 = sor.u32 256, 48
      %1029 = vbcast.lane.b32.xlu0 %v1003, %s1028
      %v1030 = vpop.permute.xlu0 %1029
      %s1032 = sor.u32 256, 56
      %1033 = vbcast.lane.b32.xlu0 %v1003, %s1032
      %v1034 = vpop.permute.xlu0 %1033
      %v1035 = vlaneseq
      %v1036 = vshrl.u32 %v1035, 7
      %v1037 = vsub.s32 4, %v1036
      %v1038 = vrot.slane %v612, %v1037
      %1040 = vbcast.lane.b32.xlu0 %v1038, 256
      %v1041 = vpop.permute.xlu0 %1040
      %s1043 = sor.u32 256, 8
      %1044 = vbcast.lane.b32.xlu0 %v1038, %s1043
      %v1045 = vpop.permute.xlu0 %1044
      %s1047 = sor.u32 256, 16
      %1048 = vbcast.lane.b32.xlu0 %v1038, %s1047
      %v1049 = vpop.permute.xlu0 %1048
      %s1051 = sor.u32 256, 24
      %1052 = vbcast.lane.b32.xlu0 %v1038, %s1051
      %v1053 = vpop.permute.xlu0 %1052
      %s1055 = sor.u32 256, 32
      %1056 = vbcast.lane.b32.xlu0 %v1038, %s1055
      %v1057 = vpop.permute.xlu0 %1056
      %s1059 = sor.u32 256, 40
      %1060 = vbcast.lane.b32.xlu0 %v1038, %s1059
      %v1061 = vpop.permute.xlu0 %1060
      %s1063 = sor.u32 256, 48
      %1064 = vbcast.lane.b32.xlu0 %v1038, %s1063
      %v1065 = vpop.permute.xlu0 %1064
      %s1067 = sor.u32 256, 56
      %1068 = vbcast.lane.b32.xlu0 %v1038, %s1067
      %v1069 = vpop.permute.xlu0 %1068
      %v1070 = vlaneseq
      %v1071 = vshrl.u32 %v1070, 7
      %v1072 = vsub.s32 5, %v1071
      %v1073 = vrot.slane %v612, %v1072
      %1075 = vbcast.lane.b32.xlu0 %v1073, 256
      %v1076 = vpop.permute.xlu0 %1075
      %s1078 = sor.u32 256, 8
      %1079 = vbcast.lane.b32.xlu0 %v1073, %s1078
      %v1080 = vpop.permute.xlu0 %1079
      %s1082 = sor.u32 256, 16
      %1083 = vbcast.lane.b32.xlu0 %v1073, %s1082
      %v1084 = vpop.permute.xlu0 %1083
      %s1086 = sor.u32 256, 24
      %1087 = vbcast.lane.b32.xlu0 %v1073, %s1086
      %v1088 = vpop.permute.xlu0 %1087
      %s1090 = sor.u32 256, 32
      %1091 = vbcast.lane.b32.xlu0 %v1073, %s1090
      %v1092 = vpop.permute.xlu0 %1091
      %s1094 = sor.u32 256, 40
      %1095 = vbcast.lane.b32.xlu0 %v1073, %s1094
      %v1096 = vpop.permute.xlu0 %1095
      %s1098 = sor.u32 256, 48
      %1099 = vbcast.lane.b32.xlu0 %v1073, %s1098
      %v1100 = vpop.permute.xlu0 %1099
      %s1102 = sor.u32 256, 56
      %1103 = vbcast.lane.b32.xlu0 %v1073, %s1102
      %v1104 = vpop.permute.xlu0 %1103
      %v1105 = vlaneseq
      %v1106 = vshrl.u32 %v1105, 7
      %v1107 = vsub.s32 6, %v1106
      %v1108 = vrot.slane %v612, %v1107
      %1110 = vbcast.lane.b32.xlu0 %v1108, 256
      %v1111 = vpop.permute.xlu0 %1110
      %s1113 = sor.u32 256, 8
      %1114 = vbcast.lane.b32.xlu0 %v1108, %s1113
      %v1115 = vpop.permute.xlu0 %1114
      %s1117 = sor.u32 256, 16
      %1118 = vbcast.lane.b32.xlu0 %v1108, %s1117
      %v1119 = vpop.permute.xlu0 %1118
      %s1121 = sor.u32 256, 24
      %1122 = vbcast.lane.b32.xlu0 %v1108, %s1121
      %v1123 = vpop.permute.xlu0 %1122
      %s1125 = sor.u32 256, 32
      %1126 = vbcast.lane.b32.xlu0 %v1108, %s1125
      %v1127 = vpop.permute.xlu0 %1126
      %s1129 = sor.u32 256, 40
      %1130 = vbcast.lane.b32.xlu0 %v1108, %s1129
      %v1131 = vpop.permute.xlu0 %1130
      %s1133 = sor.u32 256, 48
      %1134 = vbcast.lane.b32.xlu0 %v1108, %s1133
      %v1135 = vpop.permute.xlu0 %1134
      %s1137 = sor.u32 256, 56
      %1138 = vbcast.lane.b32.xlu0 %v1108, %s1137
      %v1139 = vpop.permute.xlu0 %1138
      %v1140 = vlaneseq
      %v1141 = vshrl.u32 %v1140, 7
      %v1142 = vsub.s32 7, %v1141
      %v1143 = vrot.slane %v612, %v1142
      %1145 = vbcast.lane.b32.xlu0 %v1143, 256
      %v1146 = vpop.permute.xlu0 %1145
      %s1148 = sor.u32 256, 8
      %1149 = vbcast.lane.b32.xlu0 %v1143, %s1148
      %v1150 = vpop.permute.xlu0 %1149
      %s1152 = sor.u32 256, 16
      %1153 = vbcast.lane.b32.xlu0 %v1143, %s1152
      %v1154 = vpop.permute.xlu0 %1153
      %s1156 = sor.u32 256, 24
      %1157 = vbcast.lane.b32.xlu0 %v1143, %s1156
      %v1158 = vpop.permute.xlu0 %1157
      %s1160 = sor.u32 256, 32
      %1161 = vbcast.lane.b32.xlu0 %v1143, %s1160
      %v1162 = vpop.permute.xlu0 %1161
      %s1164 = sor.u32 256, 40
      %1165 = vbcast.lane.b32.xlu0 %v1143, %s1164
      %v1166 = vpop.permute.xlu0 %1165
      %s1168 = sor.u32 256, 48
      %1169 = vbcast.lane.b32.xlu0 %v1143, %s1168
      %v1170 = vpop.permute.xlu0 %1169
      %s1172 = sor.u32 256, 56
      %1173 = vbcast.lane.b32.xlu0 %v1143, %s1172
      %v1174 = vpop.permute.xlu0 %1173
      %v1303 = vsub.f32 %v484, %v621
      %v1304 = vsub.f32 %v487, %v625
      %v1305 = vsub.f32 %v490, %v629
      %v1306 = vsub.f32 %v493, %v633
      %v1307 = vsub.f32 %v496, %v637
      %v1308 = vsub.f32 %v499, %v641
      %v1309 = vsub.f32 %v502, %v645
      %v1310 = vsub.f32 %v505, %v649
      %v1311 = vsub.f32 %v484, %v656
      %v1312 = vsub.f32 %v487, %v660
      %v1313 = vsub.f32 %v490, %v664
      %v1314 = vsub.f32 %v493, %v668
      %v1315 = vsub.f32 %v496, %v672
      %v1316 = vsub.f32 %v499, %v676
      %v1317 = vsub.f32 %v502, %v680
      %v1318 = vsub.f32 %v505, %v684
      %v1319 = vsub.f32 %v484, %v691
      %v1320 = vsub.f32 %v487, %v695
      %v1321 = vsub.f32 %v490, %v699
      %v1322 = vsub.f32 %v493, %v703
      %v1323 = vsub.f32 %v496, %v707
      %v1324 = vsub.f32 %v499, %v711
      %v1325 = vsub.f32 %v502, %v715
      %v1326 = vsub.f32 %v505, %v719
      %v1327 = vsub.f32 %v484, %v726
      %v1328 = vsub.f32 %v487, %v730
      %v1329 = vsub.f32 %v490, %v734
      %v1330 = vsub.f32 %v493, %v738
      %v1331 = vsub.f32 %v496, %v742
      %v1332 = vsub.f32 %v499, %v746
      %v1333 = vsub.f32 %v502, %v750
      %v1334 = vsub.f32 %v505, %v754
      %v1335 = vsub.f32 %v484, %v761
      %v1336 = vsub.f32 %v487, %v765
      %v1337 = vsub.f32 %v490, %v769
      %v1338 = vsub.f32 %v493, %v773
      %v1339 = vsub.f32 %v496, %v777
      %v1340 = vsub.f32 %v499, %v781
      %v1341 = vsub.f32 %v502, %v785
      %v1342 = vsub.f32 %v505, %v789
      %v1343 = vsub.f32 %v484, %v796
      %v1344 = vsub.f32 %v487, %v800
      %v1345 = vsub.f32 %v490, %v804
      %v1346 = vsub.f32 %v493, %v808
      %v1347 = vsub.f32 %v496, %v812
      %v1348 = vsub.f32 %v499, %v816
      %v1349 = vsub.f32 %v502, %v820
      %v1350 = vsub.f32 %v505, %v824
      %v1351 = vsub.f32 %v484, %v831
      %v1352 = vsub.f32 %v487, %v835
      %v1353 = vsub.f32 %v490, %v839
      %v1354 = vsub.f32 %v493, %v843
      %v1355 = vsub.f32 %v496, %v847
      %v1356 = vsub.f32 %v499, %v851
      %v1357 = vsub.f32 %v502, %v855
      %v1358 = vsub.f32 %v505, %v859
      %v1359 = vsub.f32 %v484, %v866
      %v1360 = vsub.f32 %v487, %v870
      %v1361 = vsub.f32 %v490, %v874
      %v1362 = vsub.f32 %v493, %v878
      %v1363 = vsub.f32 %v496, %v882
      %v1364 = vsub.f32 %v499, %v886
      %v1365 = vsub.f32 %v502, %v890
      %v1366 = vsub.f32 %v505, %v894
      %v1367 = vsub.f32 %v484, %v901
      %v1368 = vsub.f32 %v487, %v905
      %v1369 = vsub.f32 %v490, %v909
      %v1370 = vsub.f32 %v493, %v913
      %v1371 = vsub.f32 %v496, %v917
      %v1372 = vsub.f32 %v499, %v921
      %v1373 = vsub.f32 %v502, %v925
      %v1374 = vsub.f32 %v505, %v929
      %v1375 = vsub.f32 %v484, %v936
      %v1376 = vsub.f32 %v487, %v940
      %v1377 = vsub.f32 %v490, %v944
      %v1378 = vsub.f32 %v493, %v948
      %v1379 = vsub.f32 %v496, %v952
      %v1380 = vsub.f32 %v499, %v956
      %v1381 = vsub.f32 %v502, %v960
      %v1382 = vsub.f32 %v505, %v964
      %v1383 = vsub.f32 %v484, %v971
      %v1384 = vsub.f32 %v487, %v975
      %v1385 = vsub.f32 %v490, %v979
      %v1386 = vsub.f32 %v493, %v983
      %v1387 = vsub.f32 %v496, %v987
      %v1388 = vsub.f32 %v499, %v991
      %v1389 = vsub.f32 %v502, %v995
      %v1390 = vsub.f32 %v505, %v999
      %v1391 = vsub.f32 %v484, %v1006
      %v1392 = vsub.f32 %v487, %v1010
      %v1393 = vsub.f32 %v490, %v1014
      %v1394 = vsub.f32 %v493, %v1018
      %v1395 = vsub.f32 %v496, %v1022
      %v1396 = vsub.f32 %v499, %v1026
      %v1397 = vsub.f32 %v502, %v1030
      %v1398 = vsub.f32 %v505, %v1034
      %v1399 = vsub.f32 %v484, %v1041
      %v1400 = vsub.f32 %v487, %v1045
      %v1401 = vsub.f32 %v490, %v1049
      %v1402 = vsub.f32 %v493, %v1053
      %v1403 = vsub.f32 %v496, %v1057
      %v1404 = vsub.f32 %v499, %v1061
      %v1405 = vsub.f32 %v502, %v1065
      %v1406 = vsub.f32 %v505, %v1069
      %v1407 = vsub.f32 %v484, %v1076
      %v1408 = vsub.f32 %v487, %v1080
      %v1409 = vsub.f32 %v490, %v1084
      %v1410 = vsub.f32 %v493, %v1088
      %v1411 = vsub.f32 %v496, %v1092
      %v1412 = vsub.f32 %v499, %v1096
      %v1413 = vsub.f32 %v502, %v1100
      %v1414 = vsub.f32 %v505, %v1104
      %v1415 = vsub.f32 %v484, %v1111
      %v1416 = vsub.f32 %v487, %v1115
      %v1417 = vsub.f32 %v490, %v1119
      %v1418 = vsub.f32 %v493, %v1123
      %v1419 = vsub.f32 %v496, %v1127
      %v1420 = vsub.f32 %v499, %v1131
      %v1421 = vsub.f32 %v502, %v1135
      %v1422 = vsub.f32 %v505, %v1139
      %v1423 = vsub.f32 %v484, %v1146
      %v1424 = vsub.f32 %v487, %v1150
      %v1425 = vsub.f32 %v490, %v1154
      %v1426 = vsub.f32 %v493, %v1158
      %v1427 = vsub.f32 %v496, %v1162
      %v1428 = vsub.f32 %v499, %v1166
      %v1429 = vsub.f32 %v502, %v1170
      %v1430 = vsub.f32 %v505, %v1174
      %v1431 = vlaneseq
      %v1432 = vand.u32 %v1431, 127
      %1561 = vset.pattern.permute.xlu0 0
      %1562 = vperm.xlu0 %1561, %v1303
      %v1563 = vpop.permute.xlu0 %1562
      %1564 = vset.pattern.permute.xlu0 0
      %1565 = vperm.xlu0 %1564, %v1304
      %v1566 = vpop.permute.xlu0 %1565
      %1567 = vset.pattern.permute.xlu0 0
      %1568 = vperm.xlu0 %1567, %v1305
      %v1569 = vpop.permute.xlu0 %1568
      %1570 = vset.pattern.permute.xlu0 0
      %1571 = vperm.xlu0 %1570, %v1306
      %v1572 = vpop.permute.xlu0 %1571
      %1573 = vset.pattern.permute.xlu0 0
      %1574 = vperm.xlu0 %1573, %v1307
      %v1575 = vpop.permute.xlu0 %1574
      %1576 = vset.pattern.permute.xlu0 0
      %1577 = vperm.xlu0 %1576, %v1308
      %v1578 = vpop.permute.xlu0 %1577
      %1579 = vset.pattern.permute.xlu0 0
      %1580 = vperm.xlu0 %1579, %v1309
      %v1581 = vpop.permute.xlu0 %1580
      %1582 = vset.pattern.permute.xlu0 0
      %1583 = vperm.xlu0 %1582, %v1310
      %v1584 = vpop.permute.xlu0 %1583
      %1585 = vset.pattern.permute.xlu0 0
      %1586 = vperm.xlu0 %1585, %v1311
      %v1587 = vpop.permute.xlu0 %1586
      %1588 = vset.pattern.permute.xlu0 0
      %1589 = vperm.xlu0 %1588, %v1312
      %v1590 = vpop.permute.xlu0 %1589
      %1591 = vset.pattern.permute.xlu0 0
      %1592 = vperm.xlu0 %1591, %v1313
      %v1593 = vpop.permute.xlu0 %1592
      %1594 = vset.pattern.permute.xlu0 0
      %1595 = vperm.xlu0 %1594, %v1314
      %v1596 = vpop.permute.xlu0 %1595
      %1597 = vset.pattern.permute.xlu0 0
      %1598 = vperm.xlu0 %1597, %v1315
      %v1599 = vpop.permute.xlu0 %1598
      %1600 = vset.pattern.permute.xlu0 0
      %1601 = vperm.xlu0 %1600, %v1316
      %v1602 = vpop.permute.xlu0 %1601
      %1603 = vset.pattern.permute.xlu0 0
      %1604 = vperm.xlu0 %1603, %v1317
      %v1605 = vpop.permute.xlu0 %1604
      %1606 = vset.pattern.permute.xlu0 0
      %1607 = vperm.xlu0 %1606, %v1318
      %v1608 = vpop.permute.xlu0 %1607
      %1609 = vset.pattern.permute.xlu0 0
      %1610 = vperm.xlu0 %1609, %v1319
      %v1611 = vpop.permute.xlu0 %1610
      %1612 = vset.pattern.permute.xlu0 0
      %1613 = vperm.xlu0 %1612, %v1320
      %v1614 = vpop.permute.xlu0 %1613
      %1615 = vset.pattern.permute.xlu0 0
      %1616 = vperm.xlu0 %1615, %v1321
      %v1617 = vpop.permute.xlu0 %1616
      %1618 = vset.pattern.permute.xlu0 0
      %1619 = vperm.xlu0 %1618, %v1322
      %v1620 = vpop.permute.xlu0 %1619
      %1621 = vset.pattern.permute.xlu0 0
      %1622 = vperm.xlu0 %1621, %v1323
      %v1623 = vpop.permute.xlu0 %1622
      %1624 = vset.pattern.permute.xlu0 0
      %1625 = vperm.xlu0 %1624, %v1324
      %v1626 = vpop.permute.xlu0 %1625
      %1627 = vset.pattern.permute.xlu0 0
      %1628 = vperm.xlu0 %1627, %v1325
      %v1629 = vpop.permute.xlu0 %1628
      %1630 = vset.pattern.permute.xlu0 0
      %1631 = vperm.xlu0 %1630, %v1326
      %v1632 = vpop.permute.xlu0 %1631
      %1633 = vset.pattern.permute.xlu0 0
      %1634 = vperm.xlu0 %1633, %v1327
      %v1635 = vpop.permute.xlu0 %1634
      %1636 = vset.pattern.permute.xlu0 0
      %1637 = vperm.xlu0 %1636, %v1328
      %v1638 = vpop.permute.xlu0 %1637
      %1639 = vset.pattern.permute.xlu0 0
      %1640 = vperm.xlu0 %1639, %v1329
      %v1641 = vpop.permute.xlu0 %1640
      %1642 = vset.pattern.permute.xlu0 0
      %1643 = vperm.xlu0 %1642, %v1330
      %v1644 = vpop.permute.xlu0 %1643
      %1645 = vset.pattern.permute.xlu0 0
      %1646 = vperm.xlu0 %1645, %v1331
      %v1647 = vpop.permute.xlu0 %1646
      %1648 = vset.pattern.permute.xlu0 0
      %1649 = vperm.xlu0 %1648, %v1332
      %v1650 = vpop.permute.xlu0 %1649
      %1651 = vset.pattern.permute.xlu0 0
      %1652 = vperm.xlu0 %1651, %v1333
      %v1653 = vpop.permute.xlu0 %1652
      %1654 = vset.pattern.permute.xlu0 0
      %1655 = vperm.xlu0 %1654, %v1334
      %v1656 = vpop.permute.xlu0 %1655
      %1657 = vset.pattern.permute.xlu0 0
      %1658 = vperm.xlu0 %1657, %v1335
      %v1659 = vpop.permute.xlu0 %1658
      %1660 = vset.pattern.permute.xlu0 0
      %1661 = vperm.xlu0 %1660, %v1336
      %v1662 = vpop.permute.xlu0 %1661
      %1663 = vset.pattern.permute.xlu0 0
      %1664 = vperm.xlu0 %1663, %v1337
      %v1665 = vpop.permute.xlu0 %1664
      %1666 = vset.pattern.permute.xlu0 0
      %1667 = vperm.xlu0 %1666, %v1338
      %v1668 = vpop.permute.xlu0 %1667
      %1669 = vset.pattern.permute.xlu0 0
      %1670 = vperm.xlu0 %1669, %v1339
      %v1671 = vpop.permute.xlu0 %1670
      %1672 = vset.pattern.permute.xlu0 0
      %1673 = vperm.xlu0 %1672, %v1340
      %v1674 = vpop.permute.xlu0 %1673
      %1675 = vset.pattern.permute.xlu0 0
      %1676 = vperm.xlu0 %1675, %v1341
      %v1677 = vpop.permute.xlu0 %1676
      %1678 = vset.pattern.permute.xlu0 0
      %1679 = vperm.xlu0 %1678, %v1342
      %v1680 = vpop.permute.xlu0 %1679
      %1681 = vset.pattern.permute.xlu0 0
      %1682 = vperm.xlu0 %1681, %v1343
      %v1683 = vpop.permute.xlu0 %1682
      %1684 = vset.pattern.permute.xlu0 0
      %1685 = vperm.xlu0 %1684, %v1344
      %v1686 = vpop.permute.xlu0 %1685
      %1687 = vset.pattern.permute.xlu0 0
      %1688 = vperm.xlu0 %1687, %v1345
      %v1689 = vpop.permute.xlu0 %1688
      %1690 = vset.pattern.permute.xlu0 0
      %1691 = vperm.xlu0 %1690, %v1346
      %v1692 = vpop.permute.xlu0 %1691
      %1693 = vset.pattern.permute.xlu0 0
      %1694 = vperm.xlu0 %1693, %v1347
      %v1695 = vpop.permute.xlu0 %1694
      %1696 = vset.pattern.permute.xlu0 0
      %1697 = vperm.xlu0 %1696, %v1348
      %v1698 = vpop.permute.xlu0 %1697
      %1699 = vset.pattern.permute.xlu0 0
      %1700 = vperm.xlu0 %1699, %v1349
      %v1701 = vpop.permute.xlu0 %1700
      %1702 = vset.pattern.permute.xlu0 0
      %1703 = vperm.xlu0 %1702, %v1350
      %v1704 = vpop.permute.xlu0 %1703
      %1705 = vset.pattern.permute.xlu0 0
      %1706 = vperm.xlu0 %1705, %v1351
      %v1707 = vpop.permute.xlu0 %1706
      %1708 = vset.pattern.permute.xlu0 0
      %1709 = vperm.xlu0 %1708, %v1352
      %v1710 = vpop.permute.xlu0 %1709
      %1711 = vset.pattern.permute.xlu0 0
      %1712 = vperm.xlu0 %1711, %v1353
      %v1713 = vpop.permute.xlu0 %1712
      %1714 = vset.pattern.permute.xlu0 0
      %1715 = vperm.xlu0 %1714, %v1354
      %v1716 = vpop.permute.xlu0 %1715
      %1717 = vset.pattern.permute.xlu0 0
      %1718 = vperm.xlu0 %1717, %v1355
      %v1719 = vpop.permute.xlu0 %1718
      %1720 = vset.pattern.permute.xlu0 0
      %1721 = vperm.xlu0 %1720, %v1356
      %v1722 = vpop.permute.xlu0 %1721
      %1723 = vset.pattern.permute.xlu0 0
      %1724 = vperm.xlu0 %1723, %v1357
      %v1725 = vpop.permute.xlu0 %1724
      %1726 = vset.pattern.permute.xlu0 0
      %1727 = vperm.xlu0 %1726, %v1358
      %v1728 = vpop.permute.xlu0 %1727
      %1729 = vset.pattern.permute.xlu0 0
      %1730 = vperm.xlu0 %1729, %v1359
      %v1731 = vpop.permute.xlu0 %1730
      %1732 = vset.pattern.permute.xlu0 0
      %1733 = vperm.xlu0 %1732, %v1360
      %v1734 = vpop.permute.xlu0 %1733
      %1735 = vset.pattern.permute.xlu0 0
      %1736 = vperm.xlu0 %1735, %v1361
      %v1737 = vpop.permute.xlu0 %1736
      %1738 = vset.pattern.permute.xlu0 0
      %1739 = vperm.xlu0 %1738, %v1362
      %v1740 = vpop.permute.xlu0 %1739
      %1741 = vset.pattern.permute.xlu0 0
      %1742 = vperm.xlu0 %1741, %v1363
      %v1743 = vpop.permute.xlu0 %1742
      %1744 = vset.pattern.permute.xlu0 0
      %1745 = vperm.xlu0 %1744, %v1364
      %v1746 = vpop.permute.xlu0 %1745
      %1747 = vset.pattern.permute.xlu0 0
      %1748 = vperm.xlu0 %1747, %v1365
      %v1749 = vpop.permute.xlu0 %1748
      %1750 = vset.pattern.permute.xlu0 0
      %1751 = vperm.xlu0 %1750, %v1366
      %v1752 = vpop.permute.xlu0 %1751
      %1753 = vset.pattern.permute.xlu0 0
      %1754 = vperm.xlu0 %1753, %v1367
      %v1755 = vpop.permute.xlu0 %1754
      %1756 = vset.pattern.permute.xlu0 0
      %1757 = vperm.xlu0 %1756, %v1368
      %v1758 = vpop.permute.xlu0 %1757
      %1759 = vset.pattern.permute.xlu0 0
      %1760 = vperm.xlu0 %1759, %v1369
      %v1761 = vpop.permute.xlu0 %1760
      %1762 = vset.pattern.permute.xlu0 0
      %1763 = vperm.xlu0 %1762, %v1370
      %v1764 = vpop.permute.xlu0 %1763
      %1765 = vset.pattern.permute.xlu0 0
      %1766 = vperm.xlu0 %1765, %v1371
      %v1767 = vpop.permute.xlu0 %1766
      %1768 = vset.pattern.permute.xlu0 0
      %1769 = vperm.xlu0 %1768, %v1372
      %v1770 = vpop.permute.xlu0 %1769
      %1771 = vset.pattern.permute.xlu0 0
      %1772 = vperm.xlu0 %1771, %v1373
      %v1773 = vpop.permute.xlu0 %1772
      %1774 = vset.pattern.permute.xlu0 0
      %1775 = vperm.xlu0 %1774, %v1374
      %v1776 = vpop.permute.xlu0 %1775
      %1777 = vset.pattern.permute.xlu0 0
      %1778 = vperm.xlu0 %1777, %v1375
      %v1779 = vpop.permute.xlu0 %1778
      %1780 = vset.pattern.permute.xlu0 0
      %1781 = vperm.xlu0 %1780, %v1376
      %v1782 = vpop.permute.xlu0 %1781
      %1783 = vset.pattern.permute.xlu0 0
      %1784 = vperm.xlu0 %1783, %v1377
      %v1785 = vpop.permute.xlu0 %1784
      %1786 = vset.pattern.permute.xlu0 0
      %1787 = vperm.xlu0 %1786, %v1378
      %v1788 = vpop.permute.xlu0 %1787
      %1789 = vset.pattern.permute.xlu0 0
      %1790 = vperm.xlu0 %1789, %v1379
      %v1791 = vpop.permute.xlu0 %1790
      %1792 = vset.pattern.permute.xlu0 0
      %1793 = vperm.xlu0 %1792, %v1380
      %v1794 = vpop.permute.xlu0 %1793
      %1795 = vset.pattern.permute.xlu0 0
      %1796 = vperm.xlu0 %1795, %v1381
      %v1797 = vpop.permute.xlu0 %1796
      %1798 = vset.pattern.permute.xlu0 0
      %1799 = vperm.xlu0 %1798, %v1382
      %v1800 = vpop.permute.xlu0 %1799
      %1801 = vset.pattern.permute.xlu0 0
      %1802 = vperm.xlu0 %1801, %v1383
      %v1803 = vpop.permute.xlu0 %1802
      %1804 = vset.pattern.permute.xlu0 0
      %1805 = vperm.xlu0 %1804, %v1384
      %v1806 = vpop.permute.xlu0 %1805
      %1807 = vset.pattern.permute.xlu0 0
      %1808 = vperm.xlu0 %1807, %v1385
      %v1809 = vpop.permute.xlu0 %1808
      %1810 = vset.pattern.permute.xlu0 0
      %1811 = vperm.xlu0 %1810, %v1386
      %v1812 = vpop.permute.xlu0 %1811
      %1813 = vset.pattern.permute.xlu0 0
      %1814 = vperm.xlu0 %1813, %v1387
      %v1815 = vpop.permute.xlu0 %1814
      %1816 = vset.pattern.permute.xlu0 0
      %1817 = vperm.xlu0 %1816, %v1388
      %v1818 = vpop.permute.xlu0 %1817
      %1819 = vset.pattern.permute.xlu0 0
      %1820 = vperm.xlu0 %1819, %v1389
      %v1821 = vpop.permute.xlu0 %1820
      %1822 = vset.pattern.permute.xlu0 0
      %1823 = vperm.xlu0 %1822, %v1390
      %v1824 = vpop.permute.xlu0 %1823
      %1825 = vset.pattern.permute.xlu0 0
      %1826 = vperm.xlu0 %1825, %v1391
      %v1827 = vpop.permute.xlu0 %1826
      %1828 = vset.pattern.permute.xlu0 0
      %1829 = vperm.xlu0 %1828, %v1392
      %v1830 = vpop.permute.xlu0 %1829
      %1831 = vset.pattern.permute.xlu0 0
      %1832 = vperm.xlu0 %1831, %v1393
      %v1833 = vpop.permute.xlu0 %1832
      %1834 = vset.pattern.permute.xlu0 0
      %1835 = vperm.xlu0 %1834, %v1394
      %v1836 = vpop.permute.xlu0 %1835
      %1837 = vset.pattern.permute.xlu0 0
      %1838 = vperm.xlu0 %1837, %v1395
      %v1839 = vpop.permute.xlu0 %1838
      %1840 = vset.pattern.permute.xlu0 0
      %1841 = vperm.xlu0 %1840, %v1396
      %v1842 = vpop.permute.xlu0 %1841
      %1843 = vset.pattern.permute.xlu0 0
      %1844 = vperm.xlu0 %1843, %v1397
      %v1845 = vpop.permute.xlu0 %1844
      %1846 = vset.pattern.permute.xlu0 0
      %1847 = vperm.xlu0 %1846, %v1398
      %v1848 = vpop.permute.xlu0 %1847
      %1849 = vset.pattern.permute.xlu0 0
      %1850 = vperm.xlu0 %1849, %v1399
      %v1851 = vpop.permute.xlu0 %1850
      %1852 = vset.pattern.permute.xlu0 0
      %1853 = vperm.xlu0 %1852, %v1400
      %v1854 = vpop.permute.xlu0 %1853
      %1855 = vset.pattern.permute.xlu0 0
      %1856 = vperm.xlu0 %1855, %v1401
      %v1857 = vpop.permute.xlu0 %1856
      %1858 = vset.pattern.permute.xlu0 0
      %1859 = vperm.xlu0 %1858, %v1402
      %v1860 = vpop.permute.xlu0 %1859
      %1861 = vset.pattern.permute.xlu0 0
      %1862 = vperm.xlu0 %1861, %v1403
      %v1863 = vpop.permute.xlu0 %1862
      %1864 = vset.pattern.permute.xlu0 0
      %1865 = vperm.xlu0 %1864, %v1404
      %v1866 = vpop.permute.xlu0 %1865
      %1867 = vset.pattern.permute.xlu0 0
      %1868 = vperm.xlu0 %1867, %v1405
      %v1869 = vpop.permute.xlu0 %1868
      %1870 = vset.pattern.permute.xlu0 0
      %1871 = vperm.xlu0 %1870, %v1406
      %v1872 = vpop.permute.xlu0 %1871
      %1873 = vset.pattern.permute.xlu0 0
      %1874 = vperm.xlu0 %1873, %v1407
      %v1875 = vpop.permute.xlu0 %1874
      %1876 = vset.pattern.permute.xlu0 0
      %1877 = vperm.xlu0 %1876, %v1408
      %v1878 = vpop.permute.xlu0 %1877
      %1879 = vset.pattern.permute.xlu0 0
      %1880 = vperm.xlu0 %1879, %v1409
      %v1881 = vpop.permute.xlu0 %1880
      %1882 = vset.pattern.permute.xlu0 0
      %1883 = vperm.xlu0 %1882, %v1410
      %v1884 = vpop.permute.xlu0 %1883
      %1885 = vset.pattern.permute.xlu0 0
      %1886 = vperm.xlu0 %1885, %v1411
      %v1887 = vpop.permute.xlu0 %1886
      %1888 = vset.pattern.permute.xlu0 0
      %1889 = vperm.xlu0 %1888, %v1412
      %v1890 = vpop.permute.xlu0 %1889
      %1891 = vset.pattern.permute.xlu0 0
      %1892 = vperm.xlu0 %1891, %v1413
      %v1893 = vpop.permute.xlu0 %1892
      %1894 = vset.pattern.permute.xlu0 0
      %1895 = vperm.xlu0 %1894, %v1414
      %v1896 = vpop.permute.xlu0 %1895
      %1897 = vset.pattern.permute.xlu0 0
      %1898 = vperm.xlu0 %1897, %v1415
      %v1899 = vpop.permute.xlu0 %1898
      %1900 = vset.pattern.permute.xlu0 0
      %1901 = vperm.xlu0 %1900, %v1416
      %v1902 = vpop.permute.xlu0 %1901
      %1903 = vset.pattern.permute.xlu0 0
      %1904 = vperm.xlu0 %1903, %v1417
      %v1905 = vpop.permute.xlu0 %1904
      %1906 = vset.pattern.permute.xlu0 0
      %1907 = vperm.xlu0 %1906, %v1418
      %v1908 = vpop.permute.xlu0 %1907
      %1909 = vset.pattern.permute.xlu0 0
      %1910 = vperm.xlu0 %1909, %v1419
      %v1911 = vpop.permute.xlu0 %1910
      %1912 = vset.pattern.permute.xlu0 0
      %1913 = vperm.xlu0 %1912, %v1420
      %v1914 = vpop.permute.xlu0 %1913
      %1915 = vset.pattern.permute.xlu0 0
      %1916 = vperm.xlu0 %1915, %v1421
      %v1917 = vpop.permute.xlu0 %1916
      %1918 = vset.pattern.permute.xlu0 0
      %1919 = vperm.xlu0 %1918, %v1422
      %v1920 = vpop.permute.xlu0 %1919
      %1921 = vset.pattern.permute.xlu0 0
      %1922 = vperm.xlu0 %1921, %v1423
      %v1923 = vpop.permute.xlu0 %1922
      %1924 = vset.pattern.permute.xlu0 0
      %1925 = vperm.xlu0 %1924, %v1424
      %v1926 = vpop.permute.xlu0 %1925
      %1927 = vset.pattern.permute.xlu0 0
      %1928 = vperm.xlu0 %1927, %v1425
      %v1929 = vpop.permute.xlu0 %1928
      %1930 = vset.pattern.permute.xlu0 0
      %1931 = vperm.xlu0 %1930, %v1426
      %v1932 = vpop.permute.xlu0 %1931
      %1933 = vset.pattern.permute.xlu0 0
      %1934 = vperm.xlu0 %1933, %v1427
      %v1935 = vpop.permute.xlu0 %1934
      %1936 = vset.pattern.permute.xlu0 0
      %1937 = vperm.xlu0 %1936, %v1428
      %v1938 = vpop.permute.xlu0 %1937
      %1939 = vset.pattern.permute.xlu0 0
      %1940 = vperm.xlu0 %1939, %v1429
      %v1941 = vpop.permute.xlu0 %1940
      %1942 = vset.pattern.permute.xlu0 0
      %1943 = vperm.xlu0 %1942, %v1430
      %v1944 = vpop.permute.xlu0 %1943
      %v1945 = vlaneseq
      %v1946 = vshrl.u32 %v1945, 7
      %v1947 = vsub.s32 %v1432, %v1946
      %v1948 = vrot.slane %v1563, %v1947
      %v1949 = vadd.s32 %v1432, 4294967288
      %v1950 = vlaneseq
      %v1951 = vshrl.u32 %v1950, 7
      %v1952 = vsub.s32 %v1949, %v1951
      %v1953 = vrot.slane %v1566, %v1952
      %vm1954 = vcmask 130112
      %v1955 = vsel %vm1954, %v1953, %v1948
      %v1956 = vadd.s32 %v1432, 4294967280
      %v1957 = vlaneseq
      %v1958 = vshrl.u32 %v1957, 7
      %v1959 = vsub.s32 %v1956, %v1958
      %v1960 = vrot.slane %v1569, %v1959
      %vm1961 = vcmask 195712
      %v1962 = vsel %vm1961, %v1960, %v1955
      %v1963 = vadd.s32 %v1432, 4294967272
      %v1964 = vlaneseq
      %v1965 = vshrl.u32 %v1964, 7
      %v1966 = vsub.s32 %v1963, %v1965
      %v1967 = vrot.slane %v1572, %v1966
      %vm1968 = vcmask 261312
      %v1969 = vsel %vm1968, %v1967, %v1962
      %v1970 = vadd.s32 %v1432, 4294967264
      %v1971 = vlaneseq
      %v1972 = vshrl.u32 %v1971, 7
      %v1973 = vsub.s32 %v1970, %v1972
      %v1974 = vrot.slane %v1575, %v1973
      %vm1975 = vcmask 326912
      %v1976 = vsel %vm1975, %v1974, %v1969
      %v1977 = vadd.s32 %v1432, 4294967256
      %v1978 = vlaneseq
      %v1979 = vshrl.u32 %v1978, 7
      %v1980 = vsub.s32 %v1977, %v1979
      %v1981 = vrot.slane %v1578, %v1980
      %vm1982 = vcmask 392512
      %v1983 = vsel %vm1982, %v1981, %v1976
      %v1984 = vadd.s32 %v1432, 4294967248
      %v1985 = vlaneseq
      %v1986 = vshrl.u32 %v1985, 7
      %v1987 = vsub.s32 %v1984, %v1986
      %v1988 = vrot.slane %v1581, %v1987
      %vm1989 = vcmask 458112
      %v1990 = vsel %vm1989, %v1988, %v1983
      %v1991 = vadd.s32 %v1432, 4294967240
      %v1992 = vlaneseq
      %v1993 = vshrl.u32 %v1992, 7
      %v1994 = vsub.s32 %v1991, %v1993
      %v1995 = vrot.slane %v1584, %v1994
      %vm1996 = vcmask 523712
      %v1997 = vsel %vm1996, %v1995, %v1990
      %v1998 = vlaneseq
      %v1999 = vshrl.u32 %v1998, 7
      %v2000 = vsub.s32 %v1432, %v1999
      %v2001 = vrot.slane %v1587, %v2000
      %v2002 = vlaneseq
      %v2003 = vshrl.u32 %v2002, 7
      %v2004 = vsub.s32 %v1949, %v2003
      %v2005 = vrot.slane %v1590, %v2004
      %v2006 = vsel %vm1954, %v2005, %v2001
      %v2007 = vlaneseq
      %v2008 = vshrl.u32 %v2007, 7
      %v2009 = vsub.s32 %v1956, %v2008
      %v2010 = vrot.slane %v1593, %v2009
      %v2011 = vsel %vm1961, %v2010, %v2006
      %v2012 = vlaneseq
      %v2013 = vshrl.u32 %v2012, 7
      %v2014 = vsub.s32 %v1963, %v2013
      %v2015 = vrot.slane %v1596, %v2014
      %v2016 = vsel %vm1968, %v2015, %v2011
      %v2017 = vlaneseq
      %v2018 = vshrl.u32 %v2017, 7
      %v2019 = vsub.s32 %v1970, %v2018
      %v2020 = vrot.slane %v1599, %v2019
      %v2021 = vsel %vm1975, %v2020, %v2016
      %v2022 = vlaneseq
      %v2023 = vshrl.u32 %v2022, 7
      %v2024 = vsub.s32 %v1977, %v2023
      %v2025 = vrot.slane %v1602, %v2024
      %v2026 = vsel %vm1982, %v2025, %v2021
      %v2027 = vlaneseq
      %v2028 = vshrl.u32 %v2027, 7
      %v2029 = vsub.s32 %v1984, %v2028
      %v2030 = vrot.slane %v1605, %v2029
      %v2031 = vsel %vm1989, %v2030, %v2026
      %v2032 = vlaneseq
      %v2033 = vshrl.u32 %v2032, 7
      %v2034 = vsub.s32 %v1991, %v2033
      %v2035 = vrot.slane %v1608, %v2034
      %v2036 = vsel %vm1996, %v2035, %v2031
      %v2037 = vlaneseq
      %v2038 = vshrl.u32 %v2037, 7
      %v2039 = vsub.s32 %v1432, %v2038
      %v2040 = vrot.slane %v1611, %v2039
      %v2041 = vlaneseq
      %v2042 = vshrl.u32 %v2041, 7
      %v2043 = vsub.s32 %v1949, %v2042
      %v2044 = vrot.slane %v1614, %v2043
      %v2045 = vsel %vm1954, %v2044, %v2040
      %v2046 = vlaneseq
      %v2047 = vshrl.u32 %v2046, 7
      %v2048 = vsub.s32 %v1956, %v2047
      %v2049 = vrot.slane %v1617, %v2048
      %v2050 = vsel %vm1961, %v2049, %v2045
      %v2051 = vlaneseq
      %v2052 = vshrl.u32 %v2051, 7
      %v2053 = vsub.s32 %v1963, %v2052
      %v2054 = vrot.slane %v1620, %v2053
      %v2055 = vsel %vm1968, %v2054, %v2050
      %v2056 = vlaneseq
      %v2057 = vshrl.u32 %v2056, 7
      %v2058 = vsub.s32 %v1970, %v2057
      %v2059 = vrot.slane %v1623, %v2058
      %v2060 = vsel %vm1975, %v2059, %v2055
      %v2061 = vlaneseq
      %v2062 = vshrl.u32 %v2061, 7
      %v2063 = vsub.s32 %v1977, %v2062
      %v2064 = vrot.slane %v1626, %v2063
      %v2065 = vsel %vm1982, %v2064, %v2060
      %v2066 = vlaneseq
      %v2067 = vshrl.u32 %v2066, 7
      %v2068 = vsub.s32 %v1984, %v2067
      %v2069 = vrot.slane %v1629, %v2068
      %v2070 = vsel %vm1989, %v2069, %v2065
      %v2071 = vlaneseq
      %v2072 = vshrl.u32 %v2071, 7
      %v2073 = vsub.s32 %v1991, %v2072
      %v2074 = vrot.slane %v1632, %v2073
      %v2075 = vsel %vm1996, %v2074, %v2070
      %v2076 = vlaneseq
      %v2077 = vshrl.u32 %v2076, 7
      %v2078 = vsub.s32 %v1432, %v2077
      %v2079 = vrot.slane %v1635, %v2078
      %v2080 = vlaneseq
      %v2081 = vshrl.u32 %v2080, 7
      %v2082 = vsub.s32 %v1949, %v2081
      %v2083 = vrot.slane %v1638, %v2082
      %v2084 = vsel %vm1954, %v2083, %v2079
      %v2085 = vlaneseq
      %v2086 = vshrl.u32 %v2085, 7
      %v2087 = vsub.s32 %v1956, %v2086
      %v2088 = vrot.slane %v1641, %v2087
      %v2089 = vsel %vm1961, %v2088, %v2084
      %v2090 = vlaneseq
      %v2091 = vshrl.u32 %v2090, 7
      %v2092 = vsub.s32 %v1963, %v2091
      %v2093 = vrot.slane %v1644, %v2092
      %v2094 = vsel %vm1968, %v2093, %v2089
      %v2095 = vlaneseq
      %v2096 = vshrl.u32 %v2095, 7
      %v2097 = vsub.s32 %v1970, %v2096
      %v2098 = vrot.slane %v1647, %v2097
      %v2099 = vsel %vm1975, %v2098, %v2094
      %v2100 = vlaneseq
      %v2101 = vshrl.u32 %v2100, 7
      %v2102 = vsub.s32 %v1977, %v2101
      %v2103 = vrot.slane %v1650, %v2102
      %v2104 = vsel %vm1982, %v2103, %v2099
      %v2105 = vlaneseq
      %v2106 = vshrl.u32 %v2105, 7
      %v2107 = vsub.s32 %v1984, %v2106
      %v2108 = vrot.slane %v1653, %v2107
      %v2109 = vsel %vm1989, %v2108, %v2104
      %v2110 = vlaneseq
      %v2111 = vshrl.u32 %v2110, 7
      %v2112 = vsub.s32 %v1991, %v2111
      %v2113 = vrot.slane %v1656, %v2112
      %v2114 = vsel %vm1996, %v2113, %v2109
      %v2115 = vlaneseq
      %v2116 = vshrl.u32 %v2115, 7
      %v2117 = vsub.s32 %v1432, %v2116
      %v2118 = vrot.slane %v1659, %v2117
      %v2119 = vlaneseq
      %v2120 = vshrl.u32 %v2119, 7
      %v2121 = vsub.s32 %v1949, %v2120
      %v2122 = vrot.slane %v1662, %v2121
      %v2123 = vsel %vm1954, %v2122, %v2118
      %v2124 = vlaneseq
      %v2125 = vshrl.u32 %v2124, 7
      %v2126 = vsub.s32 %v1956, %v2125
      %v2127 = vrot.slane %v1665, %v2126
      %v2128 = vsel %vm1961, %v2127, %v2123
      %v2129 = vlaneseq
      %v2130 = vshrl.u32 %v2129, 7
      %v2131 = vsub.s32 %v1963, %v2130
      %v2132 = vrot.slane %v1668, %v2131
      %v2133 = vsel %vm1968, %v2132, %v2128
      %v2134 = vlaneseq
      %v2135 = vshrl.u32 %v2134, 7
      %v2136 = vsub.s32 %v1970, %v2135
      %v2137 = vrot.slane %v1671, %v2136
      %v2138 = vsel %vm1975, %v2137, %v2133
      %v2139 = vlaneseq
      %v2140 = vshrl.u32 %v2139, 7
      %v2141 = vsub.s32 %v1977, %v2140
      %v2142 = vrot.slane %v1674, %v2141
      %v2143 = vsel %vm1982, %v2142, %v2138
      %v2144 = vlaneseq
      %v2145 = vshrl.u32 %v2144, 7
      %v2146 = vsub.s32 %v1984, %v2145
      %v2147 = vrot.slane %v1677, %v2146
      %v2148 = vsel %vm1989, %v2147, %v2143
      %v2149 = vlaneseq
      %v2150 = vshrl.u32 %v2149, 7
      %v2151 = vsub.s32 %v1991, %v2150
      %v2152 = vrot.slane %v1680, %v2151
      %v2153 = vsel %vm1996, %v2152, %v2148
      %v2154 = vlaneseq
      %v2155 = vshrl.u32 %v2154, 7
      %v2156 = vsub.s32 %v1432, %v2155
      %v2157 = vrot.slane %v1683, %v2156
      %v2158 = vlaneseq
      %v2159 = vshrl.u32 %v2158, 7
      %v2160 = vsub.s32 %v1949, %v2159
      %v2161 = vrot.slane %v1686, %v2160
      %v2162 = vsel %vm1954, %v2161, %v2157
      %v2163 = vlaneseq
      %v2164 = vshrl.u32 %v2163, 7
      %v2165 = vsub.s32 %v1956, %v2164
      %v2166 = vrot.slane %v1689, %v2165
      %v2167 = vsel %vm1961, %v2166, %v2162
      %v2168 = vlaneseq
      %v2169 = vshrl.u32 %v2168, 7
      %v2170 = vsub.s32 %v1963, %v2169
      %v2171 = vrot.slane %v1692, %v2170
      %v2172 = vsel %vm1968, %v2171, %v2167
      %v2173 = vlaneseq
      %v2174 = vshrl.u32 %v2173, 7
      %v2175 = vsub.s32 %v1970, %v2174
      %v2176 = vrot.slane %v1695, %v2175
      %v2177 = vsel %vm1975, %v2176, %v2172
      %v2178 = vlaneseq
      %v2179 = vshrl.u32 %v2178, 7
      %v2180 = vsub.s32 %v1977, %v2179
      %v2181 = vrot.slane %v1698, %v2180
      %v2182 = vsel %vm1982, %v2181, %v2177
      %v2183 = vlaneseq
      %v2184 = vshrl.u32 %v2183, 7
      %v2185 = vsub.s32 %v1984, %v2184
      %v2186 = vrot.slane %v1701, %v2185
      %v2187 = vsel %vm1989, %v2186, %v2182
      %v2188 = vlaneseq
      %v2189 = vshrl.u32 %v2188, 7
      %v2190 = vsub.s32 %v1991, %v2189
      %v2191 = vrot.slane %v1704, %v2190
      %v2192 = vsel %vm1996, %v2191, %v2187
      %v2193 = vlaneseq
      %v2194 = vshrl.u32 %v2193, 7
      %v2195 = vsub.s32 %v1432, %v2194
      %v2196 = vrot.slane %v1707, %v2195
      %v2197 = vlaneseq
      %v2198 = vshrl.u32 %v2197, 7
      %v2199 = vsub.s32 %v1949, %v2198
      %v2200 = vrot.slane %v1710, %v2199
      %v2201 = vsel %vm1954, %v2200, %v2196
      %v2202 = vlaneseq
      %v2203 = vshrl.u32 %v2202, 7
      %v2204 = vsub.s32 %v1956, %v2203
      %v2205 = vrot.slane %v1713, %v2204
      %v2206 = vsel %vm1961, %v2205, %v2201
      %v2207 = vlaneseq
      %v2208 = vshrl.u32 %v2207, 7
      %v2209 = vsub.s32 %v1963, %v2208
      %v2210 = vrot.slane %v1716, %v2209
      %v2211 = vsel %vm1968, %v2210, %v2206
      %v2212 = vlaneseq
      %v2213 = vshrl.u32 %v2212, 7
      %v2214 = vsub.s32 %v1970, %v2213
      %v2215 = vrot.slane %v1719, %v2214
      %v2216 = vsel %vm1975, %v2215, %v2211
      %v2217 = vlaneseq
      %v2218 = vshrl.u32 %v2217, 7
      %v2219 = vsub.s32 %v1977, %v2218
      %v2220 = vrot.slane %v1722, %v2219
      %v2221 = vsel %vm1982, %v2220, %v2216
      %v2222 = vlaneseq
      %v2223 = vshrl.u32 %v2222, 7
      %v2224 = vsub.s32 %v1984, %v2223
      %v2225 = vrot.slane %v1725, %v2224
      %v2226 = vsel %vm1989, %v2225, %v2221
      %v2227 = vlaneseq
      %v2228 = vshrl.u32 %v2227, 7
      %v2229 = vsub.s32 %v1991, %v2228
      %v2230 = vrot.slane %v1728, %v2229
      %v2231 = vsel %vm1996, %v2230, %v2226
      %v2232 = vlaneseq
      %v2233 = vshrl.u32 %v2232, 7
      %v2234 = vsub.s32 %v1432, %v2233
      %v2235 = vrot.slane %v1731, %v2234
      %v2236 = vlaneseq
      %v2237 = vshrl.u32 %v2236, 7
      %v2238 = vsub.s32 %v1949, %v2237
      %v2239 = vrot.slane %v1734, %v2238
      %v2240 = vsel %vm1954, %v2239, %v2235
      %v2241 = vlaneseq
      %v2242 = vshrl.u32 %v2241, 7
      %v2243 = vsub.s32 %v1956, %v2242
      %v2244 = vrot.slane %v1737, %v2243
      %v2245 = vsel %vm1961, %v2244, %v2240
      %v2246 = vlaneseq
      %v2247 = vshrl.u32 %v2246, 7
      %v2248 = vsub.s32 %v1963, %v2247
      %v2249 = vrot.slane %v1740, %v2248
      %v2250 = vsel %vm1968, %v2249, %v2245
      %v2251 = vlaneseq
      %v2252 = vshrl.u32 %v2251, 7
      %v2253 = vsub.s32 %v1970, %v2252
      %v2254 = vrot.slane %v1743, %v2253
      %v2255 = vsel %vm1975, %v2254, %v2250
      %v2256 = vlaneseq
      %v2257 = vshrl.u32 %v2256, 7
      %v2258 = vsub.s32 %v1977, %v2257
      %v2259 = vrot.slane %v1746, %v2258
      %v2260 = vsel %vm1982, %v2259, %v2255
      %v2261 = vlaneseq
      %v2262 = vshrl.u32 %v2261, 7
      %v2263 = vsub.s32 %v1984, %v2262
      %v2264 = vrot.slane %v1749, %v2263
      %v2265 = vsel %vm1989, %v2264, %v2260
      %v2266 = vlaneseq
      %v2267 = vshrl.u32 %v2266, 7
      %v2268 = vsub.s32 %v1991, %v2267
      %v2269 = vrot.slane %v1752, %v2268
      %v2270 = vsel %vm1996, %v2269, %v2265
      %v2271 = vlaneseq
      %v2272 = vshrl.u32 %v2271, 7
      %v2273 = vsub.s32 %v1432, %v2272
      %v2274 = vrot.slane %v1755, %v2273
      %v2275 = vlaneseq
      %v2276 = vshrl.u32 %v2275, 7
      %v2277 = vsub.s32 %v1949, %v2276
      %v2278 = vrot.slane %v1758, %v2277
      %v2279 = vsel %vm1954, %v2278, %v2274
      %v2280 = vlaneseq
      %v2281 = vshrl.u32 %v2280, 7
      %v2282 = vsub.s32 %v1956, %v2281
      %v2283 = vrot.slane %v1761, %v2282
      %v2284 = vsel %vm1961, %v2283, %v2279
      %v2285 = vlaneseq
      %v2286 = vshrl.u32 %v2285, 7
      %v2287 = vsub.s32 %v1963, %v2286
      %v2288 = vrot.slane %v1764, %v2287
      %v2289 = vsel %vm1968, %v2288, %v2284
      %v2290 = vlaneseq
      %v2291 = vshrl.u32 %v2290, 7
      %v2292 = vsub.s32 %v1970, %v2291
      %v2293 = vrot.slane %v1767, %v2292
      %v2294 = vsel %vm1975, %v2293, %v2289
      %v2295 = vlaneseq
      %v2296 = vshrl.u32 %v2295, 7
      %v2297 = vsub.s32 %v1977, %v2296
      %v2298 = vrot.slane %v1770, %v2297
      %v2299 = vsel %vm1982, %v2298, %v2294
      %v2300 = vlaneseq
      %v2301 = vshrl.u32 %v2300, 7
      %v2302 = vsub.s32 %v1984, %v2301
      %v2303 = vrot.slane %v1773, %v2302
      %v2304 = vsel %vm1989, %v2303, %v2299
      %v2305 = vlaneseq
      %v2306 = vshrl.u32 %v2305, 7
      %v2307 = vsub.s32 %v1991, %v2306
      %v2308 = vrot.slane %v1776, %v2307
      %v2309 = vsel %vm1996, %v2308, %v2304
      %v2310 = vlaneseq
      %v2311 = vshrl.u32 %v2310, 7
      %v2312 = vsub.s32 %v1432, %v2311
      %v2313 = vrot.slane %v1779, %v2312
      %v2314 = vlaneseq
      %v2315 = vshrl.u32 %v2314, 7
      %v2316 = vsub.s32 %v1949, %v2315
      %v2317 = vrot.slane %v1782, %v2316
      %v2318 = vsel %vm1954, %v2317, %v2313
      %v2319 = vlaneseq
      %v2320 = vshrl.u32 %v2319, 7
      %v2321 = vsub.s32 %v1956, %v2320
      %v2322 = vrot.slane %v1785, %v2321
      %v2323 = vsel %vm1961, %v2322, %v2318
      %v2324 = vlaneseq
      %v2325 = vshrl.u32 %v2324, 7
      %v2326 = vsub.s32 %v1963, %v2325
      %v2327 = vrot.slane %v1788, %v2326
      %v2328 = vsel %vm1968, %v2327, %v2323
      %v2329 = vlaneseq
      %v2330 = vshrl.u32 %v2329, 7
      %v2331 = vsub.s32 %v1970, %v2330
      %v2332 = vrot.slane %v1791, %v2331
      %v2333 = vsel %vm1975, %v2332, %v2328
      %v2334 = vlaneseq
      %v2335 = vshrl.u32 %v2334, 7
      %v2336 = vsub.s32 %v1977, %v2335
      %v2337 = vrot.slane %v1794, %v2336
      %v2338 = vsel %vm1982, %v2337, %v2333
      %v2339 = vlaneseq
      %v2340 = vshrl.u32 %v2339, 7
      %v2341 = vsub.s32 %v1984, %v2340
      %v2342 = vrot.slane %v1797, %v2341
      %v2343 = vsel %vm1989, %v2342, %v2338
      %v2344 = vlaneseq
      %v2345 = vshrl.u32 %v2344, 7
      %v2346 = vsub.s32 %v1991, %v2345
      %v2347 = vrot.slane %v1800, %v2346
      %v2348 = vsel %vm1996, %v2347, %v2343
      %v2349 = vlaneseq
      %v2350 = vshrl.u32 %v2349, 7
      %v2351 = vsub.s32 %v1432, %v2350
      %v2352 = vrot.slane %v1803, %v2351
      %v2353 = vlaneseq
      %v2354 = vshrl.u32 %v2353, 7
      %v2355 = vsub.s32 %v1949, %v2354
      %v2356 = vrot.slane %v1806, %v2355
      %v2357 = vsel %vm1954, %v2356, %v2352
      %v2358 = vlaneseq
      %v2359 = vshrl.u32 %v2358, 7
      %v2360 = vsub.s32 %v1956, %v2359
      %v2361 = vrot.slane %v1809, %v2360
      %v2362 = vsel %vm1961, %v2361, %v2357
      %v2363 = vlaneseq
      %v2364 = vshrl.u32 %v2363, 7
      %v2365 = vsub.s32 %v1963, %v2364
      %v2366 = vrot.slane %v1812, %v2365
      %v2367 = vsel %vm1968, %v2366, %v2362
      %v2368 = vlaneseq
      %v2369 = vshrl.u32 %v2368, 7
      %v2370 = vsub.s32 %v1970, %v2369
      %v2371 = vrot.slane %v1815, %v2370
      %v2372 = vsel %vm1975, %v2371, %v2367
      %v2373 = vlaneseq
      %v2374 = vshrl.u32 %v2373, 7
      %v2375 = vsub.s32 %v1977, %v2374
      %v2376 = vrot.slane %v1818, %v2375
      %v2377 = vsel %vm1982, %v2376, %v2372
      %v2378 = vlaneseq
      %v2379 = vshrl.u32 %v2378, 7
      %v2380 = vsub.s32 %v1984, %v2379
      %v2381 = vrot.slane %v1821, %v2380
      %v2382 = vsel %vm1989, %v2381, %v2377
      %v2383 = vlaneseq
      %v2384 = vshrl.u32 %v2383, 7
      %v2385 = vsub.s32 %v1991, %v2384
      %v2386 = vrot.slane %v1824, %v2385
      %v2387 = vsel %vm1996, %v2386, %v2382
      %v2388 = vlaneseq
      %v2389 = vshrl.u32 %v2388, 7
      %v2390 = vsub.s32 %v1432, %v2389
      %v2391 = vrot.slane %v1827, %v2390
      %v2392 = vlaneseq
      %v2393 = vshrl.u32 %v2392, 7
      %v2394 = vsub.s32 %v1949, %v2393
      %v2395 = vrot.slane %v1830, %v2394
      %v2396 = vsel %vm1954, %v2395, %v2391
      %v2397 = vlaneseq
      %v2398 = vshrl.u32 %v2397, 7
      %v2399 = vsub.s32 %v1956, %v2398
      %v2400 = vrot.slane %v1833, %v2399
      %v2401 = vsel %vm1961, %v2400, %v2396
      %v2402 = vlaneseq
      %v2403 = vshrl.u32 %v2402, 7
      %v2404 = vsub.s32 %v1963, %v2403
      %v2405 = vrot.slane %v1836, %v2404
      %v2406 = vsel %vm1968, %v2405, %v2401
      %v2407 = vlaneseq
      %v2408 = vshrl.u32 %v2407, 7
      %v2409 = vsub.s32 %v1970, %v2408
      %v2410 = vrot.slane %v1839, %v2409
      %v2411 = vsel %vm1975, %v2410, %v2406
      %v2412 = vlaneseq
      %v2413 = vshrl.u32 %v2412, 7
      %v2414 = vsub.s32 %v1977, %v2413
      %v2415 = vrot.slane %v1842, %v2414
      %v2416 = vsel %vm1982, %v2415, %v2411
      %v2417 = vlaneseq
      %v2418 = vshrl.u32 %v2417, 7
      %v2419 = vsub.s32 %v1984, %v2418
      %v2420 = vrot.slane %v1845, %v2419
      %v2421 = vsel %vm1989, %v2420, %v2416
      %v2422 = vlaneseq
      %v2423 = vshrl.u32 %v2422, 7
      %v2424 = vsub.s32 %v1991, %v2423
      %v2425 = vrot.slane %v1848, %v2424
      %v2426 = vsel %vm1996, %v2425, %v2421
      %v2427 = vlaneseq
      %v2428 = vshrl.u32 %v2427, 7
      %v2429 = vsub.s32 %v1432, %v2428
      %v2430 = vrot.slane %v1851, %v2429
      %v2431 = vlaneseq
      %v2432 = vshrl.u32 %v2431, 7
      %v2433 = vsub.s32 %v1949, %v2432
      %v2434 = vrot.slane %v1854, %v2433
      %v2435 = vsel %vm1954, %v2434, %v2430
      %v2436 = vlaneseq
      %v2437 = vshrl.u32 %v2436, 7
      %v2438 = vsub.s32 %v1956, %v2437
      %v2439 = vrot.slane %v1857, %v2438
      %v2440 = vsel %vm1961, %v2439, %v2435
      %v2441 = vlaneseq
      %v2442 = vshrl.u32 %v2441, 7
      %v2443 = vsub.s32 %v1963, %v2442
      %v2444 = vrot.slane %v1860, %v2443
      %v2445 = vsel %vm1968, %v2444, %v2440
      %v2446 = vlaneseq
      %v2447 = vshrl.u32 %v2446, 7
      %v2448 = vsub.s32 %v1970, %v2447
      %v2449 = vrot.slane %v1863, %v2448
      %v2450 = vsel %vm1975, %v2449, %v2445
      %v2451 = vlaneseq
      %v2452 = vshrl.u32 %v2451, 7
      %v2453 = vsub.s32 %v1977, %v2452
      %v2454 = vrot.slane %v1866, %v2453
      %v2455 = vsel %vm1982, %v2454, %v2450
      %v2456 = vlaneseq
      %v2457 = vshrl.u32 %v2456, 7
      %v2458 = vsub.s32 %v1984, %v2457
      %v2459 = vrot.slane %v1869, %v2458
      %v2460 = vsel %vm1989, %v2459, %v2455
      %v2461 = vlaneseq
      %v2462 = vshrl.u32 %v2461, 7
      %v2463 = vsub.s32 %v1991, %v2462
      %v2464 = vrot.slane %v1872, %v2463
      %v2465 = vsel %vm1996, %v2464, %v2460
      %v2466 = vlaneseq
      %v2467 = vshrl.u32 %v2466, 7
      %v2468 = vsub.s32 %v1432, %v2467
      %v2469 = vrot.slane %v1875, %v2468
      %v2470 = vlaneseq
      %v2471 = vshrl.u32 %v2470, 7
      %v2472 = vsub.s32 %v1949, %v2471
      %v2473 = vrot.slane %v1878, %v2472
      %v2474 = vsel %vm1954, %v2473, %v2469
      %v2475 = vlaneseq
      %v2476 = vshrl.u32 %v2475, 7
      %v2477 = vsub.s32 %v1956, %v2476
      %v2478 = vrot.slane %v1881, %v2477
      %v2479 = vsel %vm1961, %v2478, %v2474
      %v2480 = vlaneseq
      %v2481 = vshrl.u32 %v2480, 7
      %v2482 = vsub.s32 %v1963, %v2481
      %v2483 = vrot.slane %v1884, %v2482
      %v2484 = vsel %vm1968, %v2483, %v2479
      %v2485 = vlaneseq
      %v2486 = vshrl.u32 %v2485, 7
      %v2487 = vsub.s32 %v1970, %v2486
      %v2488 = vrot.slane %v1887, %v2487
      %v2489 = vsel %vm1975, %v2488, %v2484
      %v2490 = vlaneseq
      %v2491 = vshrl.u32 %v2490, 7
      %v2492 = vsub.s32 %v1977, %v2491
      %v2493 = vrot.slane %v1890, %v2492
      %v2494 = vsel %vm1982, %v2493, %v2489
      %v2495 = vlaneseq
      %v2496 = vshrl.u32 %v2495, 7
      %v2497 = vsub.s32 %v1984, %v2496
      %v2498 = vrot.slane %v1893, %v2497
      %v2499 = vsel %vm1989, %v2498, %v2494
      %v2500 = vlaneseq
      %v2501 = vshrl.u32 %v2500, 7
      %v2502 = vsub.s32 %v1991, %v2501
      %v2503 = vrot.slane %v1896, %v2502
      %v2504 = vsel %vm1996, %v2503, %v2499
      %v2505 = vlaneseq
      %v2506 = vshrl.u32 %v2505, 7
      %v2507 = vsub.s32 %v1432, %v2506
      %v2508 = vrot.slane %v1899, %v2507
      %v2509 = vlaneseq
      %v2510 = vshrl.u32 %v2509, 7
      %v2511 = vsub.s32 %v1949, %v2510
      %v2512 = vrot.slane %v1902, %v2511
      %v2513 = vsel %vm1954, %v2512, %v2508
      %v2514 = vlaneseq
      %v2515 = vshrl.u32 %v2514, 7
      %v2516 = vsub.s32 %v1956, %v2515
      %v2517 = vrot.slane %v1905, %v2516
      %v2518 = vsel %vm1961, %v2517, %v2513
      %v2519 = vlaneseq
      %v2520 = vshrl.u32 %v2519, 7
      %v2521 = vsub.s32 %v1963, %v2520
      %v2522 = vrot.slane %v1908, %v2521
      %v2523 = vsel %vm1968, %v2522, %v2518
      %v2524 = vlaneseq
      %v2525 = vshrl.u32 %v2524, 7
      %v2526 = vsub.s32 %v1970, %v2525
      %v2527 = vrot.slane %v1911, %v2526
      %v2528 = vsel %vm1975, %v2527, %v2523
      %v2529 = vlaneseq
      %v2530 = vshrl.u32 %v2529, 7
      %v2531 = vsub.s32 %v1977, %v2530
      %v2532 = vrot.slane %v1914, %v2531
      %v2533 = vsel %vm1982, %v2532, %v2528
      %v2534 = vlaneseq
      %v2535 = vshrl.u32 %v2534, 7
      %v2536 = vsub.s32 %v1984, %v2535
      %v2537 = vrot.slane %v1917, %v2536
      %v2538 = vsel %vm1989, %v2537, %v2533
      %v2539 = vlaneseq
      %v2540 = vshrl.u32 %v2539, 7
      %v2541 = vsub.s32 %v1991, %v2540
      %v2542 = vrot.slane %v1920, %v2541
      %v2543 = vsel %vm1996, %v2542, %v2538
      %v2544 = vlaneseq
      %v2545 = vshrl.u32 %v2544, 7
      %v2546 = vsub.s32 %v1432, %v2545
      %v2547 = vrot.slane %v1923, %v2546
      %v2548 = vlaneseq
      %v2549 = vshrl.u32 %v2548, 7
      %v2550 = vsub.s32 %v1949, %v2549
      %v2551 = vrot.slane %v1926, %v2550
      %v2552 = vsel %vm1954, %v2551, %v2547
      %v2553 = vlaneseq
      %v2554 = vshrl.u32 %v2553, 7
      %v2555 = vsub.s32 %v1956, %v2554
      %v2556 = vrot.slane %v1929, %v2555
      %v2557 = vsel %vm1961, %v2556, %v2552
      %v2558 = vlaneseq
      %v2559 = vshrl.u32 %v2558, 7
      %v2560 = vsub.s32 %v1963, %v2559
      %v2561 = vrot.slane %v1932, %v2560
      %v2562 = vsel %vm1968, %v2561, %v2557
      %v2563 = vlaneseq
      %v2564 = vshrl.u32 %v2563, 7
      %v2565 = vsub.s32 %v1970, %v2564
      %v2566 = vrot.slane %v1935, %v2565
      %v2567 = vsel %vm1975, %v2566, %v2562
      %v2568 = vlaneseq
      %v2569 = vshrl.u32 %v2568, 7
      %v2570 = vsub.s32 %v1977, %v2569
      %v2571 = vrot.slane %v1938, %v2570
      %v2572 = vsel %vm1982, %v2571, %v2567
      %v2573 = vlaneseq
      %v2574 = vshrl.u32 %v2573, 7
      %v2575 = vsub.s32 %v1984, %v2574
      %v2576 = vrot.slane %v1941, %v2575
      %v2577 = vsel %vm1989, %v2576, %v2572
      %v2578 = vlaneseq
      %v2579 = vshrl.u32 %v2578, 7
      %v2580 = vsub.s32 %v1991, %v2579
      %v2581 = vrot.slane %v1944, %v2580
      %v2582 = vsel %vm1996, %v2581, %v2577
      %vm2583 = vcmask 1041409
      %v2584 = vsel %vm2583, %v2036, %v1997
      %vm2585 = vcmask 1042434
      %v2586 = vsel %vm2585, %v2075, %v2584
      %vm2587 = vcmask 1043459
      %v2588 = vsel %vm2587, %v2114, %v2586
      %vm2589 = vcmask 1044484
      %v2590 = vsel %vm2589, %v2153, %v2588
      %vm2591 = vcmask 1045509
      %v2592 = vsel %vm2591, %v2192, %v2590
      %vm2593 = vcmask 1046534
      %v2594 = vsel %vm2593, %v2231, %v2592
      %vm2595 = vcmask 1047559
      %v2596 = vsel %vm2595, %v2270, %v2594
      %v2597 = vsel %vm2583, %v2348, %v2309
      %v2598 = vsel %vm2585, %v2387, %v2597
      %v2599 = vsel %vm2587, %v2426, %v2598
      %v2600 = vsel %vm2589, %v2465, %v2599
      %v2601 = vsel %vm2591, %v2504, %v2600
      %v2602 = vsel %vm2593, %v2543, %v2601
      %v2603 = vsel %vm2595, %v2582, %v2602
      %v2606 = vsel %vm371, %v2596, inf
      %2607 = vmin.xlane.f32.xlu0 %v2606
      %v2608 = vpop.xlane.xlu0 %2607
      %v2609 = vsel %vm371, %v2603, inf
      %2610 = vmin.xlane.f32.xlu0 %v2609
      %v2611 = vpop.xlane.xlu0 %2610
      %v2614 = vlaneseq
      %v2615 = vshrl.u32 %v2614, 7
      %v2616 = vsub.s32 0, %v2615
      %v2617 = vrot.slane %v2608, %v2616
      %v2618 = vlaneseq
      %v2619 = vshrl.u32 %v2618, 7
      %v2620 = vsub.s32 1, %v2619
      %v2621 = vrot.slane %v2608, %v2620
      %v2622 = vlaneseq
      %v2623 = vshrl.u32 %v2622, 7
      %v2624 = vsub.s32 2, %v2623
      %v2625 = vrot.slane %v2608, %v2624
      %v2626 = vlaneseq
      %v2627 = vshrl.u32 %v2626, 7
      %v2628 = vsub.s32 3, %v2627
      %v2629 = vrot.slane %v2608, %v2628
      %v2630 = vlaneseq
      %v2631 = vshrl.u32 %v2630, 7
      %v2632 = vsub.s32 4, %v2631
      %v2633 = vrot.slane %v2608, %v2632
      %v2634 = vlaneseq
      %v2635 = vshrl.u32 %v2634, 7
      %v2636 = vsub.s32 5, %v2635
      %v2637 = vrot.slane %v2608, %v2636
      %v2638 = vlaneseq
      %v2639 = vshrl.u32 %v2638, 7
      %v2640 = vsub.s32 6, %v2639
      %v2641 = vrot.slane %v2608, %v2640
      %v2642 = vlaneseq
      %v2643 = vshrl.u32 %v2642, 7
      %v2644 = vsub.s32 7, %v2643
      %v2645 = vrot.slane %v2608, %v2644
      %v2646 = vlaneseq
      %v2647 = vshrl.u32 %v2646, 7
      %v2648 = vsub.s32 0, %v2647
      %v2649 = vrot.slane %v2611, %v2648
      %v2650 = vlaneseq
      %v2651 = vshrl.u32 %v2650, 7
      %v2652 = vsub.s32 1, %v2651
      %v2653 = vrot.slane %v2611, %v2652
      %v2654 = vlaneseq
      %v2655 = vshrl.u32 %v2654, 7
      %v2656 = vsub.s32 2, %v2655
      %v2657 = vrot.slane %v2611, %v2656
      %v2658 = vlaneseq
      %v2659 = vshrl.u32 %v2658, 7
      %v2660 = vsub.s32 3, %v2659
      %v2661 = vrot.slane %v2611, %v2660
      %v2662 = vlaneseq
      %v2663 = vshrl.u32 %v2662, 7
      %v2664 = vsub.s32 4, %v2663
      %v2665 = vrot.slane %v2611, %v2664
      %v2666 = vlaneseq
      %v2667 = vshrl.u32 %v2666, 7
      %v2668 = vsub.s32 5, %v2667
      %v2669 = vrot.slane %v2611, %v2668
      %v2670 = vlaneseq
      %v2671 = vshrl.u32 %v2670, 7
      %v2672 = vsub.s32 6, %v2671
      %v2673 = vrot.slane %v2611, %v2672
      %v2674 = vlaneseq
      %v2675 = vshrl.u32 %v2674, 7
      %v2676 = vsub.s32 7, %v2675
      %v2677 = vrot.slane %v2611, %v2676
      %vm2694 = vcmp.le.f32.partialorder %v1303, %v2617
      %vm2695 = vcmp.le.f32.partialorder %v1304, %v2617
      %vm2696 = vcmp.le.f32.partialorder %v1305, %v2617
      %vm2697 = vcmp.le.f32.partialorder %v1306, %v2617
      %vm2698 = vcmp.le.f32.partialorder %v1307, %v2617
      %vm2699 = vcmp.le.f32.partialorder %v1308, %v2617
      %vm2700 = vcmp.le.f32.partialorder %v1309, %v2617
      %vm2701 = vcmp.le.f32.partialorder %v1310, %v2617
      %vm2702 = vcmp.le.f32.partialorder %v1311, %v2621
      %vm2703 = vcmp.le.f32.partialorder %v1312, %v2621
      %vm2704 = vcmp.le.f32.partialorder %v1313, %v2621
      %vm2705 = vcmp.le.f32.partialorder %v1314, %v2621
      %vm2706 = vcmp.le.f32.partialorder %v1315, %v2621
      %vm2707 = vcmp.le.f32.partialorder %v1316, %v2621
      %vm2708 = vcmp.le.f32.partialorder %v1317, %v2621
      %vm2709 = vcmp.le.f32.partialorder %v1318, %v2621
      %vm2710 = vcmp.le.f32.partialorder %v1319, %v2625
      %vm2711 = vcmp.le.f32.partialorder %v1320, %v2625
      %vm2712 = vcmp.le.f32.partialorder %v1321, %v2625
      %vm2713 = vcmp.le.f32.partialorder %v1322, %v2625
      %vm2714 = vcmp.le.f32.partialorder %v1323, %v2625
      %vm2715 = vcmp.le.f32.partialorder %v1324, %v2625
      %vm2716 = vcmp.le.f32.partialorder %v1325, %v2625
      %vm2717 = vcmp.le.f32.partialorder %v1326, %v2625
      %vm2718 = vcmp.le.f32.partialorder %v1327, %v2629
      %vm2719 = vcmp.le.f32.partialorder %v1328, %v2629
      %vm2720 = vcmp.le.f32.partialorder %v1329, %v2629
      %vm2721 = vcmp.le.f32.partialorder %v1330, %v2629
      %vm2722 = vcmp.le.f32.partialorder %v1331, %v2629
      %vm2723 = vcmp.le.f32.partialorder %v1332, %v2629
      %vm2724 = vcmp.le.f32.partialorder %v1333, %v2629
      %vm2725 = vcmp.le.f32.partialorder %v1334, %v2629
      %vm2726 = vcmp.le.f32.partialorder %v1335, %v2633
      %vm2727 = vcmp.le.f32.partialorder %v1336, %v2633
      %vm2728 = vcmp.le.f32.partialorder %v1337, %v2633
      %vm2729 = vcmp.le.f32.partialorder %v1338, %v2633
      %vm2730 = vcmp.le.f32.partialorder %v1339, %v2633
      %vm2731 = vcmp.le.f32.partialorder %v1340, %v2633
      %vm2732 = vcmp.le.f32.partialorder %v1341, %v2633
      %vm2733 = vcmp.le.f32.partialorder %v1342, %v2633
      %vm2734 = vcmp.le.f32.partialorder %v1343, %v2637
      %vm2735 = vcmp.le.f32.partialorder %v1344, %v2637
      %vm2736 = vcmp.le.f32.partialorder %v1345, %v2637
      %vm2737 = vcmp.le.f32.partialorder %v1346, %v2637
      %vm2738 = vcmp.le.f32.partialorder %v1347, %v2637
      %vm2739 = vcmp.le.f32.partialorder %v1348, %v2637
      %vm2740 = vcmp.le.f32.partialorder %v1349, %v2637
      %vm2741 = vcmp.le.f32.partialorder %v1350, %v2637
      %vm2742 = vcmp.le.f32.partialorder %v1351, %v2641
      %vm2743 = vcmp.le.f32.partialorder %v1352, %v2641
      %vm2744 = vcmp.le.f32.partialorder %v1353, %v2641
      %vm2745 = vcmp.le.f32.partialorder %v1354, %v2641
      %vm2746 = vcmp.le.f32.partialorder %v1355, %v2641
      %vm2747 = vcmp.le.f32.partialorder %v1356, %v2641
      %vm2748 = vcmp.le.f32.partialorder %v1357, %v2641
      %vm2749 = vcmp.le.f32.partialorder %v1358, %v2641
      %vm2750 = vcmp.le.f32.partialorder %v1359, %v2645
      %vm2751 = vcmp.le.f32.partialorder %v1360, %v2645
      %vm2752 = vcmp.le.f32.partialorder %v1361, %v2645
      %vm2753 = vcmp.le.f32.partialorder %v1362, %v2645
      %vm2754 = vcmp.le.f32.partialorder %v1363, %v2645
      %vm2755 = vcmp.le.f32.partialorder %v1364, %v2645
      %vm2756 = vcmp.le.f32.partialorder %v1365, %v2645
      %vm2757 = vcmp.le.f32.partialorder %v1366, %v2645
      %vm2758 = vcmp.le.f32.partialorder %v1367, %v2649
      %vm2759 = vcmp.le.f32.partialorder %v1368, %v2649
      %vm2760 = vcmp.le.f32.partialorder %v1369, %v2649
      %vm2761 = vcmp.le.f32.partialorder %v1370, %v2649
      %vm2762 = vcmp.le.f32.partialorder %v1371, %v2649
      %vm2763 = vcmp.le.f32.partialorder %v1372, %v2649
      %vm2764 = vcmp.le.f32.partialorder %v1373, %v2649
      %vm2765 = vcmp.le.f32.partialorder %v1374, %v2649
      %vm2766 = vcmp.le.f32.partialorder %v1375, %v2653
      %vm2767 = vcmp.le.f32.partialorder %v1376, %v2653
      %vm2768 = vcmp.le.f32.partialorder %v1377, %v2653
      %vm2769 = vcmp.le.f32.partialorder %v1378, %v2653
      %vm2770 = vcmp.le.f32.partialorder %v1379, %v2653
      %vm2771 = vcmp.le.f32.partialorder %v1380, %v2653
      %vm2772 = vcmp.le.f32.partialorder %v1381, %v2653
      %vm2773 = vcmp.le.f32.partialorder %v1382, %v2653
      %vm2774 = vcmp.le.f32.partialorder %v1383, %v2657
      %vm2775 = vcmp.le.f32.partialorder %v1384, %v2657
      %vm2776 = vcmp.le.f32.partialorder %v1385, %v2657
      %vm2777 = vcmp.le.f32.partialorder %v1386, %v2657
      %vm2778 = vcmp.le.f32.partialorder %v1387, %v2657
      %vm2779 = vcmp.le.f32.partialorder %v1388, %v2657
      %vm2780 = vcmp.le.f32.partialorder %v1389, %v2657
      %vm2781 = vcmp.le.f32.partialorder %v1390, %v2657
      %vm2782 = vcmp.le.f32.partialorder %v1391, %v2661
      %vm2783 = vcmp.le.f32.partialorder %v1392, %v2661
      %vm2784 = vcmp.le.f32.partialorder %v1393, %v2661
      %vm2785 = vcmp.le.f32.partialorder %v1394, %v2661
      %vm2786 = vcmp.le.f32.partialorder %v1395, %v2661
      %vm2787 = vcmp.le.f32.partialorder %v1396, %v2661
      %vm2788 = vcmp.le.f32.partialorder %v1397, %v2661
      %vm2789 = vcmp.le.f32.partialorder %v1398, %v2661
      %vm2790 = vcmp.le.f32.partialorder %v1399, %v2665
      %vm2791 = vcmp.le.f32.partialorder %v1400, %v2665
      %vm2792 = vcmp.le.f32.partialorder %v1401, %v2665
      %vm2793 = vcmp.le.f32.partialorder %v1402, %v2665
      %vm2794 = vcmp.le.f32.partialorder %v1403, %v2665
      %vm2795 = vcmp.le.f32.partialorder %v1404, %v2665
      %vm2796 = vcmp.le.f32.partialorder %v1405, %v2665
      %vm2797 = vcmp.le.f32.partialorder %v1406, %v2665
      %vm2798 = vcmp.le.f32.partialorder %v1407, %v2669
      %vm2799 = vcmp.le.f32.partialorder %v1408, %v2669
      %vm2800 = vcmp.le.f32.partialorder %v1409, %v2669
      %vm2801 = vcmp.le.f32.partialorder %v1410, %v2669
      %vm2802 = vcmp.le.f32.partialorder %v1411, %v2669
      %vm2803 = vcmp.le.f32.partialorder %v1412, %v2669
      %vm2804 = vcmp.le.f32.partialorder %v1413, %v2669
      %vm2805 = vcmp.le.f32.partialorder %v1414, %v2669
      %vm2806 = vcmp.le.f32.partialorder %v1415, %v2673
      %vm2807 = vcmp.le.f32.partialorder %v1416, %v2673
      %vm2808 = vcmp.le.f32.partialorder %v1417, %v2673
      %vm2809 = vcmp.le.f32.partialorder %v1418, %v2673
      %vm2810 = vcmp.le.f32.partialorder %v1419, %v2673
      %vm2811 = vcmp.le.f32.partialorder %v1420, %v2673
      %vm2812 = vcmp.le.f32.partialorder %v1421, %v2673
      %vm2813 = vcmp.le.f32.partialorder %v1422, %v2673
      %vm2814 = vcmp.le.f32.partialorder %v1423, %v2677
      %vm2815 = vcmp.le.f32.partialorder %v1424, %v2677
      %vm2816 = vcmp.le.f32.partialorder %v1425, %v2677
      %vm2817 = vcmp.le.f32.partialorder %v1426, %v2677
      %vm2818 = vcmp.le.f32.partialorder %v1427, %v2677
      %vm2819 = vcmp.le.f32.partialorder %v1428, %v2677
      %vm2820 = vcmp.le.f32.partialorder %v1429, %v2677
      %vm2821 = vcmp.le.f32.partialorder %v1430, %v2677
      %2823 = vbcast.lane.b32.xlu0 %v1432, 256
      %v2824 = vpop.permute.xlu0 %2823
      %s2826 = sor.u32 256, 8
      %2827 = vbcast.lane.b32.xlu0 %v1432, %s2826
      %v2828 = vpop.permute.xlu0 %2827
      %s2830 = sor.u32 256, 16
      %2831 = vbcast.lane.b32.xlu0 %v1432, %s2830
      %v2832 = vpop.permute.xlu0 %2831
      %s2834 = sor.u32 256, 24
      %2835 = vbcast.lane.b32.xlu0 %v1432, %s2834
      %v2836 = vpop.permute.xlu0 %2835
      %s2838 = sor.u32 256, 32
      %2839 = vbcast.lane.b32.xlu0 %v1432, %s2838
      %v2840 = vpop.permute.xlu0 %2839
      %s2842 = sor.u32 256, 40
      %2843 = vbcast.lane.b32.xlu0 %v1432, %s2842
      %v2844 = vpop.permute.xlu0 %2843
      %s2846 = sor.u32 256, 48
      %2847 = vbcast.lane.b32.xlu0 %v1432, %s2846
      %v2848 = vpop.permute.xlu0 %2847
      %s2850 = sor.u32 256, 56
      %2851 = vbcast.lane.b32.xlu0 %v1432, %s2850
      %v2852 = vpop.permute.xlu0 %2851
      %v2853 = vsel %vm2694, %v2824, 64
      %v2854 = vsel %vm2695, %v2828, 64
      %v2855 = vsel %vm2696, %v2832, 64
      %v2856 = vsel %vm2697, %v2836, 64
      %v2857 = vsel %vm2698, %v2840, 64
      %v2858 = vsel %vm2699, %v2844, 64
      %v2859 = vsel %vm2700, %v2848, 64
      %v2860 = vsel %vm2701, %v2852, 64
      %v2861 = vsel %vm2702, %v2824, 64
      %v2862 = vsel %vm2703, %v2828, 64
      %v2863 = vsel %vm2704, %v2832, 64
      %v2864 = vsel %vm2705, %v2836, 64
      %v2865 = vsel %vm2706, %v2840, 64
      %v2866 = vsel %vm2707, %v2844, 64
      %v2867 = vsel %vm2708, %v2848, 64
      %v2868 = vsel %vm2709, %v2852, 64
      %v2869 = vsel %vm2710, %v2824, 64
      %v2870 = vsel %vm2711, %v2828, 64
      %v2871 = vsel %vm2712, %v2832, 64
      %v2872 = vsel %vm2713, %v2836, 64
      %v2873 = vsel %vm2714, %v2840, 64
      %v2874 = vsel %vm2715, %v2844, 64
      %v2875 = vsel %vm2716, %v2848, 64
      %v2876 = vsel %vm2717, %v2852, 64
      %v2877 = vsel %vm2718, %v2824, 64
      %v2878 = vsel %vm2719, %v2828, 64
      %v2879 = vsel %vm2720, %v2832, 64
      %v2880 = vsel %vm2721, %v2836, 64
      %v2881 = vsel %vm2722, %v2840, 64
      %v2882 = vsel %vm2723, %v2844, 64
      %v2883 = vsel %vm2724, %v2848, 64
      %v2884 = vsel %vm2725, %v2852, 64
      %v2885 = vsel %vm2726, %v2824, 64
      %v2886 = vsel %vm2727, %v2828, 64
      %v2887 = vsel %vm2728, %v2832, 64
      %v2888 = vsel %vm2729, %v2836, 64
      %v2889 = vsel %vm2730, %v2840, 64
      %v2890 = vsel %vm2731, %v2844, 64
      %v2891 = vsel %vm2732, %v2848, 64
      %v2892 = vsel %vm2733, %v2852, 64
      %v2893 = vsel %vm2734, %v2824, 64
      %v2894 = vsel %vm2735, %v2828, 64
      %v2895 = vsel %vm2736, %v2832, 64
      %v2896 = vsel %vm2737, %v2836, 64
      %v2897 = vsel %vm2738, %v2840, 64
      %v2898 = vsel %vm2739, %v2844, 64
      %v2899 = vsel %vm2740, %v2848, 64
      %v2900 = vsel %vm2741, %v2852, 64
      %v2901 = vsel %vm2742, %v2824, 64
      %v2902 = vsel %vm2743, %v2828, 64
      %v2903 = vsel %vm2744, %v2832, 64
      %v2904 = vsel %vm2745, %v2836, 64
      %v2905 = vsel %vm2746, %v2840, 64
      %v2906 = vsel %vm2747, %v2844, 64
      %v2907 = vsel %vm2748, %v2848, 64
      %v2908 = vsel %vm2749, %v2852, 64
      %v2909 = vsel %vm2750, %v2824, 64
      %v2910 = vsel %vm2751, %v2828, 64
      %v2911 = vsel %vm2752, %v2832, 64
      %v2912 = vsel %vm2753, %v2836, 64
      %v2913 = vsel %vm2754, %v2840, 64
      %v2914 = vsel %vm2755, %v2844, 64
      %v2915 = vsel %vm2756, %v2848, 64
      %v2916 = vsel %vm2757, %v2852, 64
      %v2917 = vsel %vm2758, %v2824, 64
      %v2918 = vsel %vm2759, %v2828, 64
      %v2919 = vsel %vm2760, %v2832, 64
      %v2920 = vsel %vm2761, %v2836, 64
      %v2921 = vsel %vm2762, %v2840, 64
      %v2922 = vsel %vm2763, %v2844, 64
      %v2923 = vsel %vm2764, %v2848, 64
      %v2924 = vsel %vm2765, %v2852, 64
      %v2925 = vsel %vm2766, %v2824, 64
      %v2926 = vsel %vm2767, %v2828, 64
      %v2927 = vsel %vm2768, %v2832, 64
      %v2928 = vsel %vm2769, %v2836, 64
      %v2929 = vsel %vm2770, %v2840, 64
      %v2930 = vsel %vm2771, %v2844, 64
      %v2931 = vsel %vm2772, %v2848, 64
      %v2932 = vsel %vm2773, %v2852, 64
      %v2933 = vsel %vm2774, %v2824, 64
      %v2934 = vsel %vm2775, %v2828, 64
      %v2935 = vsel %vm2776, %v2832, 64
      %v2936 = vsel %vm2777, %v2836, 64
      %v2937 = vsel %vm2778, %v2840, 64
      %v2938 = vsel %vm2779, %v2844, 64
      %v2939 = vsel %vm2780, %v2848, 64
      %v2940 = vsel %vm2781, %v2852, 64
      %v2941 = vsel %vm2782, %v2824, 64
      %v2942 = vsel %vm2783, %v2828, 64
      %v2943 = vsel %vm2784, %v2832, 64
      %v2944 = vsel %vm2785, %v2836, 64
      %v2945 = vsel %vm2786, %v2840, 64
      %v2946 = vsel %vm2787, %v2844, 64
      %v2947 = vsel %vm2788, %v2848, 64
      %v2948 = vsel %vm2789, %v2852, 64
      %v2949 = vsel %vm2790, %v2824, 64
      %v2950 = vsel %vm2791, %v2828, 64
      %v2951 = vsel %vm2792, %v2832, 64
      %v2952 = vsel %vm2793, %v2836, 64
      %v2953 = vsel %vm2794, %v2840, 64
      %v2954 = vsel %vm2795, %v2844, 64
      %v2955 = vsel %vm2796, %v2848, 64
      %v2956 = vsel %vm2797, %v2852, 64
      %v2957 = vsel %vm2798, %v2824, 64
      %v2958 = vsel %vm2799, %v2828, 64
      %v2959 = vsel %vm2800, %v2832, 64
      %v2960 = vsel %vm2801, %v2836, 64
      %v2961 = vsel %vm2802, %v2840, 64
      %v2962 = vsel %vm2803, %v2844, 64
      %v2963 = vsel %vm2804, %v2848, 64
      %v2964 = vsel %vm2805, %v2852, 64
      %v2965 = vsel %vm2806, %v2824, 64
      %v2966 = vsel %vm2807, %v2828, 64
      %v2967 = vsel %vm2808, %v2832, 64
      %v2968 = vsel %vm2809, %v2836, 64
      %v2969 = vsel %vm2810, %v2840, 64
      %v2970 = vsel %vm2811, %v2844, 64
      %v2971 = vsel %vm2812, %v2848, 64
      %v2972 = vsel %vm2813, %v2852, 64
      %v2973 = vsel %vm2814, %v2824, 64
      %v2974 = vsel %vm2815, %v2828, 64
      %v2975 = vsel %vm2816, %v2832, 64
      %v2976 = vsel %vm2817, %v2836, 64
      %v2977 = vsel %vm2818, %v2840, 64
      %v2978 = vsel %vm2819, %v2844, 64
      %v2979 = vsel %vm2820, %v2848, 64
      %v2980 = vsel %vm2821, %v2852, 64
      %2981 = vset.pattern.permute.xlu0 0
      %2982 = vperm.xlu0 %2981, %v2853
      %v2983 = vpop.permute.xlu0 %2982
      %2984 = vset.pattern.permute.xlu0 0
      %2985 = vperm.xlu0 %2984, %v2854
      %v2986 = vpop.permute.xlu0 %2985
      %2987 = vset.pattern.permute.xlu0 0
      %2988 = vperm.xlu0 %2987, %v2855
      %v2989 = vpop.permute.xlu0 %2988
      %2990 = vset.pattern.permute.xlu0 0
      %2991 = vperm.xlu0 %2990, %v2856
      %v2992 = vpop.permute.xlu0 %2991
      %2993 = vset.pattern.permute.xlu0 0
      %2994 = vperm.xlu0 %2993, %v2857
      %v2995 = vpop.permute.xlu0 %2994
      %2996 = vset.pattern.permute.xlu0 0
      %2997 = vperm.xlu0 %2996, %v2858
      %v2998 = vpop.permute.xlu0 %2997
      %2999 = vset.pattern.permute.xlu0 0
      %3000 = vperm.xlu0 %2999, %v2859
      %v3001 = vpop.permute.xlu0 %3000
      %3002 = vset.pattern.permute.xlu0 0
      %3003 = vperm.xlu0 %3002, %v2860
      %v3004 = vpop.permute.xlu0 %3003
      %3005 = vset.pattern.permute.xlu0 0
      %3006 = vperm.xlu0 %3005, %v2861
      %v3007 = vpop.permute.xlu0 %3006
      %3008 = vset.pattern.permute.xlu0 0
      %3009 = vperm.xlu0 %3008, %v2862
      %v3010 = vpop.permute.xlu0 %3009
      %3011 = vset.pattern.permute.xlu0 0
      %3012 = vperm.xlu0 %3011, %v2863
      %v3013 = vpop.permute.xlu0 %3012
      %3014 = vset.pattern.permute.xlu0 0
      %3015 = vperm.xlu0 %3014, %v2864
      %v3016 = vpop.permute.xlu0 %3015
      %3017 = vset.pattern.permute.xlu0 0
      %3018 = vperm.xlu0 %3017, %v2865
      %v3019 = vpop.permute.xlu0 %3018
      %3020 = vset.pattern.permute.xlu0 0
      %3021 = vperm.xlu0 %3020, %v2866
      %v3022 = vpop.permute.xlu0 %3021
      %3023 = vset.pattern.permute.xlu0 0
      %3024 = vperm.xlu0 %3023, %v2867
      %v3025 = vpop.permute.xlu0 %3024
      %3026 = vset.pattern.permute.xlu0 0
      %3027 = vperm.xlu0 %3026, %v2868
      %v3028 = vpop.permute.xlu0 %3027
      %3029 = vset.pattern.permute.xlu0 0
      %3030 = vperm.xlu0 %3029, %v2869
      %v3031 = vpop.permute.xlu0 %3030
      %3032 = vset.pattern.permute.xlu0 0
      %3033 = vperm.xlu0 %3032, %v2870
      %v3034 = vpop.permute.xlu0 %3033
      %3035 = vset.pattern.permute.xlu0 0
      %3036 = vperm.xlu0 %3035, %v2871
      %v3037 = vpop.permute.xlu0 %3036
      %3038 = vset.pattern.permute.xlu0 0
      %3039 = vperm.xlu0 %3038, %v2872
      %v3040 = vpop.permute.xlu0 %3039
      %3041 = vset.pattern.permute.xlu0 0
      %3042 = vperm.xlu0 %3041, %v2873
      %v3043 = vpop.permute.xlu0 %3042
      %3044 = vset.pattern.permute.xlu0 0
      %3045 = vperm.xlu0 %3044, %v2874
      %v3046 = vpop.permute.xlu0 %3045
      %3047 = vset.pattern.permute.xlu0 0
      %3048 = vperm.xlu0 %3047, %v2875
      %v3049 = vpop.permute.xlu0 %3048
      %3050 = vset.pattern.permute.xlu0 0
      %3051 = vperm.xlu0 %3050, %v2876
      %v3052 = vpop.permute.xlu0 %3051
      %3053 = vset.pattern.permute.xlu0 0
      %3054 = vperm.xlu0 %3053, %v2877
      %v3055 = vpop.permute.xlu0 %3054
      %3056 = vset.pattern.permute.xlu0 0
      %3057 = vperm.xlu0 %3056, %v2878
      %v3058 = vpop.permute.xlu0 %3057
      %3059 = vset.pattern.permute.xlu0 0
      %3060 = vperm.xlu0 %3059, %v2879
      %v3061 = vpop.permute.xlu0 %3060
      %3062 = vset.pattern.permute.xlu0 0
      %3063 = vperm.xlu0 %3062, %v2880
      %v3064 = vpop.permute.xlu0 %3063
      %3065 = vset.pattern.permute.xlu0 0
      %3066 = vperm.xlu0 %3065, %v2881
      %v3067 = vpop.permute.xlu0 %3066
      %3068 = vset.pattern.permute.xlu0 0
      %3069 = vperm.xlu0 %3068, %v2882
      %v3070 = vpop.permute.xlu0 %3069
      %3071 = vset.pattern.permute.xlu0 0
      %3072 = vperm.xlu0 %3071, %v2883
      %v3073 = vpop.permute.xlu0 %3072
      %3074 = vset.pattern.permute.xlu0 0
      %3075 = vperm.xlu0 %3074, %v2884
      %v3076 = vpop.permute.xlu0 %3075
      %3077 = vset.pattern.permute.xlu0 0
      %3078 = vperm.xlu0 %3077, %v2885
      %v3079 = vpop.permute.xlu0 %3078
      %3080 = vset.pattern.permute.xlu0 0
      %3081 = vperm.xlu0 %3080, %v2886
      %v3082 = vpop.permute.xlu0 %3081
      %3083 = vset.pattern.permute.xlu0 0
      %3084 = vperm.xlu0 %3083, %v2887
      %v3085 = vpop.permute.xlu0 %3084
      %3086 = vset.pattern.permute.xlu0 0
      %3087 = vperm.xlu0 %3086, %v2888
      %v3088 = vpop.permute.xlu0 %3087
      %3089 = vset.pattern.permute.xlu0 0
      %3090 = vperm.xlu0 %3089, %v2889
      %v3091 = vpop.permute.xlu0 %3090
      %3092 = vset.pattern.permute.xlu0 0
      %3093 = vperm.xlu0 %3092, %v2890
      %v3094 = vpop.permute.xlu0 %3093
      %3095 = vset.pattern.permute.xlu0 0
      %3096 = vperm.xlu0 %3095, %v2891
      %v3097 = vpop.permute.xlu0 %3096
      %3098 = vset.pattern.permute.xlu0 0
      %3099 = vperm.xlu0 %3098, %v2892
      %v3100 = vpop.permute.xlu0 %3099
      %3101 = vset.pattern.permute.xlu0 0
      %3102 = vperm.xlu0 %3101, %v2893
      %v3103 = vpop.permute.xlu0 %3102
      %3104 = vset.pattern.permute.xlu0 0
      %3105 = vperm.xlu0 %3104, %v2894
      %v3106 = vpop.permute.xlu0 %3105
      %3107 = vset.pattern.permute.xlu0 0
      %3108 = vperm.xlu0 %3107, %v2895
      %v3109 = vpop.permute.xlu0 %3108
      %3110 = vset.pattern.permute.xlu0 0
      %3111 = vperm.xlu0 %3110, %v2896
      %v3112 = vpop.permute.xlu0 %3111
      %3113 = vset.pattern.permute.xlu0 0
      %3114 = vperm.xlu0 %3113, %v2897
      %v3115 = vpop.permute.xlu0 %3114
      %3116 = vset.pattern.permute.xlu0 0
      %3117 = vperm.xlu0 %3116, %v2898
      %v3118 = vpop.permute.xlu0 %3117
      %3119 = vset.pattern.permute.xlu0 0
      %3120 = vperm.xlu0 %3119, %v2899
      %v3121 = vpop.permute.xlu0 %3120
      %3122 = vset.pattern.permute.xlu0 0
      %3123 = vperm.xlu0 %3122, %v2900
      %v3124 = vpop.permute.xlu0 %3123
      %3125 = vset.pattern.permute.xlu0 0
      %3126 = vperm.xlu0 %3125, %v2901
      %v3127 = vpop.permute.xlu0 %3126
      %3128 = vset.pattern.permute.xlu0 0
      %3129 = vperm.xlu0 %3128, %v2902
      %v3130 = vpop.permute.xlu0 %3129
      %3131 = vset.pattern.permute.xlu0 0
      %3132 = vperm.xlu0 %3131, %v2903
      %v3133 = vpop.permute.xlu0 %3132
      %3134 = vset.pattern.permute.xlu0 0
      %3135 = vperm.xlu0 %3134, %v2904
      %v3136 = vpop.permute.xlu0 %3135
      %3137 = vset.pattern.permute.xlu0 0
      %3138 = vperm.xlu0 %3137, %v2905
      %v3139 = vpop.permute.xlu0 %3138
      %3140 = vset.pattern.permute.xlu0 0
      %3141 = vperm.xlu0 %3140, %v2906
      %v3142 = vpop.permute.xlu0 %3141
      %3143 = vset.pattern.permute.xlu0 0
      %3144 = vperm.xlu0 %3143, %v2907
      %v3145 = vpop.permute.xlu0 %3144
      %3146 = vset.pattern.permute.xlu0 0
      %3147 = vperm.xlu0 %3146, %v2908
      %v3148 = vpop.permute.xlu0 %3147
      %3149 = vset.pattern.permute.xlu0 0
      %3150 = vperm.xlu0 %3149, %v2909
      %v3151 = vpop.permute.xlu0 %3150
      %3152 = vset.pattern.permute.xlu0 0
      %3153 = vperm.xlu0 %3152, %v2910
      %v3154 = vpop.permute.xlu0 %3153
      %3155 = vset.pattern.permute.xlu0 0
      %3156 = vperm.xlu0 %3155, %v2911
      %v3157 = vpop.permute.xlu0 %3156
      %3158 = vset.pattern.permute.xlu0 0
      %3159 = vperm.xlu0 %3158, %v2912
      %v3160 = vpop.permute.xlu0 %3159
      %3161 = vset.pattern.permute.xlu0 0
      %3162 = vperm.xlu0 %3161, %v2913
      %v3163 = vpop.permute.xlu0 %3162
      %3164 = vset.pattern.permute.xlu0 0
      %3165 = vperm.xlu0 %3164, %v2914
      %v3166 = vpop.permute.xlu0 %3165
      %3167 = vset.pattern.permute.xlu0 0
      %3168 = vperm.xlu0 %3167, %v2915
      %v3169 = vpop.permute.xlu0 %3168
      %3170 = vset.pattern.permute.xlu0 0
      %3171 = vperm.xlu0 %3170, %v2916
      %v3172 = vpop.permute.xlu0 %3171
      %3173 = vset.pattern.permute.xlu0 0
      %3174 = vperm.xlu0 %3173, %v2917
      %v3175 = vpop.permute.xlu0 %3174
      %3176 = vset.pattern.permute.xlu0 0
      %3177 = vperm.xlu0 %3176, %v2918
      %v3178 = vpop.permute.xlu0 %3177
      %3179 = vset.pattern.permute.xlu0 0
      %3180 = vperm.xlu0 %3179, %v2919
      %v3181 = vpop.permute.xlu0 %3180
      %3182 = vset.pattern.permute.xlu0 0
      %3183 = vperm.xlu0 %3182, %v2920
      %v3184 = vpop.permute.xlu0 %3183
      %3185 = vset.pattern.permute.xlu0 0
      %3186 = vperm.xlu0 %3185, %v2921
      %v3187 = vpop.permute.xlu0 %3186
      %3188 = vset.pattern.permute.xlu0 0
      %3189 = vperm.xlu0 %3188, %v2922
      %v3190 = vpop.permute.xlu0 %3189
      %3191 = vset.pattern.permute.xlu0 0
      %3192 = vperm.xlu0 %3191, %v2923
      %v3193 = vpop.permute.xlu0 %3192
      %3194 = vset.pattern.permute.xlu0 0
      %3195 = vperm.xlu0 %3194, %v2924
      %v3196 = vpop.permute.xlu0 %3195
      %3197 = vset.pattern.permute.xlu0 0
      %3198 = vperm.xlu0 %3197, %v2925
      %v3199 = vpop.permute.xlu0 %3198
      %3200 = vset.pattern.permute.xlu0 0
      %3201 = vperm.xlu0 %3200, %v2926
      %v3202 = vpop.permute.xlu0 %3201
      %3203 = vset.pattern.permute.xlu0 0
      %3204 = vperm.xlu0 %3203, %v2927
      %v3205 = vpop.permute.xlu0 %3204
      %3206 = vset.pattern.permute.xlu0 0
      %3207 = vperm.xlu0 %3206, %v2928
      %v3208 = vpop.permute.xlu0 %3207
      %3209 = vset.pattern.permute.xlu0 0
      %3210 = vperm.xlu0 %3209, %v2929
      %v3211 = vpop.permute.xlu0 %3210
      %3212 = vset.pattern.permute.xlu0 0
      %3213 = vperm.xlu0 %3212, %v2930
      %v3214 = vpop.permute.xlu0 %3213
      %3215 = vset.pattern.permute.xlu0 0
      %3216 = vperm.xlu0 %3215, %v2931
      %v3217 = vpop.permute.xlu0 %3216
      %3218 = vset.pattern.permute.xlu0 0
      %3219 = vperm.xlu0 %3218, %v2932
      %v3220 = vpop.permute.xlu0 %3219
      %3221 = vset.pattern.permute.xlu0 0
      %3222 = vperm.xlu0 %3221, %v2933
      %v3223 = vpop.permute.xlu0 %3222
      %3224 = vset.pattern.permute.xlu0 0
      %3225 = vperm.xlu0 %3224, %v2934
      %v3226 = vpop.permute.xlu0 %3225
      %3227 = vset.pattern.permute.xlu0 0
      %3228 = vperm.xlu0 %3227, %v2935
      %v3229 = vpop.permute.xlu0 %3228
      %3230 = vset.pattern.permute.xlu0 0
      %3231 = vperm.xlu0 %3230, %v2936
      %v3232 = vpop.permute.xlu0 %3231
      %3233 = vset.pattern.permute.xlu0 0
      %3234 = vperm.xlu0 %3233, %v2937
      %v3235 = vpop.permute.xlu0 %3234
      %3236 = vset.pattern.permute.xlu0 0
      %3237 = vperm.xlu0 %3236, %v2938
      %v3238 = vpop.permute.xlu0 %3237
      %3239 = vset.pattern.permute.xlu0 0
      %3240 = vperm.xlu0 %3239, %v2939
      %v3241 = vpop.permute.xlu0 %3240
      %3242 = vset.pattern.permute.xlu0 0
      %3243 = vperm.xlu0 %3242, %v2940
      %v3244 = vpop.permute.xlu0 %3243
      %3245 = vset.pattern.permute.xlu0 0
      %3246 = vperm.xlu0 %3245, %v2941
      %v3247 = vpop.permute.xlu0 %3246
      %3248 = vset.pattern.permute.xlu0 0
      %3249 = vperm.xlu0 %3248, %v2942
      %v3250 = vpop.permute.xlu0 %3249
      %3251 = vset.pattern.permute.xlu0 0
      %3252 = vperm.xlu0 %3251, %v2943
      %v3253 = vpop.permute.xlu0 %3252
      %3254 = vset.pattern.permute.xlu0 0
      %3255 = vperm.xlu0 %3254, %v2944
      %v3256 = vpop.permute.xlu0 %3255
      %3257 = vset.pattern.permute.xlu0 0
      %3258 = vperm.xlu0 %3257, %v2945
      %v3259 = vpop.permute.xlu0 %3258
      %3260 = vset.pattern.permute.xlu0 0
      %3261 = vperm.xlu0 %3260, %v2946
      %v3262 = vpop.permute.xlu0 %3261
      %3263 = vset.pattern.permute.xlu0 0
      %3264 = vperm.xlu0 %3263, %v2947
      %v3265 = vpop.permute.xlu0 %3264
      %3266 = vset.pattern.permute.xlu0 0
      %3267 = vperm.xlu0 %3266, %v2948
      %v3268 = vpop.permute.xlu0 %3267
      %3269 = vset.pattern.permute.xlu0 0
      %3270 = vperm.xlu0 %3269, %v2949
      %v3271 = vpop.permute.xlu0 %3270
      %3272 = vset.pattern.permute.xlu0 0
      %3273 = vperm.xlu0 %3272, %v2950
      %v3274 = vpop.permute.xlu0 %3273
      %3275 = vset.pattern.permute.xlu0 0
      %3276 = vperm.xlu0 %3275, %v2951
      %v3277 = vpop.permute.xlu0 %3276
      %3278 = vset.pattern.permute.xlu0 0
      %3279 = vperm.xlu0 %3278, %v2952
      %v3280 = vpop.permute.xlu0 %3279
      %3281 = vset.pattern.permute.xlu0 0
      %3282 = vperm.xlu0 %3281, %v2953
      %v3283 = vpop.permute.xlu0 %3282
      %3284 = vset.pattern.permute.xlu0 0
      %3285 = vperm.xlu0 %3284, %v2954
      %v3286 = vpop.permute.xlu0 %3285
      %3287 = vset.pattern.permute.xlu0 0
      %3288 = vperm.xlu0 %3287, %v2955
      %v3289 = vpop.permute.xlu0 %3288
      %3290 = vset.pattern.permute.xlu0 0
      %3291 = vperm.xlu0 %3290, %v2956
      %v3292 = vpop.permute.xlu0 %3291
      %3293 = vset.pattern.permute.xlu0 0
      %3294 = vperm.xlu0 %3293, %v2957
      %v3295 = vpop.permute.xlu0 %3294
      %3296 = vset.pattern.permute.xlu0 0
      %3297 = vperm.xlu0 %3296, %v2958
      %v3298 = vpop.permute.xlu0 %3297
      %3299 = vset.pattern.permute.xlu0 0
      %3300 = vperm.xlu0 %3299, %v2959
      %v3301 = vpop.permute.xlu0 %3300
      %3302 = vset.pattern.permute.xlu0 0
      %3303 = vperm.xlu0 %3302, %v2960
      %v3304 = vpop.permute.xlu0 %3303
      %3305 = vset.pattern.permute.xlu0 0
      %3306 = vperm.xlu0 %3305, %v2961
      %v3307 = vpop.permute.xlu0 %3306
      %3308 = vset.pattern.permute.xlu0 0
      %3309 = vperm.xlu0 %3308, %v2962
      %v3310 = vpop.permute.xlu0 %3309
      %3311 = vset.pattern.permute.xlu0 0
      %3312 = vperm.xlu0 %3311, %v2963
      %v3313 = vpop.permute.xlu0 %3312
      %3314 = vset.pattern.permute.xlu0 0
      %3315 = vperm.xlu0 %3314, %v2964
      %v3316 = vpop.permute.xlu0 %3315
      %3317 = vset.pattern.permute.xlu0 0
      %3318 = vperm.xlu0 %3317, %v2965
      %v3319 = vpop.permute.xlu0 %3318
      %3320 = vset.pattern.permute.xlu0 0
      %3321 = vperm.xlu0 %3320, %v2966
      %v3322 = vpop.permute.xlu0 %3321
      %3323 = vset.pattern.permute.xlu0 0
      %3324 = vperm.xlu0 %3323, %v2967
      %v3325 = vpop.permute.xlu0 %3324
      %3326 = vset.pattern.permute.xlu0 0
      %3327 = vperm.xlu0 %3326, %v2968
      %v3328 = vpop.permute.xlu0 %3327
      %3329 = vset.pattern.permute.xlu0 0
      %3330 = vperm.xlu0 %3329, %v2969
      %v3331 = vpop.permute.xlu0 %3330
      %3332 = vset.pattern.permute.xlu0 0
      %3333 = vperm.xlu0 %3332, %v2970
      %v3334 = vpop.permute.xlu0 %3333
      %3335 = vset.pattern.permute.xlu0 0
      %3336 = vperm.xlu0 %3335, %v2971
      %v3337 = vpop.permute.xlu0 %3336
      %3338 = vset.pattern.permute.xlu0 0
      %3339 = vperm.xlu0 %3338, %v2972
      %v3340 = vpop.permute.xlu0 %3339
      %3341 = vset.pattern.permute.xlu0 0
      %3342 = vperm.xlu0 %3341, %v2973
      %v3343 = vpop.permute.xlu0 %3342
      %3344 = vset.pattern.permute.xlu0 0
      %3345 = vperm.xlu0 %3344, %v2974
      %v3346 = vpop.permute.xlu0 %3345
      %3347 = vset.pattern.permute.xlu0 0
      %3348 = vperm.xlu0 %3347, %v2975
      %v3349 = vpop.permute.xlu0 %3348
      %3350 = vset.pattern.permute.xlu0 0
      %3351 = vperm.xlu0 %3350, %v2976
      %v3352 = vpop.permute.xlu0 %3351
      %3353 = vset.pattern.permute.xlu0 0
      %3354 = vperm.xlu0 %3353, %v2977
      %v3355 = vpop.permute.xlu0 %3354
      %3356 = vset.pattern.permute.xlu0 0
      %3357 = vperm.xlu0 %3356, %v2978
      %v3358 = vpop.permute.xlu0 %3357
      %3359 = vset.pattern.permute.xlu0 0
      %3360 = vperm.xlu0 %3359, %v2979
      %v3361 = vpop.permute.xlu0 %3360
      %3362 = vset.pattern.permute.xlu0 0
      %3363 = vperm.xlu0 %3362, %v2980
      %v3364 = vpop.permute.xlu0 %3363
      %v3365 = vlaneseq
      %v3366 = vshrl.u32 %v3365, 7
      %v3367 = vsub.s32 %v1432, %v3366
      %v3368 = vrot.slane %v2983, %v3367
      %v3369 = vlaneseq
      %v3370 = vshrl.u32 %v3369, 7
      %v3371 = vsub.s32 %v1949, %v3370
      %v3372 = vrot.slane %v2986, %v3371
      %v3373 = vsel %vm1954, %v3372, %v3368
      %v3374 = vlaneseq
      %v3375 = vshrl.u32 %v3374, 7
      %v3376 = vsub.s32 %v1956, %v3375
      %v3377 = vrot.slane %v2989, %v3376
      %v3378 = vsel %vm1961, %v3377, %v3373
      %v3379 = vlaneseq
      %v3380 = vshrl.u32 %v3379, 7
      %v3381 = vsub.s32 %v1963, %v3380
      %v3382 = vrot.slane %v2992, %v3381
      %v3383 = vsel %vm1968, %v3382, %v3378
      %v3384 = vlaneseq
      %v3385 = vshrl.u32 %v3384, 7
      %v3386 = vsub.s32 %v1970, %v3385
      %v3387 = vrot.slane %v2995, %v3386
      %v3388 = vsel %vm1975, %v3387, %v3383
      %v3389 = vlaneseq
      %v3390 = vshrl.u32 %v3389, 7
      %v3391 = vsub.s32 %v1977, %v3390
      %v3392 = vrot.slane %v2998, %v3391
      %v3393 = vsel %vm1982, %v3392, %v3388
      %v3394 = vlaneseq
      %v3395 = vshrl.u32 %v3394, 7
      %v3396 = vsub.s32 %v1984, %v3395
      %v3397 = vrot.slane %v3001, %v3396
      %v3398 = vsel %vm1989, %v3397, %v3393
      %v3399 = vlaneseq
      %v3400 = vshrl.u32 %v3399, 7
      %v3401 = vsub.s32 %v1991, %v3400
      %v3402 = vrot.slane %v3004, %v3401
      %v3403 = vsel %vm1996, %v3402, %v3398
      %v3404 = vlaneseq
      %v3405 = vshrl.u32 %v3404, 7
      %v3406 = vsub.s32 %v1432, %v3405
      %v3407 = vrot.slane %v3007, %v3406
      %v3408 = vlaneseq
      %v3409 = vshrl.u32 %v3408, 7
      %v3410 = vsub.s32 %v1949, %v3409
      %v3411 = vrot.slane %v3010, %v3410
      %v3412 = vsel %vm1954, %v3411, %v3407
      %v3413 = vlaneseq
      %v3414 = vshrl.u32 %v3413, 7
      %v3415 = vsub.s32 %v1956, %v3414
      %v3416 = vrot.slane %v3013, %v3415
      %v3417 = vsel %vm1961, %v3416, %v3412
      %v3418 = vlaneseq
      %v3419 = vshrl.u32 %v3418, 7
      %v3420 = vsub.s32 %v1963, %v3419
      %v3421 = vrot.slane %v3016, %v3420
      %v3422 = vsel %vm1968, %v3421, %v3417
      %v3423 = vlaneseq
      %v3424 = vshrl.u32 %v3423, 7
      %v3425 = vsub.s32 %v1970, %v3424
      %v3426 = vrot.slane %v3019, %v3425
      %v3427 = vsel %vm1975, %v3426, %v3422
      %v3428 = vlaneseq
      %v3429 = vshrl.u32 %v3428, 7
      %v3430 = vsub.s32 %v1977, %v3429
      %v3431 = vrot.slane %v3022, %v3430
      %v3432 = vsel %vm1982, %v3431, %v3427
      %v3433 = vlaneseq
      %v3434 = vshrl.u32 %v3433, 7
      %v3435 = vsub.s32 %v1984, %v3434
      %v3436 = vrot.slane %v3025, %v3435
      %v3437 = vsel %vm1989, %v3436, %v3432
      %v3438 = vlaneseq
      %v3439 = vshrl.u32 %v3438, 7
      %v3440 = vsub.s32 %v1991, %v3439
      %v3441 = vrot.slane %v3028, %v3440
      %v3442 = vsel %vm1996, %v3441, %v3437
      %v3443 = vlaneseq
      %v3444 = vshrl.u32 %v3443, 7
      %v3445 = vsub.s32 %v1432, %v3444
      %v3446 = vrot.slane %v3031, %v3445
      %v3447 = vlaneseq
      %v3448 = vshrl.u32 %v3447, 7
      %v3449 = vsub.s32 %v1949, %v3448
      %v3450 = vrot.slane %v3034, %v3449
      %v3451 = vsel %vm1954, %v3450, %v3446
      %v3452 = vlaneseq
      %v3453 = vshrl.u32 %v3452, 7
      %v3454 = vsub.s32 %v1956, %v3453
      %v3455 = vrot.slane %v3037, %v3454
      %v3456 = vsel %vm1961, %v3455, %v3451
      %v3457 = vlaneseq
      %v3458 = vshrl.u32 %v3457, 7
      %v3459 = vsub.s32 %v1963, %v3458
      %v3460 = vrot.slane %v3040, %v3459
      %v3461 = vsel %vm1968, %v3460, %v3456
      %v3462 = vlaneseq
      %v3463 = vshrl.u32 %v3462, 7
      %v3464 = vsub.s32 %v1970, %v3463
      %v3465 = vrot.slane %v3043, %v3464
      %v3466 = vsel %vm1975, %v3465, %v3461
      %v3467 = vlaneseq
      %v3468 = vshrl.u32 %v3467, 7
      %v3469 = vsub.s32 %v1977, %v3468
      %v3470 = vrot.slane %v3046, %v3469
      %v3471 = vsel %vm1982, %v3470, %v3466
      %v3472 = vlaneseq
      %v3473 = vshrl.u32 %v3472, 7
      %v3474 = vsub.s32 %v1984, %v3473
      %v3475 = vrot.slane %v3049, %v3474
      %v3476 = vsel %vm1989, %v3475, %v3471
      %v3477 = vlaneseq
      %v3478 = vshrl.u32 %v3477, 7
      %v3479 = vsub.s32 %v1991, %v3478
      %v3480 = vrot.slane %v3052, %v3479
      %v3481 = vsel %vm1996, %v3480, %v3476
      %v3482 = vlaneseq
      %v3483 = vshrl.u32 %v3482, 7
      %v3484 = vsub.s32 %v1432, %v3483
      %v3485 = vrot.slane %v3055, %v3484
      %v3486 = vlaneseq
      %v3487 = vshrl.u32 %v3486, 7
      %v3488 = vsub.s32 %v1949, %v3487
      %v3489 = vrot.slane %v3058, %v3488
      %v3490 = vsel %vm1954, %v3489, %v3485
      %v3491 = vlaneseq
      %v3492 = vshrl.u32 %v3491, 7
      %v3493 = vsub.s32 %v1956, %v3492
      %v3494 = vrot.slane %v3061, %v3493
      %v3495 = vsel %vm1961, %v3494, %v3490
      %v3496 = vlaneseq
      %v3497 = vshrl.u32 %v3496, 7
      %v3498 = vsub.s32 %v1963, %v3497
      %v3499 = vrot.slane %v3064, %v3498
      %v3500 = vsel %vm1968, %v3499, %v3495
      %v3501 = vlaneseq
      %v3502 = vshrl.u32 %v3501, 7
      %v3503 = vsub.s32 %v1970, %v3502
      %v3504 = vrot.slane %v3067, %v3503
      %v3505 = vsel %vm1975, %v3504, %v3500
      %v3506 = vlaneseq
      %v3507 = vshrl.u32 %v3506, 7
      %v3508 = vsub.s32 %v1977, %v3507
      %v3509 = vrot.slane %v3070, %v3508
      %v3510 = vsel %vm1982, %v3509, %v3505
      %v3511 = vlaneseq
      %v3512 = vshrl.u32 %v3511, 7
      %v3513 = vsub.s32 %v1984, %v3512
      %v3514 = vrot.slane %v3073, %v3513
      %v3515 = vsel %vm1989, %v3514, %v3510
      %v3516 = vlaneseq
      %v3517 = vshrl.u32 %v3516, 7
      %v3518 = vsub.s32 %v1991, %v3517
      %v3519 = vrot.slane %v3076, %v3518
      %v3520 = vsel %vm1996, %v3519, %v3515
      %v3521 = vlaneseq
      %v3522 = vshrl.u32 %v3521, 7
      %v3523 = vsub.s32 %v1432, %v3522
      %v3524 = vrot.slane %v3079, %v3523
      %v3525 = vlaneseq
      %v3526 = vshrl.u32 %v3525, 7
      %v3527 = vsub.s32 %v1949, %v3526
      %v3528 = vrot.slane %v3082, %v3527
      %v3529 = vsel %vm1954, %v3528, %v3524
      %v3530 = vlaneseq
      %v3531 = vshrl.u32 %v3530, 7
      %v3532 = vsub.s32 %v1956, %v3531
      %v3533 = vrot.slane %v3085, %v3532
      %v3534 = vsel %vm1961, %v3533, %v3529
      %v3535 = vlaneseq
      %v3536 = vshrl.u32 %v3535, 7
      %v3537 = vsub.s32 %v1963, %v3536
      %v3538 = vrot.slane %v3088, %v3537
      %v3539 = vsel %vm1968, %v3538, %v3534
      %v3540 = vlaneseq
      %v3541 = vshrl.u32 %v3540, 7
      %v3542 = vsub.s32 %v1970, %v3541
      %v3543 = vrot.slane %v3091, %v3542
      %v3544 = vsel %vm1975, %v3543, %v3539
      %v3545 = vlaneseq
      %v3546 = vshrl.u32 %v3545, 7
      %v3547 = vsub.s32 %v1977, %v3546
      %v3548 = vrot.slane %v3094, %v3547
      %v3549 = vsel %vm1982, %v3548, %v3544
      %v3550 = vlaneseq
      %v3551 = vshrl.u32 %v3550, 7
      %v3552 = vsub.s32 %v1984, %v3551
      %v3553 = vrot.slane %v3097, %v3552
      %v3554 = vsel %vm1989, %v3553, %v3549
      %v3555 = vlaneseq
      %v3556 = vshrl.u32 %v3555, 7
      %v3557 = vsub.s32 %v1991, %v3556
      %v3558 = vrot.slane %v3100, %v3557
      %v3559 = vsel %vm1996, %v3558, %v3554
      %v3560 = vlaneseq
      %v3561 = vshrl.u32 %v3560, 7
      %v3562 = vsub.s32 %v1432, %v3561
      %v3563 = vrot.slane %v3103, %v3562
      %v3564 = vlaneseq
      %v3565 = vshrl.u32 %v3564, 7
      %v3566 = vsub.s32 %v1949, %v3565
      %v3567 = vrot.slane %v3106, %v3566
      %v3568 = vsel %vm1954, %v3567, %v3563
      %v3569 = vlaneseq
      %v3570 = vshrl.u32 %v3569, 7
      %v3571 = vsub.s32 %v1956, %v3570
      %v3572 = vrot.slane %v3109, %v3571
      %v3573 = vsel %vm1961, %v3572, %v3568
      %v3574 = vlaneseq
      %v3575 = vshrl.u32 %v3574, 7
      %v3576 = vsub.s32 %v1963, %v3575
      %v3577 = vrot.slane %v3112, %v3576
      %v3578 = vsel %vm1968, %v3577, %v3573
      %v3579 = vlaneseq
      %v3580 = vshrl.u32 %v3579, 7
      %v3581 = vsub.s32 %v1970, %v3580
      %v3582 = vrot.slane %v3115, %v3581
      %v3583 = vsel %vm1975, %v3582, %v3578
      %v3584 = vlaneseq
      %v3585 = vshrl.u32 %v3584, 7
      %v3586 = vsub.s32 %v1977, %v3585
      %v3587 = vrot.slane %v3118, %v3586
      %v3588 = vsel %vm1982, %v3587, %v3583
      %v3589 = vlaneseq
      %v3590 = vshrl.u32 %v3589, 7
      %v3591 = vsub.s32 %v1984, %v3590
      %v3592 = vrot.slane %v3121, %v3591
      %v3593 = vsel %vm1989, %v3592, %v3588
      %v3594 = vlaneseq
      %v3595 = vshrl.u32 %v3594, 7
      %v3596 = vsub.s32 %v1991, %v3595
      %v3597 = vrot.slane %v3124, %v3596
      %v3598 = vsel %vm1996, %v3597, %v3593
      %v3599 = vlaneseq
      %v3600 = vshrl.u32 %v3599, 7
      %v3601 = vsub.s32 %v1432, %v3600
      %v3602 = vrot.slane %v3127, %v3601
      %v3603 = vlaneseq
      %v3604 = vshrl.u32 %v3603, 7
      %v3605 = vsub.s32 %v1949, %v3604
      %v3606 = vrot.slane %v3130, %v3605
      %v3607 = vsel %vm1954, %v3606, %v3602
      %v3608 = vlaneseq
      %v3609 = vshrl.u32 %v3608, 7
      %v3610 = vsub.s32 %v1956, %v3609
      %v3611 = vrot.slane %v3133, %v3610
      %v3612 = vsel %vm1961, %v3611, %v3607
      %v3613 = vlaneseq
      %v3614 = vshrl.u32 %v3613, 7
      %v3615 = vsub.s32 %v1963, %v3614
      %v3616 = vrot.slane %v3136, %v3615
      %v3617 = vsel %vm1968, %v3616, %v3612
      %v3618 = vlaneseq
      %v3619 = vshrl.u32 %v3618, 7
      %v3620 = vsub.s32 %v1970, %v3619
      %v3621 = vrot.slane %v3139, %v3620
      %v3622 = vsel %vm1975, %v3621, %v3617
      %v3623 = vlaneseq
      %v3624 = vshrl.u32 %v3623, 7
      %v3625 = vsub.s32 %v1977, %v3624
      %v3626 = vrot.slane %v3142, %v3625
      %v3627 = vsel %vm1982, %v3626, %v3622
      %v3628 = vlaneseq
      %v3629 = vshrl.u32 %v3628, 7
      %v3630 = vsub.s32 %v1984, %v3629
      %v3631 = vrot.slane %v3145, %v3630
      %v3632 = vsel %vm1989, %v3631, %v3627
      %v3633 = vlaneseq
      %v3634 = vshrl.u32 %v3633, 7
      %v3635 = vsub.s32 %v1991, %v3634
      %v3636 = vrot.slane %v3148, %v3635
      %v3637 = vsel %vm1996, %v3636, %v3632
      %v3638 = vlaneseq
      %v3639 = vshrl.u32 %v3638, 7
      %v3640 = vsub.s32 %v1432, %v3639
      %v3641 = vrot.slane %v3151, %v3640
      %v3642 = vlaneseq
      %v3643 = vshrl.u32 %v3642, 7
      %v3644 = vsub.s32 %v1949, %v3643
      %v3645 = vrot.slane %v3154, %v3644
      %v3646 = vsel %vm1954, %v3645, %v3641
      %v3647 = vlaneseq
      %v3648 = vshrl.u32 %v3647, 7
      %v3649 = vsub.s32 %v1956, %v3648
      %v3650 = vrot.slane %v3157, %v3649
      %v3651 = vsel %vm1961, %v3650, %v3646
      %v3652 = vlaneseq
      %v3653 = vshrl.u32 %v3652, 7
      %v3654 = vsub.s32 %v1963, %v3653
      %v3655 = vrot.slane %v3160, %v3654
      %v3656 = vsel %vm1968, %v3655, %v3651
      %v3657 = vlaneseq
      %v3658 = vshrl.u32 %v3657, 7
      %v3659 = vsub.s32 %v1970, %v3658
      %v3660 = vrot.slane %v3163, %v3659
      %v3661 = vsel %vm1975, %v3660, %v3656
      %v3662 = vlaneseq
      %v3663 = vshrl.u32 %v3662, 7
      %v3664 = vsub.s32 %v1977, %v3663
      %v3665 = vrot.slane %v3166, %v3664
      %v3666 = vsel %vm1982, %v3665, %v3661
      %v3667 = vlaneseq
      %v3668 = vshrl.u32 %v3667, 7
      %v3669 = vsub.s32 %v1984, %v3668
      %v3670 = vrot.slane %v3169, %v3669
      %v3671 = vsel %vm1989, %v3670, %v3666
      %v3672 = vlaneseq
      %v3673 = vshrl.u32 %v3672, 7
      %v3674 = vsub.s32 %v1991, %v3673
      %v3675 = vrot.slane %v3172, %v3674
      %v3676 = vsel %vm1996, %v3675, %v3671
      %v3677 = vlaneseq
      %v3678 = vshrl.u32 %v3677, 7
      %v3679 = vsub.s32 %v1432, %v3678
      %v3680 = vrot.slane %v3175, %v3679
      %v3681 = vlaneseq
      %v3682 = vshrl.u32 %v3681, 7
      %v3683 = vsub.s32 %v1949, %v3682
      %v3684 = vrot.slane %v3178, %v3683
      %v3685 = vsel %vm1954, %v3684, %v3680
      %v3686 = vlaneseq
      %v3687 = vshrl.u32 %v3686, 7
      %v3688 = vsub.s32 %v1956, %v3687
      %v3689 = vrot.slane %v3181, %v3688
      %v3690 = vsel %vm1961, %v3689, %v3685
      %v3691 = vlaneseq
      %v3692 = vshrl.u32 %v3691, 7
      %v3693 = vsub.s32 %v1963, %v3692
      %v3694 = vrot.slane %v3184, %v3693
      %v3695 = vsel %vm1968, %v3694, %v3690
      %v3696 = vlaneseq
      %v3697 = vshrl.u32 %v3696, 7
      %v3698 = vsub.s32 %v1970, %v3697
      %v3699 = vrot.slane %v3187, %v3698
      %v3700 = vsel %vm1975, %v3699, %v3695
      %v3701 = vlaneseq
      %v3702 = vshrl.u32 %v3701, 7
      %v3703 = vsub.s32 %v1977, %v3702
      %v3704 = vrot.slane %v3190, %v3703
      %v3705 = vsel %vm1982, %v3704, %v3700
      %v3706 = vlaneseq
      %v3707 = vshrl.u32 %v3706, 7
      %v3708 = vsub.s32 %v1984, %v3707
      %v3709 = vrot.slane %v3193, %v3708
      %v3710 = vsel %vm1989, %v3709, %v3705
      %v3711 = vlaneseq
      %v3712 = vshrl.u32 %v3711, 7
      %v3713 = vsub.s32 %v1991, %v3712
      %v3714 = vrot.slane %v3196, %v3713
      %v3715 = vsel %vm1996, %v3714, %v3710
      %v3716 = vlaneseq
      %v3717 = vshrl.u32 %v3716, 7
      %v3718 = vsub.s32 %v1432, %v3717
      %v3719 = vrot.slane %v3199, %v3718
      %v3720 = vlaneseq
      %v3721 = vshrl.u32 %v3720, 7
      %v3722 = vsub.s32 %v1949, %v3721
      %v3723 = vrot.slane %v3202, %v3722
      %v3724 = vsel %vm1954, %v3723, %v3719
      %v3725 = vlaneseq
      %v3726 = vshrl.u32 %v3725, 7
      %v3727 = vsub.s32 %v1956, %v3726
      %v3728 = vrot.slane %v3205, %v3727
      %v3729 = vsel %vm1961, %v3728, %v3724
      %v3730 = vlaneseq
      %v3731 = vshrl.u32 %v3730, 7
      %v3732 = vsub.s32 %v1963, %v3731
      %v3733 = vrot.slane %v3208, %v3732
      %v3734 = vsel %vm1968, %v3733, %v3729
      %v3735 = vlaneseq
      %v3736 = vshrl.u32 %v3735, 7
      %v3737 = vsub.s32 %v1970, %v3736
      %v3738 = vrot.slane %v3211, %v3737
      %v3739 = vsel %vm1975, %v3738, %v3734
      %v3740 = vlaneseq
      %v3741 = vshrl.u32 %v3740, 7
      %v3742 = vsub.s32 %v1977, %v3741
      %v3743 = vrot.slane %v3214, %v3742
      %v3744 = vsel %vm1982, %v3743, %v3739
      %v3745 = vlaneseq
      %v3746 = vshrl.u32 %v3745, 7
      %v3747 = vsub.s32 %v1984, %v3746
      %v3748 = vrot.slane %v3217, %v3747
      %v3749 = vsel %vm1989, %v3748, %v3744
      %v3750 = vlaneseq
      %v3751 = vshrl.u32 %v3750, 7
      %v3752 = vsub.s32 %v1991, %v3751
      %v3753 = vrot.slane %v3220, %v3752
      %v3754 = vsel %vm1996, %v3753, %v3749
      %v3755 = vlaneseq
      %v3756 = vshrl.u32 %v3755, 7
      %v3757 = vsub.s32 %v1432, %v3756
      %v3758 = vrot.slane %v3223, %v3757
      %v3759 = vlaneseq
      %v3760 = vshrl.u32 %v3759, 7
      %v3761 = vsub.s32 %v1949, %v3760
      %v3762 = vrot.slane %v3226, %v3761
      %v3763 = vsel %vm1954, %v3762, %v3758
      %v3764 = vlaneseq
      %v3765 = vshrl.u32 %v3764, 7
      %v3766 = vsub.s32 %v1956, %v3765
      %v3767 = vrot.slane %v3229, %v3766
      %v3768 = vsel %vm1961, %v3767, %v3763
      %v3769 = vlaneseq
      %v3770 = vshrl.u32 %v3769, 7
      %v3771 = vsub.s32 %v1963, %v3770
      %v3772 = vrot.slane %v3232, %v3771
      %v3773 = vsel %vm1968, %v3772, %v3768
      %v3774 = vlaneseq
      %v3775 = vshrl.u32 %v3774, 7
      %v3776 = vsub.s32 %v1970, %v3775
      %v3777 = vrot.slane %v3235, %v3776
      %v3778 = vsel %vm1975, %v3777, %v3773
      %v3779 = vlaneseq
      %v3780 = vshrl.u32 %v3779, 7
      %v3781 = vsub.s32 %v1977, %v3780
      %v3782 = vrot.slane %v3238, %v3781
      %v3783 = vsel %vm1982, %v3782, %v3778
      %v3784 = vlaneseq
      %v3785 = vshrl.u32 %v3784, 7
      %v3786 = vsub.s32 %v1984, %v3785
      %v3787 = vrot.slane %v3241, %v3786
      %v3788 = vsel %vm1989, %v3787, %v3783
      %v3789 = vlaneseq
      %v3790 = vshrl.u32 %v3789, 7
      %v3791 = vsub.s32 %v1991, %v3790
      %v3792 = vrot.slane %v3244, %v3791
      %v3793 = vsel %vm1996, %v3792, %v3788
      %v3794 = vlaneseq
      %v3795 = vshrl.u32 %v3794, 7
      %v3796 = vsub.s32 %v1432, %v3795
      %v3797 = vrot.slane %v3247, %v3796
      %v3798 = vlaneseq
      %v3799 = vshrl.u32 %v3798, 7
      %v3800 = vsub.s32 %v1949, %v3799
      %v3801 = vrot.slane %v3250, %v3800
      %v3802 = vsel %vm1954, %v3801, %v3797
      %v3803 = vlaneseq
      %v3804 = vshrl.u32 %v3803, 7
      %v3805 = vsub.s32 %v1956, %v3804
      %v3806 = vrot.slane %v3253, %v3805
      %v3807 = vsel %vm1961, %v3806, %v3802
      %v3808 = vlaneseq
      %v3809 = vshrl.u32 %v3808, 7
      %v3810 = vsub.s32 %v1963, %v3809
      %v3811 = vrot.slane %v3256, %v3810
      %v3812 = vsel %vm1968, %v3811, %v3807
      %v3813 = vlaneseq
      %v3814 = vshrl.u32 %v3813, 7
      %v3815 = vsub.s32 %v1970, %v3814
      %v3816 = vrot.slane %v3259, %v3815
      %v3817 = vsel %vm1975, %v3816, %v3812
      %v3818 = vlaneseq
      %v3819 = vshrl.u32 %v3818, 7
      %v3820 = vsub.s32 %v1977, %v3819
      %v3821 = vrot.slane %v3262, %v3820
      %v3822 = vsel %vm1982, %v3821, %v3817
      %v3823 = vlaneseq
      %v3824 = vshrl.u32 %v3823, 7
      %v3825 = vsub.s32 %v1984, %v3824
      %v3826 = vrot.slane %v3265, %v3825
      %v3827 = vsel %vm1989, %v3826, %v3822
      %v3828 = vlaneseq
      %v3829 = vshrl.u32 %v3828, 7
      %v3830 = vsub.s32 %v1991, %v3829
      %v3831 = vrot.slane %v3268, %v3830
      %v3832 = vsel %vm1996, %v3831, %v3827
      %v3833 = vlaneseq
      %v3834 = vshrl.u32 %v3833, 7
      %v3835 = vsub.s32 %v1432, %v3834
      %v3836 = vrot.slane %v3271, %v3835
      %v3837 = vlaneseq
      %v3838 = vshrl.u32 %v3837, 7
      %v3839 = vsub.s32 %v1949, %v3838
      %v3840 = vrot.slane %v3274, %v3839
      %v3841 = vsel %vm1954, %v3840, %v3836
      %v3842 = vlaneseq
      %v3843 = vshrl.u32 %v3842, 7
      %v3844 = vsub.s32 %v1956, %v3843
      %v3845 = vrot.slane %v3277, %v3844
      %v3846 = vsel %vm1961, %v3845, %v3841
      %v3847 = vlaneseq
      %v3848 = vshrl.u32 %v3847, 7
      %v3849 = vsub.s32 %v1963, %v3848
      %v3850 = vrot.slane %v3280, %v3849
      %v3851 = vsel %vm1968, %v3850, %v3846
      %v3852 = vlaneseq
      %v3853 = vshrl.u32 %v3852, 7
      %v3854 = vsub.s32 %v1970, %v3853
      %v3855 = vrot.slane %v3283, %v3854
      %v3856 = vsel %vm1975, %v3855, %v3851
      %v3857 = vlaneseq
      %v3858 = vshrl.u32 %v3857, 7
      %v3859 = vsub.s32 %v1977, %v3858
      %v3860 = vrot.slane %v3286, %v3859
      %v3861 = vsel %vm1982, %v3860, %v3856
      %v3862 = vlaneseq
      %v3863 = vshrl.u32 %v3862, 7
      %v3864 = vsub.s32 %v1984, %v3863
      %v3865 = vrot.slane %v3289, %v3864
      %v3866 = vsel %vm1989, %v3865, %v3861
      %v3867 = vlaneseq
      %v3868 = vshrl.u32 %v3867, 7
      %v3869 = vsub.s32 %v1991, %v3868
      %v3870 = vrot.slane %v3292, %v3869
      %v3871 = vsel %vm1996, %v3870, %v3866
      %v3872 = vlaneseq
      %v3873 = vshrl.u32 %v3872, 7
      %v3874 = vsub.s32 %v1432, %v3873
      %v3875 = vrot.slane %v3295, %v3874
      %v3876 = vlaneseq
      %v3877 = vshrl.u32 %v3876, 7
      %v3878 = vsub.s32 %v1949, %v3877
      %v3879 = vrot.slane %v3298, %v3878
      %v3880 = vsel %vm1954, %v3879, %v3875
      %v3881 = vlaneseq
      %v3882 = vshrl.u32 %v3881, 7
      %v3883 = vsub.s32 %v1956, %v3882
      %v3884 = vrot.slane %v3301, %v3883
      %v3885 = vsel %vm1961, %v3884, %v3880
      %v3886 = vlaneseq
      %v3887 = vshrl.u32 %v3886, 7
      %v3888 = vsub.s32 %v1963, %v3887
      %v3889 = vrot.slane %v3304, %v3888
      %v3890 = vsel %vm1968, %v3889, %v3885
      %v3891 = vlaneseq
      %v3892 = vshrl.u32 %v3891, 7
      %v3893 = vsub.s32 %v1970, %v3892
      %v3894 = vrot.slane %v3307, %v3893
      %v3895 = vsel %vm1975, %v3894, %v3890
      %v3896 = vlaneseq
      %v3897 = vshrl.u32 %v3896, 7
      %v3898 = vsub.s32 %v1977, %v3897
      %v3899 = vrot.slane %v3310, %v3898
      %v3900 = vsel %vm1982, %v3899, %v3895
      %v3901 = vlaneseq
      %v3902 = vshrl.u32 %v3901, 7
      %v3903 = vsub.s32 %v1984, %v3902
      %v3904 = vrot.slane %v3313, %v3903
      %v3905 = vsel %vm1989, %v3904, %v3900
      %v3906 = vlaneseq
      %v3907 = vshrl.u32 %v3906, 7
      %v3908 = vsub.s32 %v1991, %v3907
      %v3909 = vrot.slane %v3316, %v3908
      %v3910 = vsel %vm1996, %v3909, %v3905
      %v3911 = vlaneseq
      %v3912 = vshrl.u32 %v3911, 7
      %v3913 = vsub.s32 %v1432, %v3912
      %v3914 = vrot.slane %v3319, %v3913
      %v3915 = vlaneseq
      %v3916 = vshrl.u32 %v3915, 7
      %v3917 = vsub.s32 %v1949, %v3916
      %v3918 = vrot.slane %v3322, %v3917
      %v3919 = vsel %vm1954, %v3918, %v3914
      %v3920 = vlaneseq
      %v3921 = vshrl.u32 %v3920, 7
      %v3922 = vsub.s32 %v1956, %v3921
      %v3923 = vrot.slane %v3325, %v3922
      %v3924 = vsel %vm1961, %v3923, %v3919
      %v3925 = vlaneseq
      %v3926 = vshrl.u32 %v3925, 7
      %v3927 = vsub.s32 %v1963, %v3926
      %v3928 = vrot.slane %v3328, %v3927
      %v3929 = vsel %vm1968, %v3928, %v3924
      %v3930 = vlaneseq
      %v3931 = vshrl.u32 %v3930, 7
      %v3932 = vsub.s32 %v1970, %v3931
      %v3933 = vrot.slane %v3331, %v3932
      %v3934 = vsel %vm1975, %v3933, %v3929
      %v3935 = vlaneseq
      %v3936 = vshrl.u32 %v3935, 7
      %v3937 = vsub.s32 %v1977, %v3936
      %v3938 = vrot.slane %v3334, %v3937
      %v3939 = vsel %vm1982, %v3938, %v3934
      %v3940 = vlaneseq
      %v3941 = vshrl.u32 %v3940, 7
      %v3942 = vsub.s32 %v1984, %v3941
      %v3943 = vrot.slane %v3337, %v3942
      %v3944 = vsel %vm1989, %v3943, %v3939
      %v3945 = vlaneseq
      %v3946 = vshrl.u32 %v3945, 7
      %v3947 = vsub.s32 %v1991, %v3946
      %v3948 = vrot.slane %v3340, %v3947
      %v3949 = vsel %vm1996, %v3948, %v3944
      %v3950 = vlaneseq
      %v3951 = vshrl.u32 %v3950, 7
      %v3952 = vsub.s32 %v1432, %v3951
      %v3953 = vrot.slane %v3343, %v3952
      %v3954 = vlaneseq
      %v3955 = vshrl.u32 %v3954, 7
      %v3956 = vsub.s32 %v1949, %v3955
      %v3957 = vrot.slane %v3346, %v3956
      %v3958 = vsel %vm1954, %v3957, %v3953
      %v3959 = vlaneseq
      %v3960 = vshrl.u32 %v3959, 7
      %v3961 = vsub.s32 %v1956, %v3960
      %v3962 = vrot.slane %v3349, %v3961
      %v3963 = vsel %vm1961, %v3962, %v3958
      %v3964 = vlaneseq
      %v3965 = vshrl.u32 %v3964, 7
      %v3966 = vsub.s32 %v1963, %v3965
      %v3967 = vrot.slane %v3352, %v3966
      %v3968 = vsel %vm1968, %v3967, %v3963
      %v3969 = vlaneseq
      %v3970 = vshrl.u32 %v3969, 7
      %v3971 = vsub.s32 %v1970, %v3970
      %v3972 = vrot.slane %v3355, %v3971
      %v3973 = vsel %vm1975, %v3972, %v3968
      %v3974 = vlaneseq
      %v3975 = vshrl.u32 %v3974, 7
      %v3976 = vsub.s32 %v1977, %v3975
      %v3977 = vrot.slane %v3358, %v3976
      %v3978 = vsel %vm1982, %v3977, %v3973
      %v3979 = vlaneseq
      %v3980 = vshrl.u32 %v3979, 7
      %v3981 = vsub.s32 %v1984, %v3980
      %v3982 = vrot.slane %v3361, %v3981
      %v3983 = vsel %vm1989, %v3982, %v3978
      %v3984 = vlaneseq
      %v3985 = vshrl.u32 %v3984, 7
      %v3986 = vsub.s32 %v1991, %v3985
      %v3987 = vrot.slane %v3364, %v3986
      %v3988 = vsel %vm1996, %v3987, %v3983
      %v3989 = vsel %vm2583, %v3442, %v3403
      %v3990 = vsel %vm2585, %v3481, %v3989
      %v3991 = vsel %vm2587, %v3520, %v3990
      %v3992 = vsel %vm2589, %v3559, %v3991
      %v3993 = vsel %vm2591, %v3598, %v3992
      %v3994 = vsel %vm2593, %v3637, %v3993
      %v3995 = vsel %vm2595, %v3676, %v3994
      %v3996 = vsel %vm2583, %v3754, %v3715
      %v3997 = vsel %vm2585, %v3793, %v3996
      %v3998 = vsel %vm2587, %v3832, %v3997
      %v3999 = vsel %vm2589, %v3871, %v3998
      %v4000 = vsel %vm2591, %v3910, %v3999
      %v4001 = vsel %vm2593, %v3949, %v4000
      %v4002 = vsel %vm2595, %v3988, %v4001
      %v4003 = vsel %vm371, %v3995, 2147483647
      %v4004 = vand.u32 %v4003, 65535
      %v4005 = vshra.s32 %v4003, 16
      %v4006 = vcvt.s32.f32 %v4004
      %v4007 = vcvt.s32.f32 %v4005
      %4008 = vmin.xlane.f32.xlu0 %v4007
      %v4009 = vpop.xlane.xlu0 %4008
      %vm4010 = vcmp.eq.f32.partialorder %v4007, %v4009
      %v4011 = vsel %vm4010, %v4006, inf
      %4012 = vmin.xlane.f32.xlu0 %v4011
      %v4013 = vpop.xlane.xlu0 %4012
      %v4014 = vcvt.f32.s32 %v4013
      %v4015 = vcvt.f32.s32 %v4009
      %v4016 = vshll.u32 %v4015, 16
      %v4017 = vadd.s32 %v4016, %v4014
      %v4018 = vsel %vm371, %v4002, 2147483647
      %v4019 = vand.u32 %v4018, 65535
      %v4020 = vshra.s32 %v4018, 16
      %v4021 = vcvt.s32.f32 %v4019
      %v4022 = vcvt.s32.f32 %v4020
      %4023 = vmin.xlane.f32.xlu0 %v4022
      %v4024 = vpop.xlane.xlu0 %4023
      %vm4025 = vcmp.eq.f32.partialorder %v4022, %v4024
      %v4026 = vsel %vm4025, %v4021, inf
      %4027 = vmin.xlane.f32.xlu0 %v4026
      %v4028 = vpop.xlane.xlu0 %4027
      %v4029 = vcvt.f32.s32 %v4028
      %v4030 = vcvt.f32.s32 %v4024
      %v4031 = vshll.u32 %v4030, 16
      %v4032 = vadd.s32 %v4031, %v4029
      %vm4033 = vcmp.eq.s32.totalorder %v1432, %v4017
      %vm4034 = vcmp.eq.s32.totalorder %v1432, %v4032
      %v4035 = vsel %vm4033, 1, 0
      %v4036 = vsel %vm4034, 1, 0
      %v4037 = vcvt.s32.f32 %v4035
      %v4038 = vcvt.s32.f32 %v4036
      %v4040 = vsel %vm371, %v4037, 0
      %v4043 = vsel %vm371, %v4038, 0
      %4045 = vmatprep.subr.mxu0 0.0
      %4046 = vmatpush1.msra.mxu0 %v465
      %4047 = vmatprep.subr.mxu0 0.0
      %4048 = vmatpush1.msra.mxu0 %v466
      %4049 = vmatprep.subr.mxu0 0.0
      %4050 = vmatpush1.msra.mxu0 %v467
      %4051 = vmatprep.subr.mxu0 0.0
      %4052 = vmatpush1.msra.mxu0 %v468
      %4053 = vmatprep.subr.mxu0 0.0
      %4054 = vmatpush1.msra.mxu0 %v469
      %4055 = vmatprep.subr.mxu0 0.0
      %4056 = vmatpush1.msra.mxu0 %v470
      %4057 = vmatprep.subr.mxu0 0.0
      %4058 = vmatpush1.msra.mxu0 %v471
      %4059 = vmatprep.subr.mxu0 0.0
      %4060 = vmatpush1.msra.mxu0 %v472
      %4061 = vmatprep.subr.mxu0 0.0
      %4062 = vmatpush1.msra.mxu0 0.0
      %4063 = vmatprep.subr.mxu0 0.0
      %4064 = vmatpush1.msra.mxu0 0.0
      %4065 = vmatprep.subr.mxu0 0.0
      %4066 = vmatpush1.msra.mxu0 0.0
      %4067 = vmatprep.subr.mxu0 0.0
      %4068 = vmatpush1.msra.mxu0 0.0
      %4069 = vmatprep.subr.mxu0 0.0
      %4070 = vmatpush1.msra.mxu0 0.0
      %4071 = vmatprep.subr.mxu0 0.0
      %4072 = vmatpush1.msra.mxu0 0.0
      %4073 = vmatprep.subr.mxu0 0.0
      %4074 = vmatpush1.msra.mxu0 0.0
      %4075 = vmatprep.subr.mxu0 0.0
      %4076 = vmatpush1.msra.mxu0 0.0
      %4077 = vmatprep.subr.mxu0 0.0
      %4078 = vmatpush1.msra.mxu0 0.0
      %4079 = vmatprep.subr.mxu0 0.0
      %4080 = vmatpush1.msra.mxu0 0.0
      %4081 = vmatprep.subr.mxu0 0.0
      %4082 = vmatpush1.msra.mxu0 0.0
      %4083 = vmatprep.subr.mxu0 0.0
      %4084 = vmatpush1.msra.mxu0 0.0
      %4085 = vmatprep.subr.mxu0 0.0
      %4086 = vmatpush1.msra.mxu0 0.0
      %4087 = vmatprep.subr.mxu0 0.0
      %4088 = vmatpush1.msra.mxu0 0.0
      %4089 = vmatprep.subr.mxu0 0.0
      %4090 = vmatpush1.msra.mxu0 0.0
      %4091 = vmatprep.subr.mxu0 0.0
      %4092 = vmatpush1.msra.mxu0 0.0
      %4093 = vmatprep.subr.mxu0 0.0
      %4094 = vmatpush1.msra.mxu0 0.0
      %4095 = vmatprep.subr.mxu0 0.0
      %4096 = vmatpush1.msra.mxu0 0.0
      %4097 = vmatprep.subr.mxu0 0.0
      %4098 = vmatpush1.msra.mxu0 0.0
      %4099 = vmatprep.subr.mxu0 0.0
      %4100 = vmatpush1.msra.mxu0 0.0
      %4101 = vmatprep.subr.mxu0 0.0
      %4102 = vmatpush1.msra.mxu0 0.0
      %4103 = vmatprep.subr.mxu0 0.0
      %4104 = vmatpush1.msra.mxu0 0.0
      %4105 = vmatprep.subr.mxu0 0.0
      %4106 = vmatpush1.msra.mxu0 0.0
      %4107 = vmatprep.subr.mxu0 0.0
      %4108 = vmatpush1.msra.mxu0 0.0
      %4109 = vmatprep.mubr.f32.mxu0 0.0
      %4110 = vmatmul.mubr.f32.gmra.mrb[0].mxu0 %v4040
      %v4111 = vpop.f32.mrb[0].mxu0
      %v4112 = vadd.f32 0.0, %v4111
      %v4113 = vpop.f32.mrb[0].mxu0
      %4114 = vmatprep.mubr.f32.mxu0 0.0
      %4115 = vmatmul.mubr.f32.gmra.mrb[0].mxu0 %v4043
      %v4116 = vpop.f32.mrb[0].mxu0
      %v4117 = vadd.f32 0.0, %v4116
      %v4118 = vpop.f32.mrb[0].mxu0
      %4119 = vdwg.mxu0
      %v4120 = vsub.f32 %v4112, %v445
      %v4121 = vsub.f32 %v4117, %v450
      %v4122 = vmul.f32 %v4120, %v4120
      %v4123 = vmul.f32 %v4121, %v4121
      %v4124 = vsel %vm481, %v4122, 0.0
      %v4125 = vsel %vm481, %v4123, 0.0
      %v4126 = vadd.f32 %v4124, %v4125
      %4127 = vadd.xlane.f32.xlu0 %v4126
      %v4128 = vpop.xlane.xlu0 %4127
      %v4129 = vrot.slane %v4128, 4
      %v4130 = vadd.f32 %v4128, %v4129
      %v4131 = vrot.slane %v4130, 2
      %v4132 = vadd.f32 %v4130, %v4131
      %v4133 = vrot.slane %v4132, 1
      %v4134 = vadd.f32 %v4132, %v4133
      %v4135 = vld [vmem:[%s4] sm:$0xff]
      %v4136 = vld [vmem:[%s4 + $0x8] sm:$0xff]
      %v4137 = vld [vmem:[%s4 + $0x10] sm:$0xff]
      %v4138 = vld [vmem:[%s4 + $0x18] sm:$0xff]
      %v4140 = vsel %vm481, %v4112, 0
      %v4143 = vsel %vm481, %v4117, 0
      %4145 = vmatprep.subr.mxu0 0.0
      %4146 = vmatpush1.msra.mxu0 %v4135
      %4147 = vmatprep.subr.mxu0 0.0
      %4148 = vmatpush1.msra.mxu0 %v4136
      %4149 = vmatprep.subr.mxu0 0.0
      %4150 = vmatpush1.msra.mxu0 %v4137
      %4151 = vmatprep.subr.mxu0 0.0
      %4152 = vmatpush1.msra.mxu0 %v4138
      %4153 = vmatprep.subr.mxu0 0.0
      %4154 = vmatpush1.msra.mxu0 0.0
      %4155 = vmatprep.subr.mxu0 0.0
      %4156 = vmatpush1.msra.mxu0 0.0
      %4157 = vmatprep.subr.mxu0 0.0
      %4158 = vmatpush1.msra.mxu0 0.0
      %4159 = vmatprep.subr.mxu0 0.0
      %4160 = vmatpush1.msra.mxu0 0.0
      %4161 = vmatprep.subr.mxu0 0.0
      %4162 = vmatpush1.msra.mxu0 0.0
      %4163 = vmatprep.subr.mxu0 0.0
      %4164 = vmatpush1.msra.mxu0 0.0
      %4165 = vmatprep.subr.mxu0 0.0
      %4166 = vmatpush1.msra.mxu0 0.0
      %4167 = vmatprep.subr.mxu0 0.0
      %4168 = vmatpush1.msra.mxu0 0.0
      %4169 = vmatprep.subr.mxu0 0.0
      %4170 = vmatpush1.msra.mxu0 0.0
      %4171 = vmatprep.subr.mxu0 0.0
      %4172 = vmatpush1.msra.mxu0 0.0
      %4173 = vmatprep.subr.mxu0 0.0
      %4174 = vmatpush1.msra.mxu0 0.0
      %4175 = vmatprep.subr.mxu0 0.0
      %4176 = vmatpush1.msra.mxu0 0.0
      %4177 = vmatprep.subr.mxu0 0.0
      %4178 = vmatpush1.msra.mxu0 0.0
      %4179 = vmatprep.subr.mxu0 0.0
      %4180 = vmatpush1.msra.mxu0 0.0
      %4181 = vmatprep.subr.mxu0 0.0
      %4182 = vmatpush1.msra.mxu0 0.0
      %4183 = vmatprep.subr.mxu0 0.0
      %4184 = vmatpush1.msra.mxu0 0.0
      %4185 = vmatprep.subr.mxu0 0.0
      %4186 = vmatpush1.msra.mxu0 0.0
      %4187 = vmatprep.subr.mxu0 0.0
      %4188 = vmatpush1.msra.mxu0 0.0
      %4189 = vmatprep.subr.mxu0 0.0
      %4190 = vmatpush1.msra.mxu0 0.0
      %4191 = vmatprep.subr.mxu0 0.0
      %4192 = vmatpush1.msra.mxu0 0.0
      %4193 = vmatprep.subr.mxu0 0.0
      %4194 = vmatpush1.msra.mxu0 0.0
      %4195 = vmatprep.subr.mxu0 0.0
      %4196 = vmatpush1.msra.mxu0 0.0
      %4197 = vmatprep.subr.mxu0 0.0
      %4198 = vmatpush1.msra.mxu0 0.0
      %4199 = vmatprep.subr.mxu0 0.0
      %4200 = vmatpush1.msra.mxu0 0.0
      %4201 = vmatprep.subr.mxu0 0.0
      %4202 = vmatpush1.msra.mxu0 0.0
      %4203 = vmatprep.subr.mxu0 0.0
      %4204 = vmatpush1.msra.mxu0 0.0
      %4205 = vmatprep.subr.mxu0 0.0
      %4206 = vmatpush1.msra.mxu0 0.0
      %4207 = vmatprep.subr.mxu0 0.0
      %4208 = vmatpush1.msra.mxu0 0.0
      %4209 = vmatprep.mubr.f32.mxu0 0.0
      %4210 = vmatmul.mubr.f32.gmra.mrb[0].mxu0 %v4140
      %v4211 = vpop.f32.mrb[0].mxu0
      %v4212 = vadd.f32 0.0, %v4211
      %v4213 = vpop.f32.mrb[0].mxu0
      %4214 = vmatprep.mubr.f32.mxu0 0.0
      %4215 = vmatmul.mubr.f32.gmra.mrb[0].mxu0 %v4143
      %v4216 = vpop.f32.mrb[0].mxu0
      %v4217 = vadd.f32 0.0, %v4216
      %v4218 = vpop.f32.mrb[0].mxu0
      %4219 = vdwg.mxu0
      %v4220 = vld [vmem:[%s5] sm:$0xff]
      %v4221 = vld [vmem:[%s5 + $0x8] sm:$0xff]
      %v4222 = vld [vmem:[%s5 + $0x10] sm:$0xff]
      %v4223 = vld [vmem:[%s5 + $0x18] sm:$0xff]
      %v4224 = vld [vmem:[%s6] sm:$0x1]
      %4226 = vrot.lane.b32.xlu0 %v464, 96
      %v4227 = vpop.permute.xlu0 %4226
      %v4228 = vsel %vm481, %v4227, 0
      %4230 = vmatprep.subr.mxu0 0.0
      %4231 = vmatpush1.msra.mxu0 %v4220
      %4232 = vmatprep.subr.mxu0 0.0
      %4233 = vmatpush1.msra.mxu0 %v4221
      %4234 = vmatprep.subr.mxu0 0.0
      %4235 = vmatpush1.msra.mxu0 %v4222
      %4236 = vmatprep.subr.mxu0 0.0
      %4237 = vmatpush1.msra.mxu0 %v4223
      %4238 = vmatprep.subr.mxu0 0.0
      %4239 = vmatpush1.msra.mxu0 0.0
      %4240 = vmatprep.subr.mxu0 0.0
      %4241 = vmatpush1.msra.mxu0 0.0
      %4242 = vmatprep.subr.mxu0 0.0
      %4243 = vmatpush1.msra.mxu0 0.0
      %4244 = vmatprep.subr.mxu0 0.0
      %4245 = vmatpush1.msra.mxu0 0.0
      %4246 = vmatprep.subr.mxu0 0.0
      %4247 = vmatpush1.msra.mxu0 0.0
      %4248 = vmatprep.subr.mxu0 0.0
      %4249 = vmatpush1.msra.mxu0 0.0
      %4250 = vmatprep.subr.mxu0 0.0
      %4251 = vmatpush1.msra.mxu0 0.0
      %4252 = vmatprep.subr.mxu0 0.0
      %4253 = vmatpush1.msra.mxu0 0.0
      %4254 = vmatprep.subr.mxu0 0.0
      %4255 = vmatpush1.msra.mxu0 0.0
      %4256 = vmatprep.subr.mxu0 0.0
      %4257 = vmatpush1.msra.mxu0 0.0
      %4258 = vmatprep.subr.mxu0 0.0
      %4259 = vmatpush1.msra.mxu0 0.0
      %4260 = vmatprep.subr.mxu0 0.0
      %4261 = vmatpush1.msra.mxu0 0.0
      %4262 = vmatprep.subr.mxu0 0.0
      %4263 = vmatpush1.msra.mxu0 0.0
      %4264 = vmatprep.subr.mxu0 0.0
      %4265 = vmatpush1.msra.mxu0 0.0
      %4266 = vmatprep.subr.mxu0 0.0
      %4267 = vmatpush1.msra.mxu0 0.0
      %4268 = vmatprep.subr.mxu0 0.0
      %4269 = vmatpush1.msra.mxu0 0.0
      %4270 = vmatprep.subr.mxu0 0.0
      %4271 = vmatpush1.msra.mxu0 0.0
      %4272 = vmatprep.subr.mxu0 0.0
      %4273 = vmatpush1.msra.mxu0 0.0
      %4274 = vmatprep.subr.mxu0 0.0
      %4275 = vmatpush1.msra.mxu0 0.0
      %4276 = vmatprep.subr.mxu0 0.0
      %4277 = vmatpush1.msra.mxu0 0.0
      %4278 = vmatprep.subr.mxu0 0.0
      %4279 = vmatpush1.msra.mxu0 0.0
      %4280 = vmatprep.subr.mxu0 0.0
      %4281 = vmatpush1.msra.mxu0 0.0
      %4282 = vmatprep.subr.mxu0 0.0
      %4283 = vmatpush1.msra.mxu0 0.0
      %4284 = vmatprep.subr.mxu0 0.0
      %4285 = vmatpush1.msra.mxu0 0.0
      %4286 = vmatprep.subr.mxu0 0.0
      %4287 = vmatpush1.msra.mxu0 0.0
      %4288 = vmatprep.subr.mxu0 0.0
      %4289 = vmatpush1.msra.mxu0 0.0
      %4290 = vmatprep.subr.mxu0 0.0
      %4291 = vmatpush1.msra.mxu0 0.0
      %4292 = vmatprep.subr.mxu0 0.0
      %4293 = vmatpush1.msra.mxu0 0.0
      %4294 = vmatprep.mubr.f32.mxu0 0.0
      %4295 = vmatmul.mubr.f32.gmra.mrb[0].mxu0 %v4228
      %v4296 = vpop.f32.mrb[0].mxu0
      %v4297 = vadd.f32 %v4224, %v4296
      %v4298 = vpop.f32.mrb[0].mxu0
      %4299 = vdwg.mxu0
      %v4300 = vlaneseq
      %v4301 = vshrl.u32 %v4300, 7
      %v4302 = vsub.s32 0, %v4301
      %v4303 = vrot.slane %v4297, %v4302
      %v4304 = vadd.f32 %v4212, %v4303
      %v4305 = vadd.f32 %v4217, %v4303
      %4306 = vrot.lane.b32.xlu0 %v445, 64
      %v4307 = vpop.permute.xlu0 %4306
      %4308 = vrot.lane.b32.xlu0 %v450, 64
      %v4309 = vpop.permute.xlu0 %4308
      %4312 = vrot.lane.b32.xlu0 %v4112, 96
      %v4313 = vpop.permute.xlu0 %4312
      %4314 = vrot.lane.b32.xlu0 %v4117, 96
      %v4315 = vpop.permute.xlu0 %4314
      %v4318 = vsel %vm371, %v4304, %v4307
      %v4319 = vsel %vm371, %v4305, %v4309
      %vm4320 = vcmask 785408
      %v4321 = vsel %vm4320, %v4318, %v4313
      %v4322 = vsel %vm4320, %v4319, %v4315
      %4323 = vst [vmem:[%s345] sm:$0xff] %v4321
      %4324 = vst [vmem:[%s345 + $0x8] sm:$0xff] %v4322
      %vm4325 = vcmask 7168
      %4326 = vst.msk [vmem:[%s350] sm:$0xff] %vm4325, %v4017
      %4327 = vst.msk [vmem:[%s350 + $0x8] sm:$0xff] %vm4325, %v4032
      %v4329 = vsel %vm481, %v4227, %v4134
      %vm4330 = vcmask 262144
      %4331 = vst.msk [vmem:[%s353] sm:$0x1] %vm4330, %v4329
      %p4332 = scmp.lt.s32.totalorder %s21, 1
      %s4333 = scalar_select %p4332, %s21, 1
      %s4334 = smul.addr %s4333, 2
      %s4335 = smul.addr %s4334, 8
      %s4336 = scalar_lea.vmem %s7, %s4335
      %p4337 = scmp.lt.s32.totalorder %s21, 1
      %s4338 = scalar_select %p4337, %s21, 1
      %s4339 = smul.addr %s4338, 2
      %s4340 = smul.addr %s4339, 8
      %s4341 = scalar_lea.vmem %s8, %s4340
      %p4342 = scmp.lt.s32.totalorder %s21, 1
      %s4343 = scalar_select %p4342, %s21, 1
      %s4344 = scalar_lea.vmem %s9, %s4343
      // Predicated region
      $region49: #{csae_forward.1} parent=47 // pred_check
        %p4345 = pneg %p191
      $region50: #{csae_forward.1} parent=47 // pred_check_branch
        %4347 = sbr.rel (%p4345) target = $region52
      $region51: #{csae_forward.1} parent=47 // pred_region
        _
      $region52: #{csae_forward.1} parent=47 // pred_fallthru
        _
      // Predicated region
      $region53: #{csae_forward.1} parent=47 // pred_check
        %p4348 = pneg %p217
      $region54: #{csae_forward.1} parent=47 // pred_check_branch
        %4350 = sbr.rel (%p4348) target = $region56
      $region55: #{csae_forward.1} parent=47 // pred_region
        _
      $region56: #{csae_forward.1} parent=47 // pred_fallthru
        _
      // Predicated region
      $region57: #{csae_forward.1} parent=47 // pred_check
        %p4351 = pneg %p243
      $region58: #{csae_forward.1} parent=47 // pred_check_branch
        %4353 = sbr.rel (%p4351) target = $region60
      $region59: #{csae_forward.1} parent=47 // pred_region
        _
      $region60: #{csae_forward.1} parent=47 // pred_fallthru
        _
    $region48: #{csae_forward.1} parent=5 // pred_fallthru
      _
    %p4354 = scmp.le.s32.totalorder 2, %s16
    // Predicated region
    $region61: #{csae_forward.1} parent=5 // pred_check
      %p4355 = pneg %p4354
    $region62: #{csae_forward.1} parent=5 // pred_check_branch
      %4357 = sbr.rel (%p4355) target = $region64
    $region63: #{csae_forward.1} parent=5 // pred_region
      %s4358 = ssub.s32 %s16, 2
      // Predicated region
      $region65: #{csae_forward.1} parent=63 // pred_check
        %p4359 = pneg %p197
      $region66: #{csae_forward.1} parent=63 // pred_check_branch
        %4361 = sbr.rel (%p4359) target = $region68
      $region67: #{csae_forward.1} parent=63 // pred_region
        %p4362 = scmp.lt.s32.totalorder %s22, 1
        %s4363 = scalar_select %p4362, %s22, 1
        %s4364 = smul.addr %s4363, 2
        %s4365 = smul.addr %s4364, 8
        %s4366 = scalar_lea.vmem %s7, %s4365
      $region68: #{csae_forward.1} parent=63 // pred_fallthru
        _
      // Predicated region
      $region69: #{csae_forward.1} parent=63 // pred_check
        %p4367 = pneg %p223
      $region70: #{csae_forward.1} parent=63 // pred_check_branch
        %4369 = sbr.rel (%p4367) target = $region72
      $region71: #{csae_forward.1} parent=63 // pred_region
        %p4370 = scmp.lt.s32.totalorder %s22, 1
        %s4371 = scalar_select %p4370, %s22, 1
        %s4372 = smul.addr %s4371, 2
        %s4373 = smul.addr %s4372, 8
        %s4374 = scalar_lea.vmem %s8, %s4373
      $region72: #{csae_forward.1} parent=63 // pred_fallthru
        _
      // Predicated region
      $region73: #{csae_forward.1} parent=63 // pred_check
        %p4375 = pneg %p249
      $region74: #{csae_forward.1} parent=63 // pred_check_branch
        %4377 = sbr.rel (%p4375) target = $region76
      $region75: #{csae_forward.1} parent=63 // pred_region
        %p4378 = scmp.lt.s32.totalorder %s22, 1
        %s4379 = scalar_select %p4378, %s22, 1
        %s4380 = scalar_lea.vmem %s9, %s4379
      $region76: #{csae_forward.1} parent=63 // pred_fallthru
        _
    $region64: #{csae_forward.1} parent=5 // pred_fallthru
      _
  $region6: #{csae_forward.1} parent=0 // loop_footer
    %s20 = sadd.s32 1, %s16
  $region7: #{csae_forward.1} parent=0 // loop_footer_branch
    %15 = sbr.rel target = $region3
  $region8: #{csae_forward.1} parent=0 // loop_exit
    _

</llo_original>
